<compile_context>
chip_gen: v6e
topology: v6e:2x2x1
jax: 0.10.0
libtpu: 0.0.40
codegen_flags: <defaults>
</compile_context>

<pallas_src>
import numpy as np
import jax
import jax.numpy as jnp
from jax import lax
from jax.experimental import pallas as pl
from jax.experimental.pallas import tpu as pltpu

# ----------------------------- static dims ---------------------------------
B = 2            # batch
L_IN = 287       # input length (consistent with Linear(1152, ...))
K1, C1, PAD1 = 4, 8, 2
K2, C2, PAD2 = 6, 16, 3
L1_PAD = L_IN + 2 * PAD1          # 291
L1_OUT = L1_PAD - K1 + 1          # 288
L1_POOL = L1_OUT // 2             # 144
L2_PAD = L1_POOL + 2 * PAD2       # 150
L2_OUT = L2_PAD - K2 + 1          # 145
L2_POOL = L2_OUT // 2             # 72
FLAT = C2 * L2_POOL               # 1152
H1, H2 = 81, 5

M1 = L1_OUT // 4                  # 72  conv1 polyphase length (t = 4m + r)
M2 = L2_POOL                      # 72  conv2 polyphase length (t = 2j + s)
XP_LEN = (L1_PAD + 1) // 4        # 73  per-phase padded-input length (292 / 4)
WIN_LANES = 128                   # scratch lane width for PE/PO windows

# packed small-parameter slab layout: shape (PP_ROWS, 128), f32
ROW_W1 = 0        # rows 0..7  : cols 0..3  = w1[c,0,k],       col 4  = b1[c]
ROW_W2 = 8        # rows 8..23 : cols 0..47 = w2[c, cin*6+k],  col 48 = b2[c]
ROW_WL2 = 24      # rows 24..104: cols 0..4 = wl2.T  (81, 5)
ROW_BIAS = 112    # row 112    : cols 0..80 = bl1,   cols 96..100 = bl2
PP_ROWS = 120
COL_B1 = K1       # 4
COL_B2 = C1 * K2  # 48
COL_BL2 = 96


# ------------------------------ kernel --------------------------------------
def net_kernel(xph_ref, pp_ref, wl1_hbm, out_ref, win_ref, wl1_vmem, wl1_sem):
    # ---- start the big linear1-weight DMA first; it overlaps all conv work ----
    wl1_copy = pltpu.make_async_copy(wl1_hbm, wl1_vmem, wl1_sem)
    wl1_copy.start()

    # ---- conv1 + ReLU + maxpool(2): 4-phase polyphase, pure VPU ----
    # xph_ref[p][b, 0, i] == x_pad[b, 4*i + p]
    xph = [xph_ref[p] for p in range(4)]                       # 4 x (B, 1, 73)
    xsb = []                                                   # idx = r + k in [0,6]
    for idx in range(K1 + 3):
        p, off = idx % 4, idx // 4
        xsb.append(jnp.broadcast_to(xph[p][:, :, off:off + M1], (B, C1, M1)))

    w1c = pp_ref[ROW_W1:ROW_W1 + C1, 0:K1]                     # (8, 4)
    w1b = [jnp.broadcast_to(w1c[:, k:k + 1], (C1, M1)) for k in range(K1)]
    b1_full = jnp.broadcast_to(pp_ref[ROW_W1:ROW_W1 + C1, COL_B1:COL_B1 + 1],
                               (B, C1, M1))

    ph = []
    for r in range(4):                                         # y1 at t = 4m + r
        acc = b1_full
        for k in range(K1):
            acc = acc + w1b[k] * xsb[r + k]
        ph.append(jnp.maximum(acc, 0.0))
    p1_e = jnp.maximum(ph[0], ph[1])                           # p1[2m]   (B,8,72)
    p1_o = jnp.maximum(ph[2], ph[3])                           # p1[2m+1] (B,8,72)

    # ---- even/odd lanes of the zero-padded pool1 output, written ONCE ----
    #   sublanes 0..7  : PE[i] = p1_pad[2i]   = p1_o[i-2]  (zero at i in {0,1,74})
    #   sublanes 8..15 : PO[i] = p1_pad[2i+1] = p1_e[i-1]  (zero at i in {0,73,74})
    win_ref[...] = jnp.zeros(win_ref.shape, jnp.float32)
    win_ref[:, 0:C1, 2:2 + M1] = p1_o
    win_ref[:, C1:2 * C1, 1:1 + M1] = p1_e

    # 7 whole-channel shifted windows loaded ONCE (lane rotates hoisted out of
    # the cin loop): wins[d][:, cin] = PE_d, wins[d][:, 8+cin] = PO_d
    wins = [win_ref[:, :, d:d + M2] for d in range(3)]         # (B, 16, 72) each
    pe3 = win_ref[:, 0:C1, 3:3 + M2]                           # (B, 8, 72) = PE_3

    # ---- conv2 + ReLU + maxpool(2): 2-phase polyphase, pure VPU ----
    w2_all = pp_ref[ROW_W2:ROW_W2 + C2, 0:C1 * K2]             # (16,48) col=cin*6+k
    b2_full = jnp.broadcast_to(pp_ref[ROW_W2:ROW_W2 + C2, COL_B2:COL_B2 + 1],
                               (B, C2, M2))
    acc_e = b2_full                                            # y2[2j]
    acc_o = b2_full                                            # y2[2j+1]
    for cin in range(C1):
        pe = [wins[d][:, cin:cin + 1, :] for d in range(3)]
        pe.append(pe3[:, cin:cin + 1, :])
        po = [wins[d][:, C1 + cin:C1 + cin + 1, :] for d in range(3)]
        base = cin * K2
        for d in range(3):
            # one lane-broadcast per weight, shared by both output phases
            w_e = jnp.broadcast_to(
                w2_all[:, base + 2 * d:base + 2 * d + 1], (C2, M2))
            w_o = jnp.broadcast_to(
                w2_all[:, base + 2 * d + 1:base + 2 * d + 2], (C2, M2))
            acc_e = acc_e + w_e * pe[d] + w_o * po[d]
            acc_o = acc_o + w_e * po[d] + w_o * pe[d + 1]
    p2 = jnp.maximum(jnp.maximum(acc_e, acc_o), 0.0)           # (B, 16, 72)

    # ---- linear1 (1152 -> 81): 16 accumulated (B,72)x(72,81) MXU matmuls ----
    wl1_copy.wait()                                            # DMA hidden above
    z1 = jnp.broadcast_to(pp_ref[ROW_BIAS:ROW_BIAS + 1, 0:H1], (B, H1))
    for c in range(C2):
        z1 = z1 + jnp.dot(p2[:, c, :], wl1_vmem[c],
                          preferred_element_type=jnp.float32)

    # ---- linear2 (81 -> 5): one tiny MXU matmul ----
    wl2_v = pp_ref[ROW_WL2:ROW_WL2 + H1, 0:H2]                 # (81, 5)
    bl2_v = pp_ref[ROW_BIAS:ROW_BIAS + 1, COL_BL2:COL_BL2 + H2]  # (1, 5)
    out_ref[...] = jnp.dot(z1, wl2_v,
                           preferred_element_type=jnp.float32) + bl2_v


# ------------------------------ wrapper --------------------------------------
@jax.jit
def net_forward(x, params):
    (w1, b1, w2, b2, wl1, bl1, wl2, bl2) = params

    # plain-JAX glue: padding, polyphase split, parameter packing / re-layout
    x2d = x[:, 0, :].astype(jnp.float32)                       # (B, 287)
    x_pad = jnp.pad(x2d, ((0, 0), (PAD1, PAD1 + 1)))           # (B, 292)
    x_ph = jnp.transpose(x_pad.reshape(B, XP_LEN, 4), (2, 0, 1))  # (4, B, 73)
    x_ph4 = x_ph[:, :, None, :]                                # (4, B, 1, 73)

    # all seven small parameter tensors packed into ONE (120, 128) VMEM slab
    pp = jnp.zeros((PP_ROWS, 128), jnp.float32)
    pp = pp.at[ROW_W1:ROW_W1 + C1, 0:K1].set(w1[:, 0, :])
    pp = pp.at[ROW_W1:ROW_W1 + C1, COL_B1].set(b1)
    pp = pp.at[ROW_W2:ROW_W2 + C2, 0:C1 * K2].set(w2.reshape(C2, C1 * K2))
    pp = pp.at[ROW_W2:ROW_W2 + C2, COL_B2].set(b2)
    pp = pp.at[ROW_WL2:ROW_WL2 + H1, 0:H2].set(jnp.transpose(wl2))
    pp = pp.at[ROW_BIAS, 0:H1].set(bl1)
    pp = pp.at[ROW_BIAS, COL_BL2:COL_BL2 + H2].set(bl2)

    # linear1 weight: flat index c*72 + t -> [c, t, :]; kept in HBM and DMA'd
    # inside the kernel, overlapped with the conv compute.
    wl1_r = jnp.transpose(wl1).reshape(C2, M2, H1)             # (16, 72, 81)

    return pl.pallas_call(
        net_kernel,
        out_shape=jax.ShapeDtypeStruct((B, H2), jnp.float32),
        grid=(1,),
        in_specs=[
            pl.BlockSpec((4, B, 1, XP_LEN), lambda i: (0, 0, 0, 0)),
            pl.BlockSpec((PP_ROWS, 128), lambda i: (0, 0)),
            pl.BlockSpec(memory_space=pl.ANY),                 # wl1 stays in HBM
        ],
        out_specs=pl.BlockSpec((B, H2), lambda i: (0, 0)),
        scratch_shapes=[
            pltpu.VMEM((B, 2 * C1, WIN_LANES), jnp.float32),   # PE/PO windows
            pltpu.VMEM((C2, M2, H1), jnp.float32),             # wl1 landing buf
            pltpu.SemaphoreType.DMA,                           # wl1 DMA sem
        ],
        compiler_params=pltpu.CompilerParams(
            dimension_semantics=("arbitrary",)),
    )(x_ph4, pp, wl1_r)


# ------------------------ reference (plain JAX) ------------------------------
def reference_forward(x, params):
    (w1, b1, w2, b2, wl1, bl1, wl2, bl2) = params
    y = lax.conv_general_dilated(x, w1, (1,), [(PAD1, PAD1)],
                                 dimension_numbers=("NCH", "OIH", "NCH"))
    y = jax.nn.relu(y + b1[None, :, None])
    y = lax.reduce_window(y, -jnp.inf, lax.max, (1, 1, 2), (1, 1, 2), "VALID")
    y = lax.conv_general_dilated(y, w2, (1,), [(PAD2, PAD2)],
                                 dimension_numbers=("NCH", "OIH", "NCH"))
    y = jax.nn.relu(y + b2[None, :, None])
    y = lax.reduce_window(y, -jnp.inf, lax.max, (1, 1, 2), (1, 1, 2), "VALID")
    y = y.reshape(y.shape[0], -1)                              # (B, 1152)
    y = y @ wl1.T + bl1
    y = y @ wl2.T + bl2
    return y


# --------------------------- parameter init ----------------------------------
def init_params(key):
    ks = jax.random.split(key, 8)

    def u(k, shape, fan_in):
        bound = 1.0 / float(np.sqrt(fan_in))
        return jax.random.uniform(k, shape, jnp.float32, -bound, bound)

    w1 = u(ks[0], (C1, 1, K1), 1 * K1)
    b1 = u(ks[1], (C1,), 1 * K1)
    w2 = u(ks[2], (C2, C1, K2), C1 * K2)
    b2 = u(ks[3], (C2,), C1 * K2)
    wl1 = u(ks[4], (H1, FLAT), FLAT)
    bl1 = u(ks[5], (H1,), FLAT)
    wl2 = u(ks[6], (H2, H1), H1)
    bl2 = u(ks[7], (H2,), H1)
    return (w1, b1, w2, b2, wl1, bl1, wl2, bl2)


if __name__ == "__main__":
    key = jax.random.PRNGKey(0)
    kx, kp = jax.random.split(key)
    x = jax.random.normal(kx, (B, 1, L_IN), jnp.float32)   # NCW like PyTorch
    params = init_params(kp)

    out = net_forward(x, params)
    out = jax.block_until_ready(out)

    ref = reference_forward(x, params)
    assert out.shape == (B, H2)
    np.testing.assert_allclose(np.asarray(out), np.asarray(ref),
                               rtol=2e-3, atol=2e-3)
    print("KERNEL_OK")
</pallas_src>

<mosaic_0001>
module attributes {stable_mosaic.version = 11 : i64} {
  func.func @net_kernel(%arg0: i32, %arg1: memref<4x2x1x73xf32, #tpu.memory_space<vmem>>, %arg2: memref<120x128xf32, #tpu.memory_space<vmem>>, %arg3: memref<16x72x81xf32, #tpu.memory_space<any>>, %arg4: memref<2x5xf32, #tpu.memory_space<vmem>>, %arg5: memref<2x16x128xf32, #tpu.memory_space<vmem>>, %arg6: memref<16x72x81xf32, #tpu.memory_space<vmem>>, %arg7: memref<!tpu.dma_semaphore, #tpu.memory_space<semaphore_mem>>) attributes {dimension_semantics = [#tpu.dimension_semantics<arbitrary>], iteration_bounds = array<i64: 1>, scalar_prefetch = 0 : i64, scratch_operands = 3 : i64, tpu.core_type = #tpu.core_type<tc>, window_params = [{pipeline_mode = #tpu.pipeline_mode<synchronous>, transform_indices = @transform_0, window_bounds = array<i64: 4, 2, 1, 73>}, {pipeline_mode = #tpu.pipeline_mode<synchronous>, transform_indices = @transform_1, window_bounds = array<i64: 120, 128>}, {}, {pipeline_mode = #tpu.pipeline_mode<synchronous>, transform_indices = @transform_3, window_bounds = array<i64: 2, 5>}]} {
    tpu.enqueue_dma source(%arg3 : memref<16x72x81xf32, #tpu.memory_space<any>>) target(%arg6 : memref<16x72x81xf32, #tpu.memory_space<vmem>>) target_semaphore(%arg7 : memref<!tpu.dma_semaphore, #tpu.memory_space<semaphore_mem>>)
    %c0 = arith.constant 0 : index
    %c0_0 = arith.constant 0 : index
    %c0_1 = arith.constant 0 : index
    %c0_2 = arith.constant 0 : index
    %0 = vector.load %arg1[%c0, %c0_0, %c0_1, %c0_2] : memref<4x2x1x73xf32, #tpu.memory_space<vmem>>, vector<1x2x1x73xf32>
    %1 = vector.shape_cast %0 : vector<1x2x1x73xf32> to vector<2x1x73xf32>
    %c1 = arith.constant 1 : index
    %c0_3 = arith.constant 0 : index
    %c0_4 = arith.constant 0 : index
    %c0_5 = arith.constant 0 : index
    %2 = vector.load %arg1[%c1, %c0_3, %c0_4, %c0_5] : memref<4x2x1x73xf32, #tpu.memory_space<vmem>>, vector<1x2x1x73xf32>
    %3 = vector.shape_cast %2 : vector<1x2x1x73xf32> to vector<2x1x73xf32>
    %c2 = arith.constant 2 : index
    %c0_6 = arith.constant 0 : index
    %c0_7 = arith.constant 0 : index
    %c0_8 = arith.constant 0 : index
    %4 = vector.load %arg1[%c2, %c0_6, %c0_7, %c0_8] : memref<4x2x1x73xf32, #tpu.memory_space<vmem>>, vector<1x2x1x73xf32>
    %5 = vector.shape_cast %4 : vector<1x2x1x73xf32> to vector<2x1x73xf32>
    %c3 = arith.constant 3 : index
    %c0_9 = arith.constant 0 : index
    %c0_10 = arith.constant 0 : index
    %c0_11 = arith.constant 0 : index
    %6 = vector.load %arg1[%c3, %c0_9, %c0_10, %c0_11] : memref<4x2x1x73xf32, #tpu.memory_space<vmem>>, vector<1x2x1x73xf32>
    %7 = vector.shape_cast %6 : vector<1x2x1x73xf32> to vector<2x1x73xf32>
    %8 = vector.extract_strided_slice %1 {offsets = [0, 0, 0], sizes = [2, 1, 72], strides = [1, 1, 1]} : vector<2x1x73xf32> to vector<2x1x72xf32>
    %9 = vector.shape_cast %8 : vector<2x1x72xf32> to vector<2x1x72xf32>
    %10 = vector.broadcast %9 : vector<2x1x72xf32> to vector<2x8x72xf32>
    %11 = vector.extract_strided_slice %3 {offsets = [0, 0, 0], sizes = [2, 1, 72], strides = [1, 1, 1]} : vector<2x1x73xf32> to vector<2x1x72xf32>
    %12 = vector.shape_cast %11 : vector<2x1x72xf32> to vector<2x1x72xf32>
    %13 = vector.broadcast %12 : vector<2x1x72xf32> to vector<2x8x72xf32>
    %14 = vector.extract_strided_slice %5 {offsets = [0, 0, 0], sizes = [2, 1, 72], strides = [1, 1, 1]} : vector<2x1x73xf32> to vector<2x1x72xf32>
    %15 = vector.shape_cast %14 : vector<2x1x72xf32> to vector<2x1x72xf32>
    %16 = vector.broadcast %15 : vector<2x1x72xf32> to vector<2x8x72xf32>
    %17 = vector.extract_strided_slice %7 {offsets = [0, 0, 0], sizes = [2, 1, 72], strides = [1, 1, 1]} : vector<2x1x73xf32> to vector<2x1x72xf32>
    %18 = vector.shape_cast %17 : vector<2x1x72xf32> to vector<2x1x72xf32>
    %19 = vector.broadcast %18 : vector<2x1x72xf32> to vector<2x8x72xf32>
    %20 = vector.extract_strided_slice %1 {offsets = [0, 0, 1], sizes = [2, 1, 72], strides = [1, 1, 1]} : vector<2x1x73xf32> to vector<2x1x72xf32>
    %21 = vector.shape_cast %20 : vector<2x1x72xf32> to vector<2x1x72xf32>
    %22 = vector.broadcast %21 : vector<2x1x72xf32> to vector<2x8x72xf32>
    %23 = vector.extract_strided_slice %3 {offsets = [0, 0, 1], sizes = [2, 1, 72], strides = [1, 1, 1]} : vector<2x1x73xf32> to vector<2x1x72xf32>
    %24 = vector.shape_cast %23 : vector<2x1x72xf32> to vector<2x1x72xf32>
    %25 = vector.broadcast %24 : vector<2x1x72xf32> to vector<2x8x72xf32>
    %26 = vector.extract_strided_slice %5 {offsets = [0, 0, 1], sizes = [2, 1, 72], strides = [1, 1, 1]} : vector<2x1x73xf32> to vector<2x1x72xf32>
    %27 = vector.shape_cast %26 : vector<2x1x72xf32> to vector<2x1x72xf32>
    %28 = vector.broadcast %27 : vector<2x1x72xf32> to vector<2x8x72xf32>
    %c0_12 = arith.constant 0 : index
    %c0_13 = arith.constant 0 : index
    %29 = vector.load %arg2[%c0_12, %c0_13] : memref<120x128xf32, #tpu.memory_space<vmem>>, vector<8x4xf32>
    %30 = vector.extract_strided_slice %29 {offsets = [0, 0], sizes = [8, 1], strides = [1, 1]} : vector<8x4xf32> to vector<8x1xf32>
    %31 = vector.shape_cast %30 : vector<8x1xf32> to vector<8x1xf32>
    %32 = vector.broadcast %31 : vector<8x1xf32> to vector<8x72xf32>
    %33 = vector.extract_strided_slice %29 {offsets = [0, 1], sizes = [8, 1], strides = [1, 1]} : vector<8x4xf32> to vector<8x1xf32>
    %34 = vector.shape_cast %33 : vector<8x1xf32> to vector<8x1xf32>
    %35 = vector.broadcast %34 : vector<8x1xf32> to vector<8x72xf32>
    %36 = vector.extract_strided_slice %29 {offsets = [0, 2], sizes = [8, 1], strides = [1, 1]} : vector<8x4xf32> to vector<8x1xf32>
    %37 = vector.shape_cast %36 : vector<8x1xf32> to vector<8x1xf32>
    %38 = vector.broadcast %37 : vector<8x1xf32> to vector<8x72xf32>
    %39 = vector.extract_strided_slice %29 {offsets = [0, 3], sizes = [8, 1], strides = [1, 1]} : vector<8x4xf32> to vector<8x1xf32>
    %40 = vector.shape_cast %39 : vector<8x1xf32> to vector<8x1xf32>
    %41 = vector.broadcast %40 : vector<8x1xf32> to vector<8x72xf32>
    %c0_14 = arith.constant 0 : index
    %c4 = arith.constant 4 : index
    %42 = vector.load %arg2[%c0_14, %c4] : memref<120x128xf32, #tpu.memory_space<vmem>>, vector<8x1xf32>
    %43 = vector.shape_cast %42 : vector<8x1xf32> to vector<1x8x1xf32>
    %44 = vector.broadcast %43 : vector<1x8x1xf32> to vector<2x8x72xf32>
    %45 = vector.shape_cast %32 : vector<8x72xf32> to vector<1x8x72xf32>
    %46 = vector.broadcast %45 : vector<1x8x72xf32> to vector<2x8x72xf32>
    %47 = arith.mulf %46, %10 : vector<2x8x72xf32>
    %48 = arith.addf %44, %47 : vector<2x8x72xf32>
    %49 = vector.shape_cast %35 : vector<8x72xf32> to vector<1x8x72xf32>
    %50 = vector.broadcast %49 : vector<1x8x72xf32> to vector<2x8x72xf32>
    %51 = arith.mulf %50, %13 : vector<2x8x72xf32>
    %52 = arith.addf %48, %51 : vector<2x8x72xf32>
    %53 = vector.shape_cast %38 : vector<8x72xf32> to vector<1x8x72xf32>
    %54 = vector.broadcast %53 : vector<1x8x72xf32> to vector<2x8x72xf32>
    %55 = arith.mulf %54, %16 : vector<2x8x72xf32>
    %56 = arith.addf %52, %55 : vector<2x8x72xf32>
    %57 = vector.shape_cast %41 : vector<8x72xf32> to vector<1x8x72xf32>
    %58 = vector.broadcast %57 : vector<1x8x72xf32> to vector<2x8x72xf32>
    %59 = arith.mulf %58, %19 : vector<2x8x72xf32>
    %60 = arith.addf %56, %59 : vector<2x8x72xf32>
    %cst = arith.constant 0.000000e+00 : f32
    %61 = vector.broadcast %cst : f32 to vector<2x8x72xf32>
    %62 = arith.maximumf %60, %61 : vector<2x8x72xf32>
    %63 = vector.shape_cast %32 : vector<8x72xf32> to vector<1x8x72xf32>
    %64 = vector.broadcast %63 : vector<1x8x72xf32> to vector<2x8x72xf32>
    %65 = arith.mulf %64, %13 : vector<2x8x72xf32>
    %66 = arith.addf %44, %65 : vector<2x8x72xf32>
    %67 = vector.shape_cast %35 : vector<8x72xf32> to vector<1x8x72xf32>
    %68 = vector.broadcast %67 : vector<1x8x72xf32> to vector<2x8x72xf32>
    %69 = arith.mulf %68, %16 : vector<2x8x72xf32>
    %70 = arith.addf %66, %69 : vector<2x8x72xf32>
    %71 = vector.shape_cast %38 : vector<8x72xf32> to vector<1x8x72xf32>
    %72 = vector.broadcast %71 : vector<1x8x72xf32> to vector<2x8x72xf32>
    %73 = arith.mulf %72, %19 : vector<2x8x72xf32>
    %74 = arith.addf %70, %73 : vector<2x8x72xf32>
    %75 = vector.shape_cast %41 : vector<8x72xf32> to vector<1x8x72xf32>
    %76 = vector.broadcast %75 : vector<1x8x72xf32> to vector<2x8x72xf32>
    %77 = arith.mulf %76, %22 : vector<2x8x72xf32>
    %78 = arith.addf %74, %77 : vector<2x8x72xf32>
    %cst_15 = arith.constant 0.000000e+00 : f32
    %79 = vector.broadcast %cst_15 : f32 to vector<2x8x72xf32>
    %80 = arith.maximumf %78, %79 : vector<2x8x72xf32>
    %81 = vector.shape_cast %32 : vector<8x72xf32> to vector<1x8x72xf32>
    %82 = vector.broadcast %81 : vector<1x8x72xf32> to vector<2x8x72xf32>
    %83 = arith.mulf %82, %16 : vector<2x8x72xf32>
    %84 = arith.addf %44, %83 : vector<2x8x72xf32>
    %85 = vector.shape_cast %35 : vector<8x72xf32> to vector<1x8x72xf32>
    %86 = vector.broadcast %85 : vector<1x8x72xf32> to vector<2x8x72xf32>
    %87 = arith.mulf %86, %19 : vector<2x8x72xf32>
    %88 = arith.addf %84, %87 : vector<2x8x72xf32>
    %89 = vector.shape_cast %38 : vector<8x72xf32> to vector<1x8x72xf32>
    %90 = vector.broadcast %89 : vector<1x8x72xf32> to vector<2x8x72xf32>
    %91 = arith.mulf %90, %22 : vector<2x8x72xf32>
    %92 = arith.addf %88, %91 : vector<2x8x72xf32>
    %93 = vector.shape_cast %41 : vector<8x72xf32> to vector<1x8x72xf32>
    %94 = vector.broadcast %93 : vector<1x8x72xf32> to vector<2x8x72xf32>
    %95 = arith.mulf %94, %25 : vector<2x8x72xf32>
    %96 = arith.addf %92, %95 : vector<2x8x72xf32>
    %cst_16 = arith.constant 0.000000e+00 : f32
    %97 = vector.broadcast %cst_16 : f32 to vector<2x8x72xf32>
    %98 = arith.maximumf %96, %97 : vector<2x8x72xf32>
    %99 = vector.shape_cast %32 : vector<8x72xf32> to vector<1x8x72xf32>
    %100 = vector.broadcast %99 : vector<1x8x72xf32> to vector<2x8x72xf32>
    %101 = arith.mulf %100, %19 : vector<2x8x72xf32>
    %102 = arith.addf %44, %101 : vector<2x8x72xf32>
    %103 = vector.shape_cast %35 : vector<8x72xf32> to vector<1x8x72xf32>
    %104 = vector.broadcast %103 : vector<1x8x72xf32> to vector<2x8x72xf32>
    %105 = arith.mulf %104, %22 : vector<2x8x72xf32>
    %106 = arith.addf %102, %105 : vector<2x8x72xf32>
    %107 = vector.shape_cast %38 : vector<8x72xf32> to vector<1x8x72xf32>
    %108 = vector.broadcast %107 : vector<1x8x72xf32> to vector<2x8x72xf32>
    %109 = arith.mulf %108, %25 : vector<2x8x72xf32>
    %110 = arith.addf %106, %109 : vector<2x8x72xf32>
    %111 = vector.shape_cast %41 : vector<8x72xf32> to vector<1x8x72xf32>
    %112 = vector.broadcast %111 : vector<1x8x72xf32> to vector<2x8x72xf32>
    %113 = arith.mulf %112, %28 : vector<2x8x72xf32>
    %114 = arith.addf %110, %113 : vector<2x8x72xf32>
    %cst_17 = arith.constant 0.000000e+00 : f32
    %115 = vector.broadcast %cst_17 : f32 to vector<2x8x72xf32>
    %116 = arith.maximumf %114, %115 : vector<2x8x72xf32>
    %117 = arith.maximumf %62, %80 : vector<2x8x72xf32>
    %118 = arith.maximumf %98, %116 : vector<2x8x72xf32>
    %cst_18 = arith.constant 0.000000e+00 : f32
    %119 = vector.broadcast %cst_18 : f32 to vector<2x16x128xf32>
    %c0_19 = arith.constant 0 : index
    %c0_20 = arith.constant 0 : index
    %c0_21 = arith.constant 0 : index
    %120 = vector.load %arg5[%c0_19, %c0_20, %c0_21] : memref<2x16x128xf32, #tpu.memory_space<vmem>>, vector<2x16x128xf32>
    tpu.vector_store %arg5[%c0_19, %c0_20, %c0_21], %119 {strides = array<i32>} : memref<2x16x128xf32, #tpu.memory_space<vmem>>, vector<2x16x128xf32>,
    %c0_22 = arith.constant 0 : index
    %c0_23 = arith.constant 0 : index
    %c2_24 = arith.constant 2 : index
    %121 = vector.load %arg5[%c0_22, %c0_23, %c2_24] : memref<2x16x128xf32, #tpu.memory_space<vmem>>, vector<2x8x72xf32>
    tpu.vector_store %arg5[%c0_22, %c0_23, %c2_24], %118 {strides = array<i32>} : memref<2x16x128xf32, #tpu.memory_space<vmem>>, vector<2x8x72xf32>,
    %c0_25 = arith.constant 0 : index
    %c8 = arith.constant 8 : index
    %c1_26 = arith.constant 1 : index
    %122 = vector.load %arg5[%c0_25, %c8, %c1_26] : memref<2x16x128xf32, #tpu.memory_space<vmem>>, vector<2x8x72xf32>
    tpu.vector_store %arg5[%c0_25, %c8, %c1_26], %117 {strides = array<i32>} : memref<2x16x128xf32, #tpu.memory_space<vmem>>, vector<2x8x72xf32>,
    %c0_27 = arith.constant 0 : index
    %c0_28 = arith.constant 0 : index
    %c0_29 = arith.constant 0 : index
    %123 = vector.load %arg5[%c0_27, %c0_28, %c0_29] : memref<2x16x128xf32, #tpu.memory_space<vmem>>, vector<2x16x72xf32>
    %c0_30 = arith.constant 0 : index
    %c0_31 = arith.constant 0 : index
    %c1_32 = arith.constant 1 : index
    %124 = vector.load %arg5[%c0_30, %c0_31, %c1_32] : memref<2x16x128xf32, #tpu.memory_space<vmem>>, vector<2x16x72xf32>
    %c0_33 = arith.constant 0 : index
    %c0_34 = arith.constant 0 : index
    %c2_35 = arith.constant 2 : index
    %125 = vector.load %arg5[%c0_33, %c0_34, %c2_35] : memref<2x16x128xf32, #tpu.memory_space<vmem>>, vector<2x16x72xf32>
    %c0_36 = arith.constant 0 : index
    %c0_37 = arith.constant 0 : index
    %c3_38 = arith.constant 3 : index
    %126 = vector.load %arg5[%c0_36, %c0_37, %c3_38] : memref<2x16x128xf32, #tpu.memory_space<vmem>>, vector<2x8x72xf32>
    %c8_39 = arith.constant 8 : index
    %c0_40 = arith.constant 0 : index
    %127 = vector.load %arg2[%c8_39, %c0_40] : memref<120x128xf32, #tpu.memory_space<vmem>>, vector<16x48xf32>
    %c8_41 = arith.constant 8 : index
    %c48 = arith.constant 48 : index
    %128 = vector.load %arg2[%c8_41, %c48] : memref<120x128xf32, #tpu.memory_space<vmem>>, vector<16x1xf32>
    %129 = vector.shape_cast %128 : vector<16x1xf32> to vector<1x16x1xf32>
    %130 = vector.broadcast %129 : vector<1x16x1xf32> to vector<2x16x72xf32>
    %131 = vector.extract_strided_slice %123 {offsets = [0, 0, 0], sizes = [2, 1, 72], strides = [1, 1, 1]} : vector<2x16x72xf32> to vector<2x1x72xf32>
    %132 = vector.extract_strided_slice %124 {offsets = [0, 0, 0], sizes = [2, 1, 72], strides = [1, 1, 1]} : vector<2x16x72xf32> to vector<2x1x72xf32>
    %133 = vector.extract_strided_slice %125 {offsets = [0, 0, 0], sizes = [2, 1, 72], strides = [1, 1, 1]} : vector<2x16x72xf32> to vector<2x1x72xf32>
    %134 = vector.extract_strided_slice %126 {offsets = [0, 0, 0], sizes = [2, 1, 72], strides = [1, 1, 1]} : vector<2x8x72xf32> to vector<2x1x72xf32>
    %135 = vector.extract_strided_slice %123 {offsets = [0, 8, 0], sizes = [2, 1, 72], strides = [1, 1, 1]} : vector<2x16x72xf32> to vector<2x1x72xf32>
    %136 = vector.extract_strided_slice %124 {offsets = [0, 8, 0], sizes = [2, 1, 72], strides = [1, 1, 1]} : vector<2x16x72xf32> to vector<2x1x72xf32>
    %137 = vector.extract_strided_slice %125 {offsets = [0, 8, 0], sizes = [2, 1, 72], strides = [1, 1, 1]} : vector<2x16x72xf32> to vector<2x1x72xf32>
    %138 = vector.extract_strided_slice %127 {offsets = [0, 0], sizes = [16, 1], strides = [1, 1]} : vector<16x48xf32> to vector<16x1xf32>
    %139 = vector.shape_cast %138 : vector<16x1xf32> to vector<16x1xf32>
    %140 = vector.broadcast %139 : vector<16x1xf32> to vector<16x72xf32>
    %141 = vector.extract_strided_slice %127 {offsets = [0, 1], sizes = [16, 1], strides = [1, 1]} : vector<16x48xf32> to vector<16x1xf32>
    %142 = vector.shape_cast %141 : vector<16x1xf32> to vector<16x1xf32>
    %143 = vector.broadcast %142 : vector<16x1xf32> to vector<16x72xf32>
    %144 = vector.shape_cast %140 : vector<16x72xf32> to vector<1x16x72xf32>
    %145 = vector.broadcast %144 : vector<1x16x72xf32> to vector<2x16x72xf32>
    %146 = vector.broadcast %131 : vector<2x1x72xf32> to vector<2x16x72xf32>
    %147 = arith.mulf %145, %146 : vector<2x16x72xf32>
    %148 = arith.addf %130, %147 : vector<2x16x72xf32>
    %149 = vector.shape_cast %143 : vector<16x72xf32> to vector<1x16x72xf32>
    %150 = vector.broadcast %149 : vector<1x16x72xf32> to vector<2x16x72xf32>
    %151 = vector.broadcast %135 : vector<2x1x72xf32> to vector<2x16x72xf32>
    %152 = arith.mulf %150, %151 : vector<2x16x72xf32>
    %153 = arith.addf %148, %152 : vector<2x16x72xf32>
    %154 = vector.shape_cast %140 : vector<16x72xf32> to vector<1x16x72xf32>
    %155 = vector.broadcast %154 : vector<1x16x72xf32> to vector<2x16x72xf32>
    %156 = vector.broadcast %135 : vector<2x1x72xf32> to vector<2x16x72xf32>
    %157 = arith.mulf %155, %156 : vector<2x16x72xf32>
    %158 = arith.addf %130, %157 : vector<2x16x72xf32>
    %159 = vector.shape_cast %143 : vector<16x72xf32> to vector<1x16x72xf32>
    %160 = vector.broadcast %159 : vector<1x16x72xf32> to vector<2x16x72xf32>
    %161 = vector.broadcast %132 : vector<2x1x72xf32> to vector<2x16x72xf32>
    %162 = arith.mulf %160, %161 : vector<2x16x72xf32>
    %163 = arith.addf %158, %162 : vector<2x16x72xf32>
    %164 = vector.extract_strided_slice %127 {offsets = [0, 2], sizes = [16, 1], strides = [1, 1]} : vector<16x48xf32> to vector<16x1xf32>
    %165 = vector.shape_cast %164 : vector<16x1xf32> to vector<16x1xf32>
    %166 = vector.broadcast %165 : vector<16x1xf32> to vector<16x72xf32>
    %167 = vector.extract_strided_slice %127 {offsets = [0, 3], sizes = [16, 1], strides = [1, 1]} : vector<16x48xf32> to vector<16x1xf32>
    %168 = vector.shape_cast %167 : vector<16x1xf32> to vector<16x1xf32>
    %169 = vector.broadcast %168 : vector<16x1xf32> to vector<16x72xf32>
    %170 = vector.shape_cast %166 : vector<16x72xf32> to vector<1x16x72xf32>
    %171 = vector.broadcast %170 : vector<1x16x72xf32> to vector<2x16x72xf32>
    %172 = vector.broadcast %132 : vector<2x1x72xf32> to vector<2x16x72xf32>
    %173 = arith.mulf %171, %172 : vector<2x16x72xf32>
    %174 = arith.addf %153, %173 : vector<2x16x72xf32>
    %175 = vector.shape_cast %169 : vector<16x72xf32> to vector<1x16x72xf32>
    %176 = vector.broadcast %175 : vector<1x16x72xf32> to vector<2x16x72xf32>
    %177 = vector.broadcast %136 : vector<2x1x72xf32> to vector<2x16x72xf32>
    %178 = arith.mulf %176, %177 : vector<2x16x72xf32>
    %179 = arith.addf %174, %178 : vector<2x16x72xf32>
    %180 = vector.shape_cast %166 : vector<16x72xf32> to vector<1x16x72xf32>
    %181 = vector.broadcast %180 : vector<1x16x72xf32> to vector<2x16x72xf32>
    %182 = vector.broadcast %136 : vector<2x1x72xf32> to vector<2x16x72xf32>
    %183 = arith.mulf %181, %182 : vector<2x16x72xf32>
    %184 = arith.addf %163, %183 : vector<2x16x72xf32>
    %185 = vector.shape_cast %169 : vector<16x72xf32> to vector<1x16x72xf32>
    %186 = vector.broadcast %185 : vector<1x16x72xf32> to vector<2x16x72xf32>
    %187 = vector.broadcast %133 : vector<2x1x72xf32> to vector<2x16x72xf32>
    %188 = arith.mulf %186, %187 : vector<2x16x72xf32>
    %189 = arith.addf %184, %188 : vector<2x16x72xf32>
    %190 = vector.extract_strided_slice %127 {offsets = [0, 4], sizes = [16, 1], strides = [1, 1]} : vector<16x48xf32> to vector<16x1xf32>
    %191 = vector.shape_cast %190 : vector<16x1xf32> to vector<16x1xf32>
    %192 = vector.broadcast %191 : vector<16x1xf32> to vector<16x72xf32>
    %193 = vector.extract_strided_slice %127 {offsets = [0, 5], sizes = [16, 1], strides = [1, 1]} : vector<16x48xf32> to vector<16x1xf32>
    %194 = vector.shape_cast %193 : vector<16x1xf32> to vector<16x1xf32>
    %195 = vector.broadcast %194 : vector<16x1xf32> to vector<16x72xf32>
    %196 = vector.shape_cast %192 : vector<16x72xf32> to vector<1x16x72xf32>
    %197 = vector.broadcast %196 : vector<1x16x72xf32> to vector<2x16x72xf32>
    %198 = vector.broadcast %133 : vector<2x1x72xf32> to vector<2x16x72xf32>
    %199 = arith.mulf %197, %198 : vector<2x16x72xf32>
    %200 = arith.addf %179, %199 : vector<2x16x72xf32>
    %201 = vector.shape_cast %195 : vector<16x72xf32> to vector<1x16x72xf32>
    %202 = vector.broadcast %201 : vector<1x16x72xf32> to vector<2x16x72xf32>
    %203 = vector.broadcast %137 : vector<2x1x72xf32> to vector<2x16x72xf32>
    %204 = arith.mulf %202, %203 : vector<2x16x72xf32>
    %205 = arith.addf %200, %204 : vector<2x16x72xf32>
    %206 = vector.shape_cast %192 : vector<16x72xf32> to vector<1x16x72xf32>
    %207 = vector.broadcast %206 : vector<1x16x72xf32> to vector<2x16x72xf32>
    %208 = vector.broadcast %137 : vector<2x1x72xf32> to vector<2x16x72xf32>
    %209 = arith.mulf %207, %208 : vector<2x16x72xf32>
    %210 = arith.addf %189, %209 : vector<2x16x72xf32>
    %211 = vector.shape_cast %195 : vector<16x72xf32> to vector<1x16x72xf32>
    %212 = vector.broadcast %211 : vector<1x16x72xf32> to vector<2x16x72xf32>
    %213 = vector.broadcast %134 : vector<2x1x72xf32> to vector<2x16x72xf32>
    %214 = arith.mulf %212, %213 : vector<2x16x72xf32>
    %215 = arith.addf %210, %214 : vector<2x16x72xf32>
    %216 = vector.extract_strided_slice %123 {offsets = [0, 1, 0], sizes = [2, 1, 72], strides = [1, 1, 1]} : vector<2x16x72xf32> to vector<2x1x72xf32>
    %217 = vector.extract_strided_slice %124 {offsets = [0, 1, 0], sizes = [2, 1, 72], strides = [1, 1, 1]} : vector<2x16x72xf32> to vector<2x1x72xf32>
    %218 = vector.extract_strided_slice %125 {offsets = [0, 1, 0], sizes = [2, 1, 72], strides = [1, 1, 1]} : vector<2x16x72xf32> to vector<2x1x72xf32>
    %219 = vector.extract_strided_slice %126 {offsets = [0, 1, 0], sizes = [2, 1, 72], strides = [1, 1, 1]} : vector<2x8x72xf32> to vector<2x1x72xf32>
    %220 = vector.extract_strided_slice %123 {offsets = [0, 9, 0], sizes = [2, 1, 72], strides = [1, 1, 1]} : vector<2x16x72xf32> to vector<2x1x72xf32>
    %221 = vector.extract_strided_slice %124 {offsets = [0, 9, 0], sizes = [2, 1, 72], strides = [1, 1, 1]} : vector<2x16x72xf32> to vector<2x1x72xf32>
    %222 = vector.extract_strided_slice %125 {offsets = [0, 9, 0], sizes = [2, 1, 72], strides = [1, 1, 1]} : vector<2x16x72xf32> to vector<2x1x72xf32>
    %223 = vector.extract_strided_slice %127 {offsets = [0, 6], sizes = [16, 1], strides = [1, 1]} : vector<16x48xf32> to vector<16x1xf32>
    %224 = vector.shape_cast %223 : vector<16x1xf32> to vector<16x1xf32>
    %225 = vector.broadcast %224 : vector<16x1xf32> to vector<16x72xf32>
    %226 = vector.extract_strided_slice %127 {offsets = [0, 7], sizes = [16, 1], strides = [1, 1]} : vector<16x48xf32> to vector<16x1xf32>
    %227 = vector.shape_cast %226 : vector<16x1xf32> to vector<16x1xf32>
    %228 = vector.broadcast %227 : vector<16x1xf32> to vector<16x72xf32>
    %229 = vector.shape_cast %225 : vector<16x72xf32> to vector<1x16x72xf32>
    %230 = vector.broadcast %229 : vector<1x16x72xf32> to vector<2x16x72xf32>
    %231 = vector.broadcast %216 : vector<2x1x72xf32> to vector<2x16x72xf32>
    %232 = arith.mulf %230, %231 : vector<2x16x72xf32>
    %233 = arith.addf %205, %232 : vector<2x16x72xf32>
    %234 = vector.shape_cast %228 : vector<16x72xf32> to vector<1x16x72xf32>
    %235 = vector.broadcast %234 : vector<1x16x72xf32> to vector<2x16x72xf32>
    %236 = vector.broadcast %220 : vector<2x1x72xf32> to vector<2x16x72xf32>
    %237 = arith.mulf %235, %236 : vector<2x16x72xf32>
    %238 = arith.addf %233, %237 : vector<2x16x72xf32>
    %239 = vector.shape_cast %225 : vector<16x72xf32> to vector<1x16x72xf32>
    %240 = vector.broadcast %239 : vector<1x16x72xf32> to vector<2x16x72xf32>
    %241 = vector.broadcast %220 : vector<2x1x72xf32> to vector<2x16x72xf32>
    %242 = arith.mulf %240, %241 : vector<2x16x72xf32>
    %243 = arith.addf %215, %242 : vector<2x16x72xf32>
    %244 = vector.shape_cast %228 : vector<16x72xf32> to vector<1x16x72xf32>
    %245 = vector.broadcast %244 : vector<1x16x72xf32> to vector<2x16x72xf32>
    %246 = vector.broadcast %217 : vector<2x1x72xf32> to vector<2x16x72xf32>
    %247 = arith.mulf %245, %246 : vector<2x16x72xf32>
    %248 = arith.addf %243, %247 : vector<2x16x72xf32>
    %249 = vector.extract_strided_slice %127 {offsets = [0, 8], sizes = [16, 1], strides = [1, 1]} : vector<16x48xf32> to vector<16x1xf32>
    %250 = vector.shape_cast %249 : vector<16x1xf32> to vector<16x1xf32>
    %251 = vector.broadcast %250 : vector<16x1xf32> to vector<16x72xf32>
    %252 = vector.extract_strided_slice %127 {offsets = [0, 9], sizes = [16, 1], strides = [1, 1]} : vector<16x48xf32> to vector<16x1xf32>
    %253 = vector.shape_cast %252 : vector<16x1xf32> to vector<16x1xf32>
    %254 = vector.broadcast %253 : vector<16x1xf32> to vector<16x72xf32>
    %255 = vector.shape_cast %251 : vector<16x72xf32> to vector<1x16x72xf32>
    %256 = vector.broadcast %255 : vector<1x16x72xf32> to vector<2x16x72xf32>
    %257 = vector.broadcast %217 : vector<2x1x72xf32> to vector<2x16x72xf32>
    %258 = arith.mulf %256, %257 : vector<2x16x72xf32>
    %259 = arith.addf %238, %258 : vector<2x16x72xf32>
    %260 = vector.shape_cast %254 : vector<16x72xf32> to vector<1x16x72xf32>
    %261 = vector.broadcast %260 : vector<1x16x72xf32> to vector<2x16x72xf32>
    %262 = vector.broadcast %221 : vector<2x1x72xf32> to vector<2x16x72xf32>
    %263 = arith.mulf %261, %262 : vector<2x16x72xf32>
    %264 = arith.addf %259, %263 : vector<2x16x72xf32>
    %265 = vector.shape_cast %251 : vector<16x72xf32> to vector<1x16x72xf32>
    %266 = vector.broadcast %265 : vector<1x16x72xf32> to vector<2x16x72xf32>
    %267 = vector.broadcast %221 : vector<2x1x72xf32> to vector<2x16x72xf32>
    %268 = arith.mulf %266, %267 : vector<2x16x72xf32>
    %269 = arith.addf %248, %268 : vector<2x16x72xf32>
    %270 = vector.shape_cast %254 : vector<16x72xf32> to vector<1x16x72xf32>
    %271 = vector.broadcast %270 : vector<1x16x72xf32> to vector<2x16x72xf32>
    %272 = vector.broadcast %218 : vector<2x1x72xf32> to vector<2x16x72xf32>
    %273 = arith.mulf %271, %272 : vector<2x16x72xf32>
    %274 = arith.addf %269, %273 : vector<2x16x72xf32>
    %275 = vector.extract_strided_slice %127 {offsets = [0, 10], sizes = [16, 1], strides = [1, 1]} : vector<16x48xf32> to vector<16x1xf32>
    %276 = vector.shape_cast %275 : vector<16x1xf32> to vector<16x1xf32>
    %277 = vector.broadcast %276 : vector<16x1xf32> to vector<16x72xf32>
    %278 = vector.extract_strided_slice %127 {offsets = [0, 11], sizes = [16, 1], strides = [1, 1]} : vector<16x48xf32> to vector<16x1xf32>
    %279 = vector.shape_cast %278 : vector<16x1xf32> to vector<16x1xf32>
    %280 = vector.broadcast %279 : vector<16x1xf32> to vector<16x72xf32>
    %281 = vector.shape_cast %277 : vector<16x72xf32> to vector<1x16x72xf32>
    %282 = vector.broadcast %281 : vector<1x16x72xf32> to vector<2x16x72xf32>
    %283 = vector.broadcast %218 : vector<2x1x72xf32> to vector<2x16x72xf32>
    %284 = arith.mulf %282, %283 : vector<2x16x72xf32>
    %285 = arith.addf %264, %284 : vector<2x16x72xf32>
    %286 = vector.shape_cast %280 : vector<16x72xf32> to vector<1x16x72xf32>
    %287 = vector.broadcast %286 : vector<1x16x72xf32> to vector<2x16x72xf32>
    %288 = vector.broadcast %222 : vector<2x1x72xf32> to vector<2x16x72xf32>
    %289 = arith.mulf %287, %288 : vector<2x16x72xf32>
    %290 = arith.addf %285, %289 : vector<2x16x72xf32>
    %291 = vector.shape_cast %277 : vector<16x72xf32> to vector<1x16x72xf32>
    %292 = vector.broadcast %291 : vector<1x16x72xf32> to vector<2x16x72xf32>
    %293 = vector.broadcast %222 : vector<2x1x72xf32> to vector<2x16x72xf32>
    %294 = arith.mulf %292, %293 : vector<2x16x72xf32>
    %295 = arith.addf %274, %294 : vector<2x16x72xf32>
    %296 = vector.shape_cast %280 : vector<16x72xf32> to vector<1x16x72xf32>
    %297 = vector.broadcast %296 : vector<1x16x72xf32> to vector<2x16x72xf32>
    %298 = vector.broadcast %219 : vector<2x1x72xf32> to vector<2x16x72xf32>
    %299 = arith.mulf %297, %298 : vector<2x16x72xf32>
    %300 = arith.addf %295, %299 : vector<2x16x72xf32>
    %301 = vector.extract_strided_slice %123 {offsets = [0, 2, 0], sizes = [2, 1, 72], strides = [1, 1, 1]} : vector<2x16x72xf32> to vector<2x1x72xf32>
    %302 = vector.extract_strided_slice %124 {offsets = [0, 2, 0], sizes = [2, 1, 72], strides = [1, 1, 1]} : vector<2x16x72xf32> to vector<2x1x72xf32>
    %303 = vector.extract_strided_slice %125 {offsets = [0, 2, 0], sizes = [2, 1, 72], strides = [1, 1, 1]} : vector<2x16x72xf32> to vector<2x1x72xf32>
    %304 = vector.extract_strided_slice %126 {offsets = [0, 2, 0], sizes = [2, 1, 72], strides = [1, 1, 1]} : vector<2x8x72xf32> to vector<2x1x72xf32>
    %305 = vector.extract_strided_slice %123 {offsets = [0, 10, 0], sizes = [2, 1, 72], strides = [1, 1, 1]} : vector<2x16x72xf32> to vector<2x1x72xf32>
    %306 = vector.extract_strided_slice %124 {offsets = [0, 10, 0], sizes = [2, 1, 72], strides = [1, 1, 1]} : vector<2x16x72xf32> to vector<2x1x72xf32>
    %307 = vector.extract_strided_slice %125 {offsets = [0, 10, 0], sizes = [2, 1, 72], strides = [1, 1, 1]} : vector<2x16x72xf32> to vector<2x1x72xf32>
    %308 = vector.extract_strided_slice %127 {offsets = [0, 12], sizes = [16, 1], strides = [1, 1]} : vector<16x48xf32> to vector<16x1xf32>
    %309 = vector.shape_cast %308 : vector<16x1xf32> to vector<16x1xf32>
    %310 = vector.broadcast %309 : vector<16x1xf32> to vector<16x72xf32>
    %311 = vector.extract_strided_slice %127 {offsets = [0, 13], sizes = [16, 1], strides = [1, 1]} : vector<16x48xf32> to vector<16x1xf32>
    %312 = vector.shape_cast %311 : vector<16x1xf32> to vector<16x1xf32>
    %313 = vector.broadcast %312 : vector<16x1xf32> to vector<16x72xf32>
    %314 = vector.shape_cast %310 : vector<16x72xf32> to vector<1x16x72xf32>
    %315 = vector.broadcast %314 : vector<1x16x72xf32> to vector<2x16x72xf32>
    %316 = vector.broadcast %301 : vector<2x1x72xf32> to vector<2x16x72xf32>
    %317 = arith.mulf %315, %316 : vector<2x16x72xf32>
    %318 = arith.addf %290, %317 : vector<2x16x72xf32>
    %319 = vector.shape_cast %313 : vector<16x72xf32> to vector<1x16x72xf32>
    %320 = vector.broadcast %319 : vector<1x16x72xf32> to vector<2x16x72xf32>
    %321 = vector.broadcast %305 : vector<2x1x72xf32> to vector<2x16x72xf32>
    %322 = arith.mulf %320, %321 : vector<2x16x72xf32>
    %323 = arith.addf %318, %322 : vector<2x16x72xf32>
    %324 = vector.shape_cast %310 : vector<16x72xf32> to vector<1x16x72xf32>
    %325 = vector.broadcast %324 : vector<1x16x72xf32> to vector<2x16x72xf32>
    %326 = vector.broadcast %305 : vector<2x1x72xf32> to vector<2x16x72xf32>
    %327 = arith.mulf %325, %326 : vector<2x16x72xf32>
    %328 = arith.addf %300, %327 : vector<2x16x72xf32>
    %329 = vector.shape_cast %313 : vector<16x72xf32> to vector<1x16x72xf32>
    %330 = vector.broadcast %329 : vector<1x16x72xf32> to vector<2x16x72xf32>
    %331 = vector.broadcast %302 : vector<2x1x72xf32> to vector<2x16x72xf32>
    %332 = arith.mulf %330, %331 : vector<2x16x72xf32>
    %333 = arith.addf %328, %332 : vector<2x16x72xf32>
    %334 = vector.extract_strided_slice %127 {offsets = [0, 14], sizes = [16, 1], strides = [1, 1]} : vector<16x48xf32> to vector<16x1xf32>
    %335 = vector.shape_cast %334 : vector<16x1xf32> to vector<16x1xf32>
    %336 = vector.broadcast %335 : vector<16x1xf32> to vector<16x72xf32>
    %337 = vector.extract_strided_slice %127 {offsets = [0, 15], sizes = [16, 1], strides = [1, 1]} : vector<16x48xf32> to vector<16x1xf32>
    %338 = vector.shape_cast %337 : vector<16x1xf32> to vector<16x1xf32>
    %339 = vector.broadcast %338 : vector<16x1xf32> to vector<16x72xf32>
    %340 = vector.shape_cast %336 : vector<16x72xf32> to vector<1x16x72xf32>
    %341 = vector.broadcast %340 : vector<1x16x72xf32> to vector<2x16x72xf32>
    %342 = vector.broadcast %302 : vector<2x1x72xf32> to vector<2x16x72xf32>
    %343 = arith.mulf %341, %342 : vector<2x16x72xf32>
    %344 = arith.addf %323, %343 : vector<2x16x72xf32>
    %345 = vector.shape_cast %339 : vector<16x72xf32> to vector<1x16x72xf32>
    %346 = vector.broadcast %345 : vector<1x16x72xf32> to vector<2x16x72xf32>
    %347 = vector.broadcast %306 : vector<2x1x72xf32> to vector<2x16x72xf32>
    %348 = arith.mulf %346, %347 : vector<2x16x72xf32>
    %349 = arith.addf %344, %348 : vector<2x16x72xf32>
    %350 = vector.shape_cast %336 : vector<16x72xf32> to vector<1x16x72xf32>
    %351 = vector.broadcast %350 : vector<1x16x72xf32> to vector<2x16x72xf32>
    %352 = vector.broadcast %306 : vector<2x1x72xf32> to vector<2x16x72xf32>
    %353 = arith.mulf %351, %352 : vector<2x16x72xf32>
    %354 = arith.addf %333, %353 : vector<2x16x72xf32>
    %355 = vector.shape_cast %339 : vector<16x72xf32> to vector<1x16x72xf32>
    %356 = vector.broadcast %355 : vector<1x16x72xf32> to vector<2x16x72xf32>
    %357 = vector.broadcast %303 : vector<2x1x72xf32> to vector<2x16x72xf32>
    %358 = arith.mulf %356, %357 : vector<2x16x72xf32>
    %359 = arith.addf %354, %358 : vector<2x16x72xf32>
    %360 = vector.extract_strided_slice %127 {offsets = [0, 16], sizes = [16, 1], strides = [1, 1]} : vector<16x48xf32> to vector<16x1xf32>
    %361 = vector.shape_cast %360 : vector<16x1xf32> to vector<16x1xf32>
    %362 = vector.broadcast %361 : vector<16x1xf32> to vector<16x72xf32>
    %363 = vector.extract_strided_slice %127 {offsets = [0, 17], sizes = [16, 1], strides = [1, 1]} : vector<16x48xf32> to vector<16x1xf32>
    %364 = vector.shape_cast %363 : vector<16x1xf32> to vector<16x1xf32>
    %365 = vector.broadcast %364 : vector<16x1xf32> to vector<16x72xf32>
    %366 = vector.shape_cast %362 : vector<16x72xf32> to vector<1x16x72xf32>
    %367 = vector.broadcast %366 : vector<1x16x72xf32> to vector<2x16x72xf32>
    %368 = vector.broadcast %303 : vector<2x1x72xf32> to vector<2x16x72xf32>
    %369 = arith.mulf %367, %368 : vector<2x16x72xf32>
    %370 = arith.addf %349, %369 : vector<2x16x72xf32>
    %371 = vector.shape_cast %365 : vector<16x72xf32> to vector<1x16x72xf32>
    %372 = vector.broadcast %371 : vector<1x16x72xf32> to vector<2x16x72xf32>
    %373 = vector.broadcast %307 : vector<2x1x72xf32> to vector<2x16x72xf32>
    %374 = arith.mulf %372, %373 : vector<2x16x72xf32>
    %375 = arith.addf %370, %374 : vector<2x16x72xf32>
    %376 = vector.shape_cast %362 : vector<16x72xf32> to vector<1x16x72xf32>
    %377 = vector.broadcast %376 : vector<1x16x72xf32> to vector<2x16x72xf32>
    %378 = vector.broadcast %307 : vector<2x1x72xf32> to vector<2x16x72xf32>
    %379 = arith.mulf %377, %378 : vector<2x16x72xf32>
    %380 = arith.addf %359, %379 : vector<2x16x72xf32>
    %381 = vector.shape_cast %365 : vector<16x72xf32> to vector<1x16x72xf32>
    %382 = vector.broadcast %381 : vector<1x16x72xf32> to vector<2x16x72xf32>
    %383 = vector.broadcast %304 : vector<2x1x72xf32> to vector<2x16x72xf32>
    %384 = arith.mulf %382, %383 : vector<2x16x72xf32>
    %385 = arith.addf %380, %384 : vector<2x16x72xf32>
    %386 = vector.extract_strided_slice %123 {offsets = [0, 3, 0], sizes = [2, 1, 72], strides = [1, 1, 1]} : vector<2x16x72xf32> to vector<2x1x72xf32>
    %387 = vector.extract_strided_slice %124 {offsets = [0, 3, 0], sizes = [2, 1, 72], strides = [1, 1, 1]} : vector<2x16x72xf32> to vector<2x1x72xf32>
    %388 = vector.extract_strided_slice %125 {offsets = [0, 3, 0], sizes = [2, 1, 72], strides = [1, 1, 1]} : vector<2x16x72xf32> to vector<2x1x72xf32>
    %389 = vector.extract_strided_slice %126 {offsets = [0, 3, 0], sizes = [2, 1, 72], strides = [1, 1, 1]} : vector<2x8x72xf32> to vector<2x1x72xf32>
    %390 = vector.extract_strided_slice %123 {offsets = [0, 11, 0], sizes = [2, 1, 72], strides = [1, 1, 1]} : vector<2x16x72xf32> to vector<2x1x72xf32>
    %391 = vector.extract_strided_slice %124 {offsets = [0, 11, 0], sizes = [2, 1, 72], strides = [1, 1, 1]} : vector<2x16x72xf32> to vector<2x1x72xf32>
    %392 = vector.extract_strided_slice %125 {offsets = [0, 11, 0], sizes = [2, 1, 72], strides = [1, 1, 1]} : vector<2x16x72xf32> to vector<2x1x72xf32>
    %393 = vector.extract_strided_slice %127 {offsets = [0, 18], sizes = [16, 1], strides = [1, 1]} : vector<16x48xf32> to vector<16x1xf32>
    %394 = vector.shape_cast %393 : vector<16x1xf32> to vector<16x1xf32>
    %395 = vector.broadcast %394 : vector<16x1xf32> to vector<16x72xf32>
    %396 = vector.extract_strided_slice %127 {offsets = [0, 19], sizes = [16, 1], strides = [1, 1]} : vector<16x48xf32> to vector<16x1xf32>
    %397 = vector.shape_cast %396 : vector<16x1xf32> to vector<16x1xf32>
    %398 = vector.broadcast %397 : vector<16x1xf32> to vector<16x72xf32>
    %399 = vector.shape_cast %395 : vector<16x72xf32> to vector<1x16x72xf32>
    %400 = vector.broadcast %399 : vector<1x16x72xf32> to vector<2x16x72xf32>
    %401 = vector.broadcast %386 : vector<2x1x72xf32> to vector<2x16x72xf32>
    %402 = arith.mulf %400, %401 : vector<2x16x72xf32>
    %403 = arith.addf %375, %402 : vector<2x16x72xf32>
    %404 = vector.shape_cast %398 : vector<16x72xf32> to vector<1x16x72xf32>
    %405 = vector.broadcast %404 : vector<1x16x72xf32> to vector<2x16x72xf32>
    %406 = vector.broadcast %390 : vector<2x1x72xf32> to vector<2x16x72xf32>
    %407 = arith.mulf %405, %406 : vector<2x16x72xf32>
    %408 = arith.addf %403, %407 : vector<2x16x72xf32>
    %409 = vector.shape_cast %395 : vector<16x72xf32> to vector<1x16x72xf32>
    %410 = vector.broadcast %409 : vector<1x16x72xf32> to vector<2x16x72xf32>
    %411 = vector.broadcast %390 : vector<2x1x72xf32> to vector<2x16x72xf32>
    %412 = arith.mulf %410, %411 : vector<2x16x72xf32>
    %413 = arith.addf %385, %412 : vector<2x16x72xf32>
    %414 = vector.shape_cast %398 : vector<16x72xf32> to vector<1x16x72xf32>
    %415 = vector.broadcast %414 : vector<1x16x72xf32> to vector<2x16x72xf32>
    %416 = vector.broadcast %387 : vector<2x1x72xf32> to vector<2x16x72xf32>
    %417 = arith.mulf %415, %416 : vector<2x16x72xf32>
    %418 = arith.addf %413, %417 : vector<2x16x72xf32>
    %419 = vector.extract_strided_slice %127 {offsets = [0, 20], sizes = [16, 1], strides = [1, 1]} : vector<16x48xf32> to vector<16x1xf32>
    %420 = vector.shape_cast %419 : vector<16x1xf32> to vector<16x1xf32>
    %421 = vector.broadcast %420 : vector<16x1xf32> to vector<16x72xf32>
    %422 = vector.extract_strided_slice %127 {offsets = [0, 21], sizes = [16, 1], strides = [1, 1]} : vector<16x48xf32> to vector<16x1xf32>
    %423 = vector.shape_cast %422 : vector<16x1xf32> to vector<16x1xf32>
    %424 = vector.broadcast %423 : vector<16x1xf32> to vector<16x72xf32>
    %425 = vector.shape_cast %421 : vector<16x72xf32> to vector<1x16x72xf32>
    %426 = vector.broadcast %425 : vector<1x16x72xf32> to vector<2x16x72xf32>
    %427 = vector.broadcast %387 : vector<2x1x72xf32> to vector<2x16x72xf32>
    %428 = arith.mulf %426, %427 : vector<2x16x72xf32>
    %429 = arith.addf %408, %428 : vector<2x16x72xf32>
    %430 = vector.shape_cast %424 : vector<16x72xf32> to vector<1x16x72xf32>
    %431 = vector.broadcast %430 : vector<1x16x72xf32> to vector<2x16x72xf32>
    %432 = vector.broadcast %391 : vector<2x1x72xf32> to vector<2x16x72xf32>
    %433 = arith.mulf %431, %432 : vector<2x16x72xf32>
    %434 = arith.addf %429, %433 : vector<2x16x72xf32>
    %435 = vector.shape_cast %421 : vector<16x72xf32> to vector<1x16x72xf32>
    %436 = vector.broadcast %435 : vector<1x16x72xf32> to vector<2x16x72xf32>
    %437 = vector.broadcast %391 : vector<2x1x72xf32> to vector<2x16x72xf32>
    %438 = arith.mulf %436, %437 : vector<2x16x72xf32>
    %439 = arith.addf %418, %438 : vector<2x16x72xf32>
    %440 = vector.shape_cast %424 : vector<16x72xf32> to vector<1x16x72xf32>
    %441 = vector.broadcast %440 : vector<1x16x72xf32> to vector<2x16x72xf32>
    %442 = vector.broadcast %388 : vector<2x1x72xf32> to vector<2x16x72xf32>
    %443 = arith.mulf %441, %442 : vector<2x16x72xf32>
    %444 = arith.addf %439, %443 : vector<2x16x72xf32>
    %445 = vector.extract_strided_slice %127 {offsets = [0, 22], sizes = [16, 1], strides = [1, 1]} : vector<16x48xf32> to vector<16x1xf32>
    %446 = vector.shape_cast %445 : vector<16x1xf32> to vector<16x1xf32>
    %447 = vector.broadcast %446 : vector<16x1xf32> to vector<16x72xf32>
    %448 = vector.extract_strided_slice %127 {offsets = [0, 23], sizes = [16, 1], strides = [1, 1]} : vector<16x48xf32> to vector<16x1xf32>
    %449 = vector.shape_cast %448 : vector<16x1xf32> to vector<16x1xf32>
    %450 = vector.broadcast %449 : vector<16x1xf32> to vector<16x72xf32>
    %451 = vector.shape_cast %447 : vector<16x72xf32> to vector<1x16x72xf32>
    %452 = vector.broadcast %451 : vector<1x16x72xf32> to vector<2x16x72xf32>
    %453 = vector.broadcast %388 : vector<2x1x72xf32> to vector<2x16x72xf32>
    %454 = arith.mulf %452, %453 : vector<2x16x72xf32>
    %455 = arith.addf %434, %454 : vector<2x16x72xf32>
    %456 = vector.shape_cast %450 : vector<16x72xf32> to vector<1x16x72xf32>
    %457 = vector.broadcast %456 : vector<1x16x72xf32> to vector<2x16x72xf32>
    %458 = vector.broadcast %392 : vector<2x1x72xf32> to vector<2x16x72xf32>
    %459 = arith.mulf %457, %458 : vector<2x16x72xf32>
    %460 = arith.addf %455, %459 : vector<2x16x72xf32>
    %461 = vector.shape_cast %447 : vector<16x72xf32> to vector<1x16x72xf32>
    %462 = vector.broadcast %461 : vector<1x16x72xf32> to vector<2x16x72xf32>
    %463 = vector.broadcast %392 : vector<2x1x72xf32> to vector<2x16x72xf32>
    %464 = arith.mulf %462, %463 : vector<2x16x72xf32>
    %465 = arith.addf %444, %464 : vector<2x16x72xf32>
    %466 = vector.shape_cast %450 : vector<16x72xf32> to vector<1x16x72xf32>
    %467 = vector.broadcast %466 : vector<1x16x72xf32> to vector<2x16x72xf32>
    %468 = vector.broadcast %389 : vector<2x1x72xf32> to vector<2x16x72xf32>
    %469 = arith.mulf %467, %468 : vector<2x16x72xf32>
    %470 = arith.addf %465, %469 : vector<2x16x72xf32>
    %471 = vector.extract_strided_slice %123 {offsets = [0, 4, 0], sizes = [2, 1, 72], strides = [1, 1, 1]} : vector<2x16x72xf32> to vector<2x1x72xf32>
    %472 = vector.extract_strided_slice %124 {offsets = [0, 4, 0], sizes = [2, 1, 72], strides = [1, 1, 1]} : vector<2x16x72xf32> to vector<2x1x72xf32>
    %473 = vector.extract_strided_slice %125 {offsets = [0, 4, 0], sizes = [2, 1, 72], strides = [1, 1, 1]} : vector<2x16x72xf32> to vector<2x1x72xf32>
    %474 = vector.extract_strided_slice %126 {offsets = [0, 4, 0], sizes = [2, 1, 72], strides = [1, 1, 1]} : vector<2x8x72xf32> to vector<2x1x72xf32>
    %475 = vector.extract_strided_slice %123 {offsets = [0, 12, 0], sizes = [2, 1, 72], strides = [1, 1, 1]} : vector<2x16x72xf32> to vector<2x1x72xf32>
    %476 = vector.extract_strided_slice %124 {offsets = [0, 12, 0], sizes = [2, 1, 72], strides = [1, 1, 1]} : vector<2x16x72xf32> to vector<2x1x72xf32>
    %477 = vector.extract_strided_slice %125 {offsets = [0, 12, 0], sizes = [2, 1, 72], strides = [1, 1, 1]} : vector<2x16x72xf32> to vector<2x1x72xf32>
    %478 = vector.extract_strided_slice %127 {offsets = [0, 24], sizes = [16, 1], strides = [1, 1]} : vector<16x48xf32> to vector<16x1xf32>
    %479 = vector.shape_cast %478 : vector<16x1xf32> to vector<16x1xf32>
    %480 = vector.broadcast %479 : vector<16x1xf32> to vector<16x72xf32>
    %481 = vector.extract_strided_slice %127 {offsets = [0, 25], sizes = [16, 1], strides = [1, 1]} : vector<16x48xf32> to vector<16x1xf32>
    %482 = vector.shape_cast %481 : vector<16x1xf32> to vector<16x1xf32>
    %483 = vector.broadcast %482 : vector<16x1xf32> to vector<16x72xf32>
    %484 = vector.shape_cast %480 : vector<16x72xf32> to vector<1x16x72xf32>
    %485 = vector.broadcast %484 : vector<1x16x72xf32> to vector<2x16x72xf32>
    %486 = vector.broadcast %471 : vector<2x1x72xf32> to vector<2x16x72xf32>
    %487 = arith.mulf %485, %486 : vector<2x16x72xf32>
    %488 = arith.addf %460, %487 : vector<2x16x72xf32>
    %489 = vector.shape_cast %483 : vector<16x72xf32> to vector<1x16x72xf32>
    %490 = vector.broadcast %489 : vector<1x16x72xf32> to vector<2x16x72xf32>
    %491 = vector.broadcast %475 : vector<2x1x72xf32> to vector<2x16x72xf32>
    %492 = arith.mulf %490, %491 : vector<2x16x72xf32>
    %493 = arith.addf %488, %492 : vector<2x16x72xf32>
    %494 = vector.shape_cast %480 : vector<16x72xf32> to vector<1x16x72xf32>
    %495 = vector.broadcast %494 : vector<1x16x72xf32> to vector<2x16x72xf32>
    %496 = vector.broadcast %475 : vector<2x1x72xf32> to vector<2x16x72xf32>
    %497 = arith.mulf %495, %496 : vector<2x16x72xf32>
    %498 = arith.addf %470, %497 : vector<2x16x72xf32>
    %499 = vector.shape_cast %483 : vector<16x72xf32> to vector<1x16x72xf32>
    %500 = vector.broadcast %499 : vector<1x16x72xf32> to vector<2x16x72xf32>
    %501 = vector.broadcast %472 : vector<2x1x72xf32> to vector<2x16x72xf32>
    %502 = arith.mulf %500, %501 : vector<2x16x72xf32>
    %503 = arith.addf %498, %502 : vector<2x16x72xf32>
    %504 = vector.extract_strided_slice %127 {offsets = [0, 26], sizes = [16, 1], strides = [1, 1]} : vector<16x48xf32> to vector<16x1xf32>
    %505 = vector.shape_cast %504 : vector<16x1xf32> to vector<16x1xf32>
    %506 = vector.broadcast %505 : vector<16x1xf32> to vector<16x72xf32>
    %507 = vector.extract_strided_slice %127 {offsets = [0, 27], sizes = [16, 1], strides = [1, 1]} : vector<16x48xf32> to vector<16x1xf32>
    %508 = vector.shape_cast %507 : vector<16x1xf32> to vector<16x1xf32>
    %509 = vector.broadcast %508 : vector<16x1xf32> to vector<16x72xf32>
    %510 = vector.shape_cast %506 : vector<16x72xf32> to vector<1x16x72xf32>
    %511 = vector.broadcast %510 : vector<1x16x72xf32> to vector<2x16x72xf32>
    %512 = vector.broadcast %472 : vector<2x1x72xf32> to vector<2x16x72xf32>
    %513 = arith.mulf %511, %512 : vector<2x16x72xf32>
    %514 = arith.addf %493, %513 : vector<2x16x72xf32>
    %515 = vector.shape_cast %509 : vector<16x72xf32> to vector<1x16x72xf32>
    %516 = vector.broadcast %515 : vector<1x16x72xf32> to vector<2x16x72xf32>
    %517 = vector.broadcast %476 : vector<2x1x72xf32> to vector<2x16x72xf32>
    %518 = arith.mulf %516, %517 : vector<2x16x72xf32>
    %519 = arith.addf %514, %518 : vector<2x16x72xf32>
    %520 = vector.shape_cast %506 : vector<16x72xf32> to vector<1x16x72xf32>
    %521 = vector.broadcast %520 : vector<1x16x72xf32> to vector<2x16x72xf32>
    %522 = vector.broadcast %476 : vector<2x1x72xf32> to vector<2x16x72xf32>
    %523 = arith.mulf %521, %522 : vector<2x16x72xf32>
    %524 = arith.addf %503, %523 : vector<2x16x72xf32>
    %525 = vector.shape_cast %509 : vector<16x72xf32> to vector<1x16x72xf32>
    %526 = vector.broadcast %525 : vector<1x16x72xf32> to vector<2x16x72xf32>
    %527 = vector.broadcast %473 : vector<2x1x72xf32> to vector<2x16x72xf32>
    %528 = arith.mulf %526, %527 : vector<2x16x72xf32>
    %529 = arith.addf %524, %528 : vector<2x16x72xf32>
    %530 = vector.extract_strided_slice %127 {offsets = [0, 28], sizes = [16, 1], strides = [1, 1]} : vector<16x48xf32> to vector<16x1xf32>
    %531 = vector.shape_cast %530 : vector<16x1xf32> to vector<16x1xf32>
    %532 = vector.broadcast %531 : vector<16x1xf32> to vector<16x72xf32>
    %533 = vector.extract_strided_slice %127 {offsets = [0, 29], sizes = [16, 1], strides = [1, 1]} : vector<16x48xf32> to vector<16x1xf32>
    %534 = vector.shape_cast %533 : vector<16x1xf32> to vector<16x1xf32>
    %535 = vector.broadcast %534 : vector<16x1xf32> to vector<16x72xf32>
    %536 = vector.shape_cast %532 : vector<16x72xf32> to vector<1x16x72xf32>
    %537 = vector.broadcast %536 : vector<1x16x72xf32> to vector<2x16x72xf32>
    %538 = vector.broadcast %473 : vector<2x1x72xf32> to vector<2x16x72xf32>
    %539 = arith.mulf %537, %538 : vector<2x16x72xf32>
    %540 = arith.addf %519, %539 : vector<2x16x72xf32>
    %541 = vector.shape_cast %535 : vector<16x72xf32> to vector<1x16x72xf32>
    %542 = vector.broadcast %541 : vector<1x16x72xf32> to vector<2x16x72xf32>
    %543 = vector.broadcast %477 : vector<2x1x72xf32> to vector<2x16x72xf32>
    %544 = arith.mulf %542, %543 : vector<2x16x72xf32>
    %545 = arith.addf %540, %544 : vector<2x16x72xf32>
    %546 = vector.shape_cast %532 : vector<16x72xf32> to vector<1x16x72xf32>
    %547 = vector.broadcast %546 : vector<1x16x72xf32> to vector<2x16x72xf32>
    %548 = vector.broadcast %477 : vector<2x1x72xf32> to vector<2x16x72xf32>
    %549 = arith.mulf %547, %548 : vector<2x16x72xf32>
    %550 = arith.addf %529, %549 : vector<2x16x72xf32>
    %551 = vector.shape_cast %535 : vector<16x72xf32> to vector<1x16x72xf32>
    %552 = vector.broadcast %551 : vector<1x16x72xf32> to vector<2x16x72xf32>
    %553 = vector.broadcast %474 : vector<2x1x72xf32> to vector<2x16x72xf32>
    %554 = arith.mulf %552, %553 : vector<2x16x72xf32>
    %555 = arith.addf %550, %554 : vector<2x16x72xf32>
    %556 = vector.extract_strided_slice %123 {offsets = [0, 5, 0], sizes = [2, 1, 72], strides = [1, 1, 1]} : vector<2x16x72xf32> to vector<2x1x72xf32>
    %557 = vector.extract_strided_slice %124 {offsets = [0, 5, 0], sizes = [2, 1, 72], strides = [1, 1, 1]} : vector<2x16x72xf32> to vector<2x1x72xf32>
    %558 = vector.extract_strided_slice %125 {offsets = [0, 5, 0], sizes = [2, 1, 72], strides = [1, 1, 1]} : vector<2x16x72xf32> to vector<2x1x72xf32>
    %559 = vector.extract_strided_slice %126 {offsets = [0, 5, 0], sizes = [2, 1, 72], strides = [1, 1, 1]} : vector<2x8x72xf32> to vector<2x1x72xf32>
    %560 = vector.extract_strided_slice %123 {offsets = [0, 13, 0], sizes = [2, 1, 72], strides = [1, 1, 1]} : vector<2x16x72xf32> to vector<2x1x72xf32>
    %561 = vector.extract_strided_slice %124 {offsets = [0, 13, 0], sizes = [2, 1, 72], strides = [1, 1, 1]} : vector<2x16x72xf32> to vector<2x1x72xf32>
    %562 = vector.extract_strided_slice %125 {offsets = [0, 13, 0], sizes = [2, 1, 72], strides = [1, 1, 1]} : vector<2x16x72xf32> to vector<2x1x72xf32>
    %563 = vector.extract_strided_slice %127 {offsets = [0, 30], sizes = [16, 1], strides = [1, 1]} : vector<16x48xf32> to vector<16x1xf32>
    %564 = vector.shape_cast %563 : vector<16x1xf32> to vector<16x1xf32>
    %565 = vector.broadcast %564 : vector<16x1xf32> to vector<16x72xf32>
    %566 = vector.extract_strided_slice %127 {offsets = [0, 31], sizes = [16, 1], strides = [1, 1]} : vector<16x48xf32> to vector<16x1xf32>
    %567 = vector.shape_cast %566 : vector<16x1xf32> to vector<16x1xf32>
    %568 = vector.broadcast %567 : vector<16x1xf32> to vector<16x72xf32>
    %569 = vector.shape_cast %565 : vector<16x72xf32> to vector<1x16x72xf32>
    %570 = vector.broadcast %569 : vector<1x16x72xf32> to vector<2x16x72xf32>
    %571 = vector.broadcast %556 : vector<2x1x72xf32> to vector<2x16x72xf32>
    %572 = arith.mulf %570, %571 : vector<2x16x72xf32>
    %573 = arith.addf %545, %572 : vector<2x16x72xf32>
    %574 = vector.shape_cast %568 : vector<16x72xf32> to vector<1x16x72xf32>
    %575 = vector.broadcast %574 : vector<1x16x72xf32> to vector<2x16x72xf32>
    %576 = vector.broadcast %560 : vector<2x1x72xf32> to vector<2x16x72xf32>
    %577 = arith.mulf %575, %576 : vector<2x16x72xf32>
    %578 = arith.addf %573, %577 : vector<2x16x72xf32>
    %579 = vector.shape_cast %565 : vector<16x72xf32> to vector<1x16x72xf32>
    %580 = vector.broadcast %579 : vector<1x16x72xf32> to vector<2x16x72xf32>
    %581 = vector.broadcast %560 : vector<2x1x72xf32> to vector<2x16x72xf32>
    %582 = arith.mulf %580, %581 : vector<2x16x72xf32>
    %583 = arith.addf %555, %582 : vector<2x16x72xf32>
    %584 = vector.shape_cast %568 : vector<16x72xf32> to vector<1x16x72xf32>
    %585 = vector.broadcast %584 : vector<1x16x72xf32> to vector<2x16x72xf32>
    %586 = vector.broadcast %557 : vector<2x1x72xf32> to vector<2x16x72xf32>
    %587 = arith.mulf %585, %586 : vector<2x16x72xf32>
    %588 = arith.addf %583, %587 : vector<2x16x72xf32>
    %589 = vector.extract_strided_slice %127 {offsets = [0, 32], sizes = [16, 1], strides = [1, 1]} : vector<16x48xf32> to vector<16x1xf32>
    %590 = vector.shape_cast %589 : vector<16x1xf32> to vector<16x1xf32>
    %591 = vector.broadcast %590 : vector<16x1xf32> to vector<16x72xf32>
    %592 = vector.extract_strided_slice %127 {offsets = [0, 33], sizes = [16, 1], strides = [1, 1]} : vector<16x48xf32> to vector<16x1xf32>
    %593 = vector.shape_cast %592 : vector<16x1xf32> to vector<16x1xf32>
    %594 = vector.broadcast %593 : vector<16x1xf32> to vector<16x72xf32>
    %595 = vector.shape_cast %591 : vector<16x72xf32> to vector<1x16x72xf32>
    %596 = vector.broadcast %595 : vector<1x16x72xf32> to vector<2x16x72xf32>
    %597 = vector.broadcast %557 : vector<2x1x72xf32> to vector<2x16x72xf32>
    %598 = arith.mulf %596, %597 : vector<2x16x72xf32>
    %599 = arith.addf %578, %598 : vector<2x16x72xf32>
    %600 = vector.shape_cast %594 : vector<16x72xf32> to vector<1x16x72xf32>
    %601 = vector.broadcast %600 : vector<1x16x72xf32> to vector<2x16x72xf32>
    %602 = vector.broadcast %561 : vector<2x1x72xf32> to vector<2x16x72xf32>
    %603 = arith.mulf %601, %602 : vector<2x16x72xf32>
    %604 = arith.addf %599, %603 : vector<2x16x72xf32>
    %605 = vector.shape_cast %591 : vector<16x72xf32> to vector<1x16x72xf32>
    %606 = vector.broadcast %605 : vector<1x16x72xf32> to vector<2x16x72xf32>
    %607 = vector.broadcast %561 : vector<2x1x72xf32> to vector<2x16x72xf32>
    %608 = arith.mulf %606, %607 : vector<2x16x72xf32>
    %609 = arith.addf %588, %608 : vector<2x16x72xf32>
    %610 = vector.shape_cast %594 : vector<16x72xf32> to vector<1x16x72xf32>
    %611 = vector.broadcast %610 : vector<1x16x72xf32> to vector<2x16x72xf32>
    %612 = vector.broadcast %558 : vector<2x1x72xf32> to vector<2x16x72xf32>
    %613 = arith.mulf %611, %612 : vector<2x16x72xf32>
    %614 = arith.addf %609, %613 : vector<2x16x72xf32>
    %615 = vector.extract_strided_slice %127 {offsets = [0, 34], sizes = [16, 1], strides = [1, 1]} : vector<16x48xf32> to vector<16x1xf32>
    %616 = vector.shape_cast %615 : vector<16x1xf32> to vector<16x1xf32>
    %617 = vector.broadcast %616 : vector<16x1xf32> to vector<16x72xf32>
    %618 = vector.extract_strided_slice %127 {offsets = [0, 35], sizes = [16, 1], strides = [1, 1]} : vector<16x48xf32> to vector<16x1xf32>
    %619 = vector.shape_cast %618 : vector<16x1xf32> to vector<16x1xf32>
    %620 = vector.broadcast %619 : vector<16x1xf32> to vector<16x72xf32>
    %621 = vector.shape_cast %617 : vector<16x72xf32> to vector<1x16x72xf32>
    %622 = vector.broadcast %621 : vector<1x16x72xf32> to vector<2x16x72xf32>
    %623 = vector.broadcast %558 : vector<2x1x72xf32> to vector<2x16x72xf32>
    %624 = arith.mulf %622, %623 : vector<2x16x72xf32>
    %625 = arith.addf %604, %624 : vector<2x16x72xf32>
    %626 = vector.shape_cast %620 : vector<16x72xf32> to vector<1x16x72xf32>
    %627 = vector.broadcast %626 : vector<1x16x72xf32> to vector<2x16x72xf32>
    %628 = vector.broadcast %562 : vector<2x1x72xf32> to vector<2x16x72xf32>
    %629 = arith.mulf %627, %628 : vector<2x16x72xf32>
    %630 = arith.addf %625, %629 : vector<2x16x72xf32>
    %631 = vector.shape_cast %617 : vector<16x72xf32> to vector<1x16x72xf32>
    %632 = vector.broadcast %631 : vector<1x16x72xf32> to vector<2x16x72xf32>
    %633 = vector.broadcast %562 : vector<2x1x72xf32> to vector<2x16x72xf32>
    %634 = arith.mulf %632, %633 : vector<2x16x72xf32>
    %635 = arith.addf %614, %634 : vector<2x16x72xf32>
    %636 = vector.shape_cast %620 : vector<16x72xf32> to vector<1x16x72xf32>
    %637 = vector.broadcast %636 : vector<1x16x72xf32> to vector<2x16x72xf32>
    %638 = vector.broadcast %559 : vector<2x1x72xf32> to vector<2x16x72xf32>
    %639 = arith.mulf %637, %638 : vector<2x16x72xf32>
    %640 = arith.addf %635, %639 : vector<2x16x72xf32>
    %641 = vector.extract_strided_slice %123 {offsets = [0, 6, 0], sizes = [2, 1, 72], strides = [1, 1, 1]} : vector<2x16x72xf32> to vector<2x1x72xf32>
    %642 = vector.extract_strided_slice %124 {offsets = [0, 6, 0], sizes = [2, 1, 72], strides = [1, 1, 1]} : vector<2x16x72xf32> to vector<2x1x72xf32>
    %643 = vector.extract_strided_slice %125 {offsets = [0, 6, 0], sizes = [2, 1, 72], strides = [1, 1, 1]} : vector<2x16x72xf32> to vector<2x1x72xf32>
    %644 = vector.extract_strided_slice %126 {offsets = [0, 6, 0], sizes = [2, 1, 72], strides = [1, 1, 1]} : vector<2x8x72xf32> to vector<2x1x72xf32>
    %645 = vector.extract_strided_slice %123 {offsets = [0, 14, 0], sizes = [2, 1, 72], strides = [1, 1, 1]} : vector<2x16x72xf32> to vector<2x1x72xf32>
    %646 = vector.extract_strided_slice %124 {offsets = [0, 14, 0], sizes = [2, 1, 72], strides = [1, 1, 1]} : vector<2x16x72xf32> to vector<2x1x72xf32>
    %647 = vector.extract_strided_slice %125 {offsets = [0, 14, 0], sizes = [2, 1, 72], strides = [1, 1, 1]} : vector<2x16x72xf32> to vector<2x1x72xf32>
    %648 = vector.extract_strided_slice %127 {offsets = [0, 36], sizes = [16, 1], strides = [1, 1]} : vector<16x48xf32> to vector<16x1xf32>
    %649 = vector.shape_cast %648 : vector<16x1xf32> to vector<16x1xf32>
    %650 = vector.broadcast %649 : vector<16x1xf32> to vector<16x72xf32>
    %651 = vector.extract_strided_slice %127 {offsets = [0, 37], sizes = [16, 1], strides = [1, 1]} : vector<16x48xf32> to vector<16x1xf32>
    %652 = vector.shape_cast %651 : vector<16x1xf32> to vector<16x1xf32>
    %653 = vector.broadcast %652 : vector<16x1xf32> to vector<16x72xf32>
    %654 = vector.shape_cast %650 : vector<16x72xf32> to vector<1x16x72xf32>
    %655 = vector.broadcast %654 : vector<1x16x72xf32> to vector<2x16x72xf32>
    %656 = vector.broadcast %641 : vector<2x1x72xf32> to vector<2x16x72xf32>
    %657 = arith.mulf %655, %656 : vector<2x16x72xf32>
    %658 = arith.addf %630, %657 : vector<2x16x72xf32>
    %659 = vector.shape_cast %653 : vector<16x72xf32> to vector<1x16x72xf32>
    %660 = vector.broadcast %659 : vector<1x16x72xf32> to vector<2x16x72xf32>
    %661 = vector.broadcast %645 : vector<2x1x72xf32> to vector<2x16x72xf32>
    %662 = arith.mulf %660, %661 : vector<2x16x72xf32>
    %663 = arith.addf %658, %662 : vector<2x16x72xf32>
    %664 = vector.shape_cast %650 : vector<16x72xf32> to vector<1x16x72xf32>
    %665 = vector.broadcast %664 : vector<1x16x72xf32> to vector<2x16x72xf32>
    %666 = vector.broadcast %645 : vector<2x1x72xf32> to vector<2x16x72xf32>
    %667 = arith.mulf %665, %666 : vector<2x16x72xf32>
    %668 = arith.addf %640, %667 : vector<2x16x72xf32>
    %669 = vector.shape_cast %653 : vector<16x72xf32> to vector<1x16x72xf32>
    %670 = vector.broadcast %669 : vector<1x16x72xf32> to vector<2x16x72xf32>
    %671 = vector.broadcast %642 : vector<2x1x72xf32> to vector<2x16x72xf32>
    %672 = arith.mulf %670, %671 : vector<2x16x72xf32>
    %673 = arith.addf %668, %672 : vector<2x16x72xf32>
    %674 = vector.extract_strided_slice %127 {offsets = [0, 38], sizes = [16, 1], strides = [1, 1]} : vector<16x48xf32> to vector<16x1xf32>
    %675 = vector.shape_cast %674 : vector<16x1xf32> to vector<16x1xf32>
    %676 = vector.broadcast %675 : vector<16x1xf32> to vector<16x72xf32>
    %677 = vector.extract_strided_slice %127 {offsets = [0, 39], sizes = [16, 1], strides = [1, 1]} : vector<16x48xf32> to vector<16x1xf32>
    %678 = vector.shape_cast %677 : vector<16x1xf32> to vector<16x1xf32>
    %679 = vector.broadcast %678 : vector<16x1xf32> to vector<16x72xf32>
    %680 = vector.shape_cast %676 : vector<16x72xf32> to vector<1x16x72xf32>
    %681 = vector.broadcast %680 : vector<1x16x72xf32> to vector<2x16x72xf32>
    %682 = vector.broadcast %642 : vector<2x1x72xf32> to vector<2x16x72xf32>
    %683 = arith.mulf %681, %682 : vector<2x16x72xf32>
    %684 = arith.addf %663, %683 : vector<2x16x72xf32>
    %685 = vector.shape_cast %679 : vector<16x72xf32> to vector<1x16x72xf32>
    %686 = vector.broadcast %685 : vector<1x16x72xf32> to vector<2x16x72xf32>
    %687 = vector.broadcast %646 : vector<2x1x72xf32> to vector<2x16x72xf32>
    %688 = arith.mulf %686, %687 : vector<2x16x72xf32>
    %689 = arith.addf %684, %688 : vector<2x16x72xf32>
    %690 = vector.shape_cast %676 : vector<16x72xf32> to vector<1x16x72xf32>
    %691 = vector.broadcast %690 : vector<1x16x72xf32> to vector<2x16x72xf32>
    %692 = vector.broadcast %646 : vector<2x1x72xf32> to vector<2x16x72xf32>
    %693 = arith.mulf %691, %692 : vector<2x16x72xf32>
    %694 = arith.addf %673, %693 : vector<2x16x72xf32>
    %695 = vector.shape_cast %679 : vector<16x72xf32> to vector<1x16x72xf32>
    %696 = vector.broadcast %695 : vector<1x16x72xf32> to vector<2x16x72xf32>
    %697 = vector.broadcast %643 : vector<2x1x72xf32> to vector<2x16x72xf32>
    %698 = arith.mulf %696, %697 : vector<2x16x72xf32>
    %699 = arith.addf %694, %698 : vector<2x16x72xf32>
    %700 = vector.extract_strided_slice %127 {offsets = [0, 40], sizes = [16, 1], strides = [1, 1]} : vector<16x48xf32> to vector<16x1xf32>
    %701 = vector.shape_cast %700 : vector<16x1xf32> to vector<16x1xf32>
    %702 = vector.broadcast %701 : vector<16x1xf32> to vector<16x72xf32>
    %703 = vector.extract_strided_slice %127 {offsets = [0, 41], sizes = [16, 1], strides = [1, 1]} : vector<16x48xf32> to vector<16x1xf32>
    %704 = vector.shape_cast %703 : vector<16x1xf32> to vector<16x1xf32>
    %705 = vector.broadcast %704 : vector<16x1xf32> to vector<16x72xf32>
    %706 = vector.shape_cast %702 : vector<16x72xf32> to vector<1x16x72xf32>
    %707 = vector.broadcast %706 : vector<1x16x72xf32> to vector<2x16x72xf32>
    %708 = vector.broadcast %643 : vector<2x1x72xf32> to vector<2x16x72xf32>
    %709 = arith.mulf %707, %708 : vector<2x16x72xf32>
    %710 = arith.addf %689, %709 : vector<2x16x72xf32>
    %711 = vector.shape_cast %705 : vector<16x72xf32> to vector<1x16x72xf32>
    %712 = vector.broadcast %711 : vector<1x16x72xf32> to vector<2x16x72xf32>
    %713 = vector.broadcast %647 : vector<2x1x72xf32> to vector<2x16x72xf32>
    %714 = arith.mulf %712, %713 : vector<2x16x72xf32>
    %715 = arith.addf %710, %714 : vector<2x16x72xf32>
    %716 = vector.shape_cast %702 : vector<16x72xf32> to vector<1x16x72xf32>
    %717 = vector.broadcast %716 : vector<1x16x72xf32> to vector<2x16x72xf32>
    %718 = vector.broadcast %647 : vector<2x1x72xf32> to vector<2x16x72xf32>
    %719 = arith.mulf %717, %718 : vector<2x16x72xf32>
    %720 = arith.addf %699, %719 : vector<2x16x72xf32>
    %721 = vector.shape_cast %705 : vector<16x72xf32> to vector<1x16x72xf32>
    %722 = vector.broadcast %721 : vector<1x16x72xf32> to vector<2x16x72xf32>
    %723 = vector.broadcast %644 : vector<2x1x72xf32> to vector<2x16x72xf32>
    %724 = arith.mulf %722, %723 : vector<2x16x72xf32>
    %725 = arith.addf %720, %724 : vector<2x16x72xf32>
    %726 = vector.extract_strided_slice %123 {offsets = [0, 7, 0], sizes = [2, 1, 72], strides = [1, 1, 1]} : vector<2x16x72xf32> to vector<2x1x72xf32>
    %727 = vector.extract_strided_slice %124 {offsets = [0, 7, 0], sizes = [2, 1, 72], strides = [1, 1, 1]} : vector<2x16x72xf32> to vector<2x1x72xf32>
    %728 = vector.extract_strided_slice %125 {offsets = [0, 7, 0], sizes = [2, 1, 72], strides = [1, 1, 1]} : vector<2x16x72xf32> to vector<2x1x72xf32>
    %729 = vector.extract_strided_slice %126 {offsets = [0, 7, 0], sizes = [2, 1, 72], strides = [1, 1, 1]} : vector<2x8x72xf32> to vector<2x1x72xf32>
    %730 = vector.extract_strided_slice %123 {offsets = [0, 15, 0], sizes = [2, 1, 72], strides = [1, 1, 1]} : vector<2x16x72xf32> to vector<2x1x72xf32>
    %731 = vector.extract_strided_slice %124 {offsets = [0, 15, 0], sizes = [2, 1, 72], strides = [1, 1, 1]} : vector<2x16x72xf32> to vector<2x1x72xf32>
    %732 = vector.extract_strided_slice %125 {offsets = [0, 15, 0], sizes = [2, 1, 72], strides = [1, 1, 1]} : vector<2x16x72xf32> to vector<2x1x72xf32>
    %733 = vector.extract_strided_slice %127 {offsets = [0, 42], sizes = [16, 1], strides = [1, 1]} : vector<16x48xf32> to vector<16x1xf32>
    %734 = vector.shape_cast %733 : vector<16x1xf32> to vector<16x1xf32>
    %735 = vector.broadcast %734 : vector<16x1xf32> to vector<16x72xf32>
    %736 = vector.extract_strided_slice %127 {offsets = [0, 43], sizes = [16, 1], strides = [1, 1]} : vector<16x48xf32> to vector<16x1xf32>
    %737 = vector.shape_cast %736 : vector<16x1xf32> to vector<16x1xf32>
    %738 = vector.broadcast %737 : vector<16x1xf32> to vector<16x72xf32>
    %739 = vector.shape_cast %735 : vector<16x72xf32> to vector<1x16x72xf32>
    %740 = vector.broadcast %739 : vector<1x16x72xf32> to vector<2x16x72xf32>
    %741 = vector.broadcast %726 : vector<2x1x72xf32> to vector<2x16x72xf32>
    %742 = arith.mulf %740, %741 : vector<2x16x72xf32>
    %743 = arith.addf %715, %742 : vector<2x16x72xf32>
    %744 = vector.shape_cast %738 : vector<16x72xf32> to vector<1x16x72xf32>
    %745 = vector.broadcast %744 : vector<1x16x72xf32> to vector<2x16x72xf32>
    %746 = vector.broadcast %730 : vector<2x1x72xf32> to vector<2x16x72xf32>
    %747 = arith.mulf %745, %746 : vector<2x16x72xf32>
    %748 = arith.addf %743, %747 : vector<2x16x72xf32>
    %749 = vector.shape_cast %735 : vector<16x72xf32> to vector<1x16x72xf32>
    %750 = vector.broadcast %749 : vector<1x16x72xf32> to vector<2x16x72xf32>
    %751 = vector.broadcast %730 : vector<2x1x72xf32> to vector<2x16x72xf32>
    %752 = arith.mulf %750, %751 : vector<2x16x72xf32>
    %753 = arith.addf %725, %752 : vector<2x16x72xf32>
    %754 = vector.shape_cast %738 : vector<16x72xf32> to vector<1x16x72xf32>
    %755 = vector.broadcast %754 : vector<1x16x72xf32> to vector<2x16x72xf32>
    %756 = vector.broadcast %727 : vector<2x1x72xf32> to vector<2x16x72xf32>
    %757 = arith.mulf %755, %756 : vector<2x16x72xf32>
    %758 = arith.addf %753, %757 : vector<2x16x72xf32>
    %759 = vector.extract_strided_slice %127 {offsets = [0, 44], sizes = [16, 1], strides = [1, 1]} : vector<16x48xf32> to vector<16x1xf32>
    %760 = vector.shape_cast %759 : vector<16x1xf32> to vector<16x1xf32>
    %761 = vector.broadcast %760 : vector<16x1xf32> to vector<16x72xf32>
    %762 = vector.extract_strided_slice %127 {offsets = [0, 45], sizes = [16, 1], strides = [1, 1]} : vector<16x48xf32> to vector<16x1xf32>
    %763 = vector.shape_cast %762 : vector<16x1xf32> to vector<16x1xf32>
    %764 = vector.broadcast %763 : vector<16x1xf32> to vector<16x72xf32>
    %765 = vector.shape_cast %761 : vector<16x72xf32> to vector<1x16x72xf32>
    %766 = vector.broadcast %765 : vector<1x16x72xf32> to vector<2x16x72xf32>
    %767 = vector.broadcast %727 : vector<2x1x72xf32> to vector<2x16x72xf32>
    %768 = arith.mulf %766, %767 : vector<2x16x72xf32>
    %769 = arith.addf %748, %768 : vector<2x16x72xf32>
    %770 = vector.shape_cast %764 : vector<16x72xf32> to vector<1x16x72xf32>
    %771 = vector.broadcast %770 : vector<1x16x72xf32> to vector<2x16x72xf32>
    %772 = vector.broadcast %731 : vector<2x1x72xf32> to vector<2x16x72xf32>
    %773 = arith.mulf %771, %772 : vector<2x16x72xf32>
    %774 = arith.addf %769, %773 : vector<2x16x72xf32>
    %775 = vector.shape_cast %761 : vector<16x72xf32> to vector<1x16x72xf32>
    %776 = vector.broadcast %775 : vector<1x16x72xf32> to vector<2x16x72xf32>
    %777 = vector.broadcast %731 : vector<2x1x72xf32> to vector<2x16x72xf32>
    %778 = arith.mulf %776, %777 : vector<2x16x72xf32>
    %779 = arith.addf %758, %778 : vector<2x16x72xf32>
    %780 = vector.shape_cast %764 : vector<16x72xf32> to vector<1x16x72xf32>
    %781 = vector.broadcast %780 : vector<1x16x72xf32> to vector<2x16x72xf32>
    %782 = vector.broadcast %728 : vector<2x1x72xf32> to vector<2x16x72xf32>
    %783 = arith.mulf %781, %782 : vector<2x16x72xf32>
    %784 = arith.addf %779, %783 : vector<2x16x72xf32>
    %785 = vector.extract_strided_slice %127 {offsets = [0, 46], sizes = [16, 1], strides = [1, 1]} : vector<16x48xf32> to vector<16x1xf32>
    %786 = vector.shape_cast %785 : vector<16x1xf32> to vector<16x1xf32>
    %787 = vector.broadcast %786 : vector<16x1xf32> to vector<16x72xf32>
    %788 = vector.extract_strided_slice %127 {offsets = [0, 47], sizes = [16, 1], strides = [1, 1]} : vector<16x48xf32> to vector<16x1xf32>
    %789 = vector.shape_cast %788 : vector<16x1xf32> to vector<16x1xf32>
    %790 = vector.broadcast %789 : vector<16x1xf32> to vector<16x72xf32>
    %791 = vector.shape_cast %787 : vector<16x72xf32> to vector<1x16x72xf32>
    %792 = vector.broadcast %791 : vector<1x16x72xf32> to vector<2x16x72xf32>
    %793 = vector.broadcast %728 : vector<2x1x72xf32> to vector<2x16x72xf32>
    %794 = arith.mulf %792, %793 : vector<2x16x72xf32>
    %795 = arith.addf %774, %794 : vector<2x16x72xf32>
    %796 = vector.shape_cast %790 : vector<16x72xf32> to vector<1x16x72xf32>
    %797 = vector.broadcast %796 : vector<1x16x72xf32> to vector<2x16x72xf32>
    %798 = vector.broadcast %732 : vector<2x1x72xf32> to vector<2x16x72xf32>
    %799 = arith.mulf %797, %798 : vector<2x16x72xf32>
    %800 = arith.addf %795, %799 : vector<2x16x72xf32>
    %801 = vector.shape_cast %787 : vector<16x72xf32> to vector<1x16x72xf32>
    %802 = vector.broadcast %801 : vector<1x16x72xf32> to vector<2x16x72xf32>
    %803 = vector.broadcast %732 : vector<2x1x72xf32> to vector<2x16x72xf32>
    %804 = arith.mulf %802, %803 : vector<2x16x72xf32>
    %805 = arith.addf %784, %804 : vector<2x16x72xf32>
    %806 = vector.shape_cast %790 : vector<16x72xf32> to vector<1x16x72xf32>
    %807 = vector.broadcast %806 : vector<1x16x72xf32> to vector<2x16x72xf32>
    %808 = vector.broadcast %729 : vector<2x1x72xf32> to vector<2x16x72xf32>
    %809 = arith.mulf %807, %808 : vector<2x16x72xf32>
    %810 = arith.addf %805, %809 : vector<2x16x72xf32>
    %811 = arith.maximumf %800, %810 : vector<2x16x72xf32>
    %cst_42 = arith.constant 0.000000e+00 : f32
    %812 = vector.broadcast %cst_42 : f32 to vector<2x16x72xf32>
    %813 = arith.maximumf %811, %812 : vector<2x16x72xf32>
    tpu.wait_dma2 semaphore(%arg7 : memref<!tpu.dma_semaphore, #tpu.memory_space<semaphore_mem>>) src(%arg3 : memref<16x72x81xf32, #tpu.memory_space<any>>) dst(%arg6 : memref<16x72x81xf32, #tpu.memory_space<vmem>>)
    %c112 = arith.constant 112 : index
    %c0_43 = arith.constant 0 : index
    %814 = vector.load %arg2[%c112, %c0_43] : memref<120x128xf32, #tpu.memory_space<vmem>>, vector<1x81xf32>
    %815 = vector.shape_cast %814 : vector<1x81xf32> to vector<1x81xf32>
    %816 = vector.broadcast %815 : vector<1x81xf32> to vector<2x81xf32>
    %817 = vector.extract_strided_slice %813 {offsets = [0, 0, 0], sizes = [2, 1, 72], strides = [1, 1, 1]} : vector<2x16x72xf32> to vector<2x1x72xf32>
    %818 = vector.shape_cast %817 : vector<2x1x72xf32> to vector<2x72xf32>
    %c0_44 = arith.constant 0 : index
    %c0_45 = arith.constant 0 : index
    %c0_46 = arith.constant 0 : index
    %819 = vector.load %arg6[%c0_44, %c0_45, %c0_46] : memref<16x72x81xf32, #tpu.memory_space<vmem>>, vector<1x72x81xf32>
    %820 = vector.shape_cast %819 : vector<1x72x81xf32> to vector<72x81xf32>
    %cst_47 = arith.constant dense<0.000000e+00> : vector<2x81xf32>
    %821 = tpu.matmul %818, %820, %cst_47 {dimension_numbers = #tpu.dot_dimension_numbers<[1], [0], [0], [1], [0, 0, 1, 1], [], []>} : vector<2x72xf32>, vector<72x81xf32>, vector<2x81xf32> -> vector<2x81xf32>
    %822 = arith.addf %816, %821 : vector<2x81xf32>
    %823 = vector.extract_strided_slice %813 {offsets = [0, 1, 0], sizes = [2, 1, 72], strides = [1, 1, 1]} : vector<2x16x72xf32> to vector<2x1x72xf32>
    %824 = vector.shape_cast %823 : vector<2x1x72xf32> to vector<2x72xf32>
    %c1_48 = arith.constant 1 : index
    %c0_49 = arith.constant 0 : index
    %c0_50 = arith.constant 0 : index
    %825 = vector.load %arg6[%c1_48, %c0_49, %c0_50] : memref<16x72x81xf32, #tpu.memory_space<vmem>>, vector<1x72x81xf32>
    %826 = vector.shape_cast %825 : vector<1x72x81xf32> to vector<72x81xf32>
    %cst_51 = arith.constant dense<0.000000e+00> : vector<2x81xf32>
    %827 = tpu.matmul %824, %826, %cst_51 {dimension_numbers = #tpu.dot_dimension_numbers<[1], [0], [0], [1], [0, 0, 1, 1], [], []>} : vector<2x72xf32>, vector<72x81xf32>, vector<2x81xf32> -> vector<2x81xf32>
    %828 = arith.addf %822, %827 : vector<2x81xf32>
    %829 = vector.extract_strided_slice %813 {offsets = [0, 2, 0], sizes = [2, 1, 72], strides = [1, 1, 1]} : vector<2x16x72xf32> to vector<2x1x72xf32>
    %830 = vector.shape_cast %829 : vector<2x1x72xf32> to vector<2x72xf32>
    %c2_52 = arith.constant 2 : index
    %c0_53 = arith.constant 0 : index
    %c0_54 = arith.constant 0 : index
    %831 = vector.load %arg6[%c2_52, %c0_53, %c0_54] : memref<16x72x81xf32, #tpu.memory_space<vmem>>, vector<1x72x81xf32>
    %832 = vector.shape_cast %831 : vector<1x72x81xf32> to vector<72x81xf32>
    %cst_55 = arith.constant dense<0.000000e+00> : vector<2x81xf32>
    %833 = tpu.matmul %830, %832, %cst_55 {dimension_numbers = #tpu.dot_dimension_numbers<[1], [0], [0], [1], [0, 0, 1, 1], [], []>} : vector<2x72xf32>, vector<72x81xf32>, vector<2x81xf32> -> vector<2x81xf32>
    %834 = arith.addf %828, %833 : vector<2x81xf32>
    %835 = vector.extract_strided_slice %813 {offsets = [0, 3, 0], sizes = [2, 1, 72], strides = [1, 1, 1]} : vector<2x16x72xf32> to vector<2x1x72xf32>
    %836 = vector.shape_cast %835 : vector<2x1x72xf32> to vector<2x72xf32>
    %c3_56 = arith.constant 3 : index
    %c0_57 = arith.constant 0 : index
    %c0_58 = arith.constant 0 : index
    %837 = vector.load %arg6[%c3_56, %c0_57, %c0_58] : memref<16x72x81xf32, #tpu.memory_space<vmem>>, vector<1x72x81xf32>
    %838 = vector.shape_cast %837 : vector<1x72x81xf32> to vector<72x81xf32>
    %cst_59 = arith.constant dense<0.000000e+00> : vector<2x81xf32>
    %839 = tpu.matmul %836, %838, %cst_59 {dimension_numbers = #tpu.dot_dimension_numbers<[1], [0], [0], [1], [0, 0, 1, 1], [], []>} : vector<2x72xf32>, vector<72x81xf32>, vector<2x81xf32> -> vector<2x81xf32>
    %840 = arith.addf %834, %839 : vector<2x81xf32>
    %841 = vector.extract_strided_slice %813 {offsets = [0, 4, 0], sizes = [2, 1, 72], strides = [1, 1, 1]} : vector<2x16x72xf32> to vector<2x1x72xf32>
    %842 = vector.shape_cast %841 : vector<2x1x72xf32> to vector<2x72xf32>
    %c4_60 = arith.constant 4 : index
    %c0_61 = arith.constant 0 : index
    %c0_62 = arith.constant 0 : index
    %843 = vector.load %arg6[%c4_60, %c0_61, %c0_62] : memref<16x72x81xf32, #tpu.memory_space<vmem>>, vector<1x72x81xf32>
    %844 = vector.shape_cast %843 : vector<1x72x81xf32> to vector<72x81xf32>
    %cst_63 = arith.constant dense<0.000000e+00> : vector<2x81xf32>
    %845 = tpu.matmul %842, %844, %cst_63 {dimension_numbers = #tpu.dot_dimension_numbers<[1], [0], [0], [1], [0, 0, 1, 1], [], []>} : vector<2x72xf32>, vector<72x81xf32>, vector<2x81xf32> -> vector<2x81xf32>
    %846 = arith.addf %840, %845 : vector<2x81xf32>
    %847 = vector.extract_strided_slice %813 {offsets = [0, 5, 0], sizes = [2, 1, 72], strides = [1, 1, 1]} : vector<2x16x72xf32> to vector<2x1x72xf32>
    %848 = vector.shape_cast %847 : vector<2x1x72xf32> to vector<2x72xf32>
    %c5 = arith.constant 5 : index
    %c0_64 = arith.constant 0 : index
    %c0_65 = arith.constant 0 : index
    %849 = vector.load %arg6[%c5, %c0_64, %c0_65] : memref<16x72x81xf32, #tpu.memory_space<vmem>>, vector<1x72x81xf32>
    %850 = vector.shape_cast %849 : vector<1x72x81xf32> to vector<72x81xf32>
    %cst_66 = arith.constant dense<0.000000e+00> : vector<2x81xf32>
    %851 = tpu.matmul %848, %850, %cst_66 {dimension_numbers = #tpu.dot_dimension_numbers<[1], [0], [0], [1], [0, 0, 1, 1], [], []>} : vector<2x72xf32>, vector<72x81xf32>, vector<2x81xf32> -> vector<2x81xf32>
    %852 = arith.addf %846, %851 : vector<2x81xf32>
    %853 = vector.extract_strided_slice %813 {offsets = [0, 6, 0], sizes = [2, 1, 72], strides = [1, 1, 1]} : vector<2x16x72xf32> to vector<2x1x72xf32>
    %854 = vector.shape_cast %853 : vector<2x1x72xf32> to vector<2x72xf32>
    %c6 = arith.constant 6 : index
    %c0_67 = arith.constant 0 : index
    %c0_68 = arith.constant 0 : index
    %855 = vector.load %arg6[%c6, %c0_67, %c0_68] : memref<16x72x81xf32, #tpu.memory_space<vmem>>, vector<1x72x81xf32>
    %856 = vector.shape_cast %855 : vector<1x72x81xf32> to vector<72x81xf32>
    %cst_69 = arith.constant dense<0.000000e+00> : vector<2x81xf32>
    %857 = tpu.matmul %854, %856, %cst_69 {dimension_numbers = #tpu.dot_dimension_numbers<[1], [0], [0], [1], [0, 0, 1, 1], [], []>} : vector<2x72xf32>, vector<72x81xf32>, vector<2x81xf32> -> vector<2x81xf32>
    %858 = arith.addf %852, %857 : vector<2x81xf32>
    %859 = vector.extract_strided_slice %813 {offsets = [0, 7, 0], sizes = [2, 1, 72], strides = [1, 1, 1]} : vector<2x16x72xf32> to vector<2x1x72xf32>
    %860 = vector.shape_cast %859 : vector<2x1x72xf32> to vector<2x72xf32>
    %c7 = arith.constant 7 : index
    %c0_70 = arith.constant 0 : index
    %c0_71 = arith.constant 0 : index
    %861 = vector.load %arg6[%c7, %c0_70, %c0_71] : memref<16x72x81xf32, #tpu.memory_space<vmem>>, vector<1x72x81xf32>
    %862 = vector.shape_cast %861 : vector<1x72x81xf32> to vector<72x81xf32>
    %cst_72 = arith.constant dense<0.000000e+00> : vector<2x81xf32>
    %863 = tpu.matmul %860, %862, %cst_72 {dimension_numbers = #tpu.dot_dimension_numbers<[1], [0], [0], [1], [0, 0, 1, 1], [], []>} : vector<2x72xf32>, vector<72x81xf32>, vector<2x81xf32> -> vector<2x81xf32>
    %864 = arith.addf %858, %863 : vector<2x81xf32>
    %865 = vector.extract_strided_slice %813 {offsets = [0, 8, 0], sizes = [2, 1, 72], strides = [1, 1, 1]} : vector<2x16x72xf32> to vector<2x1x72xf32>
    %866 = vector.shape_cast %865 : vector<2x1x72xf32> to vector<2x72xf32>
    %c8_73 = arith.constant 8 : index
    %c0_74 = arith.constant 0 : index
    %c0_75 = arith.constant 0 : index
    %867 = vector.load %arg6[%c8_73, %c0_74, %c0_75] : memref<16x72x81xf32, #tpu.memory_space<vmem>>, vector<1x72x81xf32>
    %868 = vector.shape_cast %867 : vector<1x72x81xf32> to vector<72x81xf32>
    %cst_76 = arith.constant dense<0.000000e+00> : vector<2x81xf32>
    %869 = tpu.matmul %866, %868, %cst_76 {dimension_numbers = #tpu.dot_dimension_numbers<[1], [0], [0], [1], [0, 0, 1, 1], [], []>} : vector<2x72xf32>, vector<72x81xf32>, vector<2x81xf32> -> vector<2x81xf32>
    %870 = arith.addf %864, %869 : vector<2x81xf32>
    %871 = vector.extract_strided_slice %813 {offsets = [0, 9, 0], sizes = [2, 1, 72], strides = [1, 1, 1]} : vector<2x16x72xf32> to vector<2x1x72xf32>
    %872 = vector.shape_cast %871 : vector<2x1x72xf32> to vector<2x72xf32>
    %c9 = arith.constant 9 : index
    %c0_77 = arith.constant 0 : index
    %c0_78 = arith.constant 0 : index
    %873 = vector.load %arg6[%c9, %c0_77, %c0_78] : memref<16x72x81xf32, #tpu.memory_space<vmem>>, vector<1x72x81xf32>
    %874 = vector.shape_cast %873 : vector<1x72x81xf32> to vector<72x81xf32>
    %cst_79 = arith.constant dense<0.000000e+00> : vector<2x81xf32>
    %875 = tpu.matmul %872, %874, %cst_79 {dimension_numbers = #tpu.dot_dimension_numbers<[1], [0], [0], [1], [0, 0, 1, 1], [], []>} : vector<2x72xf32>, vector<72x81xf32>, vector<2x81xf32> -> vector<2x81xf32>
    %876 = arith.addf %870, %875 : vector<2x81xf32>
    %877 = vector.extract_strided_slice %813 {offsets = [0, 10, 0], sizes = [2, 1, 72], strides = [1, 1, 1]} : vector<2x16x72xf32> to vector<2x1x72xf32>
    %878 = vector.shape_cast %877 : vector<2x1x72xf32> to vector<2x72xf32>
    %c10 = arith.constant 10 : index
    %c0_80 = arith.constant 0 : index
    %c0_81 = arith.constant 0 : index
    %879 = vector.load %arg6[%c10, %c0_80, %c0_81] : memref<16x72x81xf32, #tpu.memory_space<vmem>>, vector<1x72x81xf32>
    %880 = vector.shape_cast %879 : vector<1x72x81xf32> to vector<72x81xf32>
    %cst_82 = arith.constant dense<0.000000e+00> : vector<2x81xf32>
    %881 = tpu.matmul %878, %880, %cst_82 {dimension_numbers = #tpu.dot_dimension_numbers<[1], [0], [0], [1], [0, 0, 1, 1], [], []>} : vector<2x72xf32>, vector<72x81xf32>, vector<2x81xf32> -> vector<2x81xf32>
    %882 = arith.addf %876, %881 : vector<2x81xf32>
    %883 = vector.extract_strided_slice %813 {offsets = [0, 11, 0], sizes = [2, 1, 72], strides = [1, 1, 1]} : vector<2x16x72xf32> to vector<2x1x72xf32>
    %884 = vector.shape_cast %883 : vector<2x1x72xf32> to vector<2x72xf32>
    %c11 = arith.constant 11 : index
    %c0_83 = arith.constant 0 : index
    %c0_84 = arith.constant 0 : index
    %885 = vector.load %arg6[%c11, %c0_83, %c0_84] : memref<16x72x81xf32, #tpu.memory_space<vmem>>, vector<1x72x81xf32>
    %886 = vector.shape_cast %885 : vector<1x72x81xf32> to vector<72x81xf32>
    %cst_85 = arith.constant dense<0.000000e+00> : vector<2x81xf32>
    %887 = tpu.matmul %884, %886, %cst_85 {dimension_numbers = #tpu.dot_dimension_numbers<[1], [0], [0], [1], [0, 0, 1, 1], [], []>} : vector<2x72xf32>, vector<72x81xf32>, vector<2x81xf32> -> vector<2x81xf32>
    %888 = arith.addf %882, %887 : vector<2x81xf32>
    %889 = vector.extract_strided_slice %813 {offsets = [0, 12, 0], sizes = [2, 1, 72], strides = [1, 1, 1]} : vector<2x16x72xf32> to vector<2x1x72xf32>
    %890 = vector.shape_cast %889 : vector<2x1x72xf32> to vector<2x72xf32>
    %c12 = arith.constant 12 : index
    %c0_86 = arith.constant 0 : index
    %c0_87 = arith.constant 0 : index
    %891 = vector.load %arg6[%c12, %c0_86, %c0_87] : memref<16x72x81xf32, #tpu.memory_space<vmem>>, vector<1x72x81xf32>
    %892 = vector.shape_cast %891 : vector<1x72x81xf32> to vector<72x81xf32>
    %cst_88 = arith.constant dense<0.000000e+00> : vector<2x81xf32>
    %893 = tpu.matmul %890, %892, %cst_88 {dimension_numbers = #tpu.dot_dimension_numbers<[1], [0], [0], [1], [0, 0, 1, 1], [], []>} : vector<2x72xf32>, vector<72x81xf32>, vector<2x81xf32> -> vector<2x81xf32>
    %894 = arith.addf %888, %893 : vector<2x81xf32>
    %895 = vector.extract_strided_slice %813 {offsets = [0, 13, 0], sizes = [2, 1, 72], strides = [1, 1, 1]} : vector<2x16x72xf32> to vector<2x1x72xf32>
    %896 = vector.shape_cast %895 : vector<2x1x72xf32> to vector<2x72xf32>
    %c13 = arith.constant 13 : index
    %c0_89 = arith.constant 0 : index
    %c0_90 = arith.constant 0 : index
    %897 = vector.load %arg6[%c13, %c0_89, %c0_90] : memref<16x72x81xf32, #tpu.memory_space<vmem>>, vector<1x72x81xf32>
    %898 = vector.shape_cast %897 : vector<1x72x81xf32> to vector<72x81xf32>
    %cst_91 = arith.constant dense<0.000000e+00> : vector<2x81xf32>
    %899 = tpu.matmul %896, %898, %cst_91 {dimension_numbers = #tpu.dot_dimension_numbers<[1], [0], [0], [1], [0, 0, 1, 1], [], []>} : vector<2x72xf32>, vector<72x81xf32>, vector<2x81xf32> -> vector<2x81xf32>
    %900 = arith.addf %894, %899 : vector<2x81xf32>
    %901 = vector.extract_strided_slice %813 {offsets = [0, 14, 0], sizes = [2, 1, 72], strides = [1, 1, 1]} : vector<2x16x72xf32> to vector<2x1x72xf32>
    %902 = vector.shape_cast %901 : vector<2x1x72xf32> to vector<2x72xf32>
    %c14 = arith.constant 14 : index
    %c0_92 = arith.constant 0 : index
    %c0_93 = arith.constant 0 : index
    %903 = vector.load %arg6[%c14, %c0_92, %c0_93] : memref<16x72x81xf32, #tpu.memory_space<vmem>>, vector<1x72x81xf32>
    %904 = vector.shape_cast %903 : vector<1x72x81xf32> to vector<72x81xf32>
    %cst_94 = arith.constant dense<0.000000e+00> : vector<2x81xf32>
    %905 = tpu.matmul %902, %904, %cst_94 {dimension_numbers = #tpu.dot_dimension_numbers<[1], [0], [0], [1], [0, 0, 1, 1], [], []>} : vector<2x72xf32>, vector<72x81xf32>, vector<2x81xf32> -> vector<2x81xf32>
    %906 = arith.addf %900, %905 : vector<2x81xf32>
    %907 = vector.extract_strided_slice %813 {offsets = [0, 15, 0], sizes = [2, 1, 72], strides = [1, 1, 1]} : vector<2x16x72xf32> to vector<2x1x72xf32>
    %908 = vector.shape_cast %907 : vector<2x1x72xf32> to vector<2x72xf32>
    %c15 = arith.constant 15 : index
    %c0_95 = arith.constant 0 : index
    %c0_96 = arith.constant 0 : index
    %909 = vector.load %arg6[%c15, %c0_95, %c0_96] : memref<16x72x81xf32, #tpu.memory_space<vmem>>, vector<1x72x81xf32>
    %910 = vector.shape_cast %909 : vector<1x72x81xf32> to vector<72x81xf32>
    %cst_97 = arith.constant dense<0.000000e+00> : vector<2x81xf32>
    %911 = tpu.matmul %908, %910, %cst_97 {dimension_numbers = #tpu.dot_dimension_numbers<[1], [0], [0], [1], [0, 0, 1, 1], [], []>} : vector<2x72xf32>, vector<72x81xf32>, vector<2x81xf32> -> vector<2x81xf32>
    %912 = arith.addf %906, %911 : vector<2x81xf32>
    %c24 = arith.constant 24 : index
    %c0_98 = arith.constant 0 : index
    %913 = vector.load %arg2[%c24, %c0_98] : memref<120x128xf32, #tpu.memory_space<vmem>>, vector<81x5xf32>
    %c112_99 = arith.constant 112 : index
    %c96 = arith.constant 96 : index
    %914 = vector.load %arg2[%c112_99, %c96] : memref<120x128xf32, #tpu.memory_space<vmem>>, vector<1x5xf32>
    %cst_100 = arith.constant dense<0.000000e+00> : vector<2x5xf32>
    %915 = tpu.matmul %912, %913, %cst_100 {dimension_numbers = #tpu.dot_dimension_numbers<[1], [0], [0], [1], [0, 0, 1, 1], [], []>} : vector<2x81xf32>, vector<81x5xf32>, vector<2x5xf32> -> vector<2x5xf32>
    %916 = vector.broadcast %914 : vector<1x5xf32> to vector<2x5xf32>
    %917 = arith.addf %915, %916 : vector<2x5xf32>
    %c0_101 = arith.constant 0 : index
    %c0_102 = arith.constant 0 : index
    %918 = vector.load %arg4[%c0_101, %c0_102] : memref<2x5xf32, #tpu.memory_space<vmem>>, vector<2x5xf32>
    tpu.vector_store %arg4[%c0_101, %c0_102], %917 {strides = array<i32>} : memref<2x5xf32, #tpu.memory_space<vmem>>, vector<2x5xf32>,
    return
  }
  func.func @transform_0(%arg0: i32) -> (i32, i32, i32, i32) {
    %c0_i32 = arith.constant 0 : i32
    %c0_i32_0 = arith.constant 0 : i32
    %c0_i32_1 = arith.constant 0 : i32
    %c0_i32_2 = arith.constant 0 : i32
    %c0_i32_3 = arith.constant 0 : i32
    return %c0_i32, %c0_i32_0, %c0_i32_1, %c0_i32_2 : i32, i32, i32, i32
  }
  func.func @transform_1(%arg0: i32) -> (i32, i32) {
    %c0_i32 = arith.constant 0 : i32
    %c0_i32_0 = arith.constant 0 : i32
    %c0_i32_1 = arith.constant 0 : i32
    return %c0_i32, %c0_i32_0 : i32, i32
  }
  func.func @transform_3(%arg0: i32) -> (i32, i32) {
    %c0_i32 = arith.constant 0 : i32
    %c0_i32_0 = arith.constant 0 : i32
    %c0_i32_1 = arith.constant 0 : i32
    return %c0_i32, %c0_i32_0 : i32, i32
  }
}

</mosaic_0001>

<llo_original>
// kernel: net_forward.1
$region0: #{net_forward.1}
  #allocation0 [shape = 'u32[]', space=smem, size = 0x4, offset = 0x4, fixed_abs, tag = 'smem constant byte address 0x4 - core index']
  #allocation1 [shape = 'u32[144,128]{1,0:T(1,128)}', space=vmem, size = 0x12000, scoped, tag = 'internal scratch']
  #allocation2 [shape = 'f32[2,16,128]{2,1,0:T(8,128)}', space=vmem, size = 0x4000, scoped, tag = 'scratch operand']
  #allocation3 [shape = 'f32[16,72,81]{2,1,0:T(8,128)}', space=vmem, size = 0x90000, scoped, tag = 'scratch operand']
  #allocation4 [shape = 's32[1]{0}', space=sflag, size = 0x4, scoped, tag = 'scratch operand']
  #allocation7 [shape = 's32[]', space=sflag, size = 0x4, offset = 0, fixed_abs, tag = 'sflag constant byte address 0x0 - dummy sync flag']
  %s0 = inlined_call_operand.vmem [shape: f32[4,2,1,73], index: 0, kind: input, shape index: {}]
  %s1 = inlined_call_operand.vmem [shape: f32[120,128], index: 1, kind: input, shape index: {}]
  %s2 = inlined_call_operand.vmem [shape: f32[16,72,81], index: 2, kind: input, shape index: {}]
  %s3 = inlined_call_operand.hbm [shape: f32[2,5], index: 3, kind: output, shape index: {}]
  %s4 = sld [smem:[#allocation0]]
  $region52: #{net_forward.1} parent=0
    _
  %s6 = ssub.s32 1, %s4
  %s7 = scalar_select 0, %s6, %s4
  $region1: #{net_forward.1} parent=0
    #allocation5 [shape = 'u8[1024]{0}', space=vmem, size = 0x400, scoped, tag = 'output window, operand 0, single buffered']
    #allocation6 [shape = 's32[1]{0}', space=sflag, size = 0x4, scoped, tag = 'scoped memory for net_forward.1']
    %8 = vsyncpa [#allocation6], 0
    // Predicated region
    $region2: #{net_forward.1} parent=1 // pred_check
      _
    $region3: #{net_forward.1} parent=1 // pred_check_branch
      %10 = sbr.rel (0) target = $region5
    $region4: #{net_forward.1} parent=1 // pred_region
      _
    $region5: #{net_forward.1} parent=1 // pred_fallthru
      _
    // Predicated region
    $region6: #{net_forward.1} parent=1 // pred_check
      _
    $region7: #{net_forward.1} parent=1 // pred_check_branch
      %12 = sbr.rel (0) target = $region9
    $region8: #{net_forward.1} parent=1 // pred_region
      _
    $region9: #{net_forward.1} parent=1 // pred_fallthru
      _
    %p14 = scmp.lt.u32.totalorder 1152, 8
    %p15 = pneg %p14
    // Predicated region
    $region10: #{net_forward.1} parent=1 // pred_check
      _
    $region11: #{net_forward.1} parent=1 // pred_check_branch
      %17 = sbr.rel (%p14) target = $region13
    $region12: #{net_forward.1} parent=1 // pred_region
      %s33 = sand.u32 1152, 7
      %p34 = scmp.eq.s32.totalorder %s33, 0
      // Predicated region
      $region25: #{net_forward.1} parent=12 // pred_check
        %p35 = pneg %p34
      $region26: #{net_forward.1} parent=12 // pred_check_branch
        %37 = sbr.rel (%p35) target = $region28
      $region27: #{net_forward.1} parent=12 // pred_region
        loop: start=0, step=1, limit=1
        $region29: #{net_forward.1} parent=27 // loop_pre_header
          _
        $region30: #{net_forward.1} parent=27 // loop_header
          %s39 = sphi 0, %s43
          %p40 = scmp.ge.s32.totalorder %s39, 1
          %s44 = sphi %s2, %s2
          %s45 = sphi [#allocation3], [#allocation3]
        $region31: #{net_forward.1} parent=27 // loop_header_branch
          %42 = sbr.rel (%p40) target = $region35
        $region32: #{net_forward.1} parent=27 // loop_body
          %v46 = vld [vmem:[%s44] sm:$0xff]
          %47 = vst [vmem:[%s45] sm:$0xff] %v46
          %v48 = vld [vmem:[%s44 + $0x8] sm:$0xff]
          %49 = vst [vmem:[%s45 + $0x8] sm:$0xff] %v48
          %v50 = vld [vmem:[%s44 + $0x10] sm:$0xff]
          %51 = vst [vmem:[%s45 + $0x10] sm:$0xff] %v50
          %v52 = vld [vmem:[%s44 + $0x18] sm:$0xff]
          %53 = vst [vmem:[%s45 + $0x18] sm:$0xff] %v52
          %v54 = vld [vmem:[%s44 + $0x20] sm:$0xff]
          %55 = vst [vmem:[%s45 + $0x20] sm:$0xff] %v54
          %v56 = vld [vmem:[%s44 + $0x28] sm:$0xff]
          %57 = vst [vmem:[%s45 + $0x28] sm:$0xff] %v56
          %v58 = vld [vmem:[%s44 + $0x30] sm:$0xff]
          %59 = vst [vmem:[%s45 + $0x30] sm:$0xff] %v58
          %v60 = vld [vmem:[%s44 + $0x38] sm:$0xff]
          %61 = vst [vmem:[%s45 + $0x38] sm:$0xff] %v60
          %v62 = vld [vmem:[%s44 + $0x40] sm:$0xff]
          %63 = vst [vmem:[%s45 + $0x40] sm:$0xff] %v62
          %v64 = vld [vmem:[%s44 + $0x48] sm:$0xff]
          %65 = vst [vmem:[%s45 + $0x48] sm:$0xff] %v64
          %v66 = vld [vmem:[%s44 + $0x50] sm:$0xff]
          %67 = vst [vmem:[%s45 + $0x50] sm:$0xff] %v66
          %v68 = vld [vmem:[%s44 + $0x58] sm:$0xff]
          %69 = vst [vmem:[%s45 + $0x58] sm:$0xff] %v68
          %v70 = vld [vmem:[%s44 + $0x60] sm:$0xff]
          %71 = vst [vmem:[%s45 + $0x60] sm:$0xff] %v70
          %v72 = vld [vmem:[%s44 + $0x68] sm:$0xff]
          %73 = vst [vmem:[%s45 + $0x68] sm:$0xff] %v72
          %v74 = vld [vmem:[%s44 + $0x70] sm:$0xff]
          %75 = vst [vmem:[%s45 + $0x70] sm:$0xff] %v74
          %v76 = vld [vmem:[%s44 + $0x78] sm:$0xff]
          %77 = vst [vmem:[%s45 + $0x78] sm:$0xff] %v76
          %v78 = vld [vmem:[%s44 + $0x80] sm:$0xff]
          %79 = vst [vmem:[%s45 + $0x80] sm:$0xff] %v78
          %v80 = vld [vmem:[%s44 + $0x88] sm:$0xff]
          %81 = vst [vmem:[%s45 + $0x88] sm:$0xff] %v80
          %v82 = vld [vmem:[%s44 + $0x90] sm:$0xff]
          %83 = vst [vmem:[%s45 + $0x90] sm:$0xff] %v82
          %v84 = vld [vmem:[%s44 + $0x98] sm:$0xff]
          %85 = vst [vmem:[%s45 + $0x98] sm:$0xff] %v84
          %v86 = vld [vmem:[%s44 + $0xa0] sm:$0xff]
          %87 = vst [vmem:[%s45 + $0xa0] sm:$0xff] %v86
          %v88 = vld [vmem:[%s44 + $0xa8] sm:$0xff]
          %89 = vst [vmem:[%s45 + $0xa8] sm:$0xff] %v88
          %v90 = vld [vmem:[%s44 + $0xb0] sm:$0xff]
          %91 = vst [vmem:[%s45 + $0xb0] sm:$0xff] %v90
          %v92 = vld [vmem:[%s44 + $0xb8] sm:$0xff]
          %93 = vst [vmem:[%s45 + $0xb8] sm:$0xff] %v92
          %v94 = vld [vmem:[%s44 + $0xc0] sm:$0xff]
          %95 = vst [vmem:[%s45 + $0xc0] sm:$0xff] %v94
          %v96 = vld [vmem:[%s44 + $0xc8] sm:$0xff]
          %97 = vst [vmem:[%s45 + $0xc8] sm:$0xff] %v96
          %v98 = vld [vmem:[%s44 + $0xd0] sm:$0xff]
          %99 = vst [vmem:[%s45 + $0xd0] sm:$0xff] %v98
          %v100 = vld [vmem:[%s44 + $0xd8] sm:$0xff]
          %101 = vst [vmem:[%s45 + $0xd8] sm:$0xff] %v100
          %v102 = vld [vmem:[%s44 + $0xe0] sm:$0xff]
          %103 = vst [vmem:[%s45 + $0xe0] sm:$0xff] %v102
          %v104 = vld [vmem:[%s44 + $0xe8] sm:$0xff]
          %105 = vst [vmem:[%s45 + $0xe8] sm:$0xff] %v104
          %v106 = vld [vmem:[%s44 + $0xf0] sm:$0xff]
          %107 = vst [vmem:[%s45 + $0xf0] sm:$0xff] %v106
          %v108 = vld [vmem:[%s44 + $0xf8] sm:$0xff]
          %109 = vst [vmem:[%s45 + $0xf8] sm:$0xff] %v108
          %v110 = vld [vmem:[%s44 + $0x100] sm:$0xff]
          %111 = vst [vmem:[%s45 + $0x100] sm:$0xff] %v110
          %v112 = vld [vmem:[%s44 + $0x108] sm:$0xff]
          %113 = vst [vmem:[%s45 + $0x108] sm:$0xff] %v112
          %v114 = vld [vmem:[%s44 + $0x110] sm:$0xff]
          %115 = vst [vmem:[%s45 + $0x110] sm:$0xff] %v114
          %v116 = vld [vmem:[%s44 + $0x118] sm:$0xff]
          %117 = vst [vmem:[%s45 + $0x118] sm:$0xff] %v116
          %v118 = vld [vmem:[%s44 + $0x120] sm:$0xff]
          %119 = vst [vmem:[%s45 + $0x120] sm:$0xff] %v118
          %v120 = vld [vmem:[%s44 + $0x128] sm:$0xff]
          %121 = vst [vmem:[%s45 + $0x128] sm:$0xff] %v120
          %v122 = vld [vmem:[%s44 + $0x130] sm:$0xff]
          %123 = vst [vmem:[%s45 + $0x130] sm:$0xff] %v122
          %v124 = vld [vmem:[%s44 + $0x138] sm:$0xff]
          %125 = vst [vmem:[%s45 + $0x138] sm:$0xff] %v124
          %v126 = vld [vmem:[%s44 + $0x140] sm:$0xff]
          %127 = vst [vmem:[%s45 + $0x140] sm:$0xff] %v126
          %v128 = vld [vmem:[%s44 + $0x148] sm:$0xff]
          %129 = vst [vmem:[%s45 + $0x148] sm:$0xff] %v128
          %v130 = vld [vmem:[%s44 + $0x150] sm:$0xff]
          %131 = vst [vmem:[%s45 + $0x150] sm:$0xff] %v130
          %v132 = vld [vmem:[%s44 + $0x158] sm:$0xff]
          %133 = vst [vmem:[%s45 + $0x158] sm:$0xff] %v132
          %v134 = vld [vmem:[%s44 + $0x160] sm:$0xff]
          %135 = vst [vmem:[%s45 + $0x160] sm:$0xff] %v134
          %v136 = vld [vmem:[%s44 + $0x168] sm:$0xff]
          %137 = vst [vmem:[%s45 + $0x168] sm:$0xff] %v136
          %v138 = vld [vmem:[%s44 + $0x170] sm:$0xff]
          %139 = vst [vmem:[%s45 + $0x170] sm:$0xff] %v138
          %v140 = vld [vmem:[%s44 + $0x178] sm:$0xff]
          %141 = vst [vmem:[%s45 + $0x178] sm:$0xff] %v140
          %v142 = vld [vmem:[%s44 + $0x180] sm:$0xff]
          %143 = vst [vmem:[%s45 + $0x180] sm:$0xff] %v142
          %v144 = vld [vmem:[%s44 + $0x188] sm:$0xff]
          %145 = vst [vmem:[%s45 + $0x188] sm:$0xff] %v144
          %v146 = vld [vmem:[%s44 + $0x190] sm:$0xff]
          %147 = vst [vmem:[%s45 + $0x190] sm:$0xff] %v146
          %v148 = vld [vmem:[%s44 + $0x198] sm:$0xff]
          %149 = vst [vmem:[%s45 + $0x198] sm:$0xff] %v148
          %v150 = vld [vmem:[%s44 + $0x1a0] sm:$0xff]
          %151 = vst [vmem:[%s45 + $0x1a0] sm:$0xff] %v150
          %v152 = vld [vmem:[%s44 + $0x1a8] sm:$0xff]
          %153 = vst [vmem:[%s45 + $0x1a8] sm:$0xff] %v152
          %v154 = vld [vmem:[%s44 + $0x1b0] sm:$0xff]
          %155 = vst [vmem:[%s45 + $0x1b0] sm:$0xff] %v154
          %v156 = vld [vmem:[%s44 + $0x1b8] sm:$0xff]
          %157 = vst [vmem:[%s45 + $0x1b8] sm:$0xff] %v156
          %v158 = vld [vmem:[%s44 + $0x1c0] sm:$0xff]
          %159 = vst [vmem:[%s45 + $0x1c0] sm:$0xff] %v158
          %v160 = vld [vmem:[%s44 + $0x1c8] sm:$0xff]
          %161 = vst [vmem:[%s45 + $0x1c8] sm:$0xff] %v160
          %v162 = vld [vmem:[%s44 + $0x1d0] sm:$0xff]
          %163 = vst [vmem:[%s45 + $0x1d0] sm:$0xff] %v162
          %v164 = vld [vmem:[%s44 + $0x1d8] sm:$0xff]
          %165 = vst [vmem:[%s45 + $0x1d8] sm:$0xff] %v164
          %v166 = vld [vmem:[%s44 + $0x1e0] sm:$0xff]
          %167 = vst [vmem:[%s45 + $0x1e0] sm:$0xff] %v166
          %v168 = vld [vmem:[%s44 + $0x1e8] sm:$0xff]
          %169 = vst [vmem:[%s45 + $0x1e8] sm:$0xff] %v168
          %v170 = vld [vmem:[%s44 + $0x1f0] sm:$0xff]
          %171 = vst [vmem:[%s45 + $0x1f0] sm:$0xff] %v170
          %v172 = vld [vmem:[%s44 + $0x1f8] sm:$0xff]
          %173 = vst [vmem:[%s45 + $0x1f8] sm:$0xff] %v172
          %v174 = vld [vmem:[%s44 + $0x200] sm:$0xff]
          %175 = vst [vmem:[%s45 + $0x200] sm:$0xff] %v174
          %v176 = vld [vmem:[%s44 + $0x208] sm:$0xff]
          %177 = vst [vmem:[%s45 + $0x208] sm:$0xff] %v176
          %v178 = vld [vmem:[%s44 + $0x210] sm:$0xff]
          %179 = vst [vmem:[%s45 + $0x210] sm:$0xff] %v178
          %v180 = vld [vmem:[%s44 + $0x218] sm:$0xff]
          %181 = vst [vmem:[%s45 + $0x218] sm:$0xff] %v180
          %v182 = vld [vmem:[%s44 + $0x220] sm:$0xff]
          %183 = vst [vmem:[%s45 + $0x220] sm:$0xff] %v182
          %v184 = vld [vmem:[%s44 + $0x228] sm:$0xff]
          %185 = vst [vmem:[%s45 + $0x228] sm:$0xff] %v184
          %v186 = vld [vmem:[%s44 + $0x230] sm:$0xff]
          %187 = vst [vmem:[%s45 + $0x230] sm:$0xff] %v186
          %v188 = vld [vmem:[%s44 + $0x238] sm:$0xff]
          %189 = vst [vmem:[%s45 + $0x238] sm:$0xff] %v188
          %v190 = vld [vmem:[%s44 + $0x240] sm:$0xff]
          %191 = vst [vmem:[%s45 + $0x240] sm:$0xff] %v190
          %v192 = vld [vmem:[%s44 + $0x248] sm:$0xff]
          %193 = vst [vmem:[%s45 + $0x248] sm:$0xff] %v192
          %v194 = vld [vmem:[%s44 + $0x250] sm:$0xff]
          %195 = vst [vmem:[%s45 + $0x250] sm:$0xff] %v194
          %v196 = vld [vmem:[%s44 + $0x258] sm:$0xff]
          %197 = vst [vmem:[%s45 + $0x258] sm:$0xff] %v196
          %v198 = vld [vmem:[%s44 + $0x260] sm:$0xff]
          %199 = vst [vmem:[%s45 + $0x260] sm:$0xff] %v198
          %v200 = vld [vmem:[%s44 + $0x268] sm:$0xff]
          %201 = vst [vmem:[%s45 + $0x268] sm:$0xff] %v200
          %v202 = vld [vmem:[%s44 + $0x270] sm:$0xff]
          %203 = vst [vmem:[%s45 + $0x270] sm:$0xff] %v202
          %v204 = vld [vmem:[%s44 + $0x278] sm:$0xff]
          %205 = vst [vmem:[%s45 + $0x278] sm:$0xff] %v204
          %v206 = vld [vmem:[%s44 + $0x280] sm:$0xff]
          %207 = vst [vmem:[%s45 + $0x280] sm:$0xff] %v206
          %v208 = vld [vmem:[%s44 + $0x288] sm:$0xff]
          %209 = vst [vmem:[%s45 + $0x288] sm:$0xff] %v208
          %v210 = vld [vmem:[%s44 + $0x290] sm:$0xff]
          %211 = vst [vmem:[%s45 + $0x290] sm:$0xff] %v210
          %v212 = vld [vmem:[%s44 + $0x298] sm:$0xff]
          %213 = vst [vmem:[%s45 + $0x298] sm:$0xff] %v212
          %v214 = vld [vmem:[%s44 + $0x2a0] sm:$0xff]
          %215 = vst [vmem:[%s45 + $0x2a0] sm:$0xff] %v214
          %v216 = vld [vmem:[%s44 + $0x2a8] sm:$0xff]
          %217 = vst [vmem:[%s45 + $0x2a8] sm:$0xff] %v216
          %v218 = vld [vmem:[%s44 + $0x2b0] sm:$0xff]
          %219 = vst [vmem:[%s45 + $0x2b0] sm:$0xff] %v218
          %v220 = vld [vmem:[%s44 + $0x2b8] sm:$0xff]
          %221 = vst [vmem:[%s45 + $0x2b8] sm:$0xff] %v220
          %v222 = vld [vmem:[%s44 + $0x2c0] sm:$0xff]
          %223 = vst [vmem:[%s45 + $0x2c0] sm:$0xff] %v222
          %v224 = vld [vmem:[%s44 + $0x2c8] sm:$0xff]
          %225 = vst [vmem:[%s45 + $0x2c8] sm:$0xff] %v224
          %v226 = vld [vmem:[%s44 + $0x2d0] sm:$0xff]
          %227 = vst [vmem:[%s45 + $0x2d0] sm:$0xff] %v226
          %v228 = vld [vmem:[%s44 + $0x2d8] sm:$0xff]
          %229 = vst [vmem:[%s45 + $0x2d8] sm:$0xff] %v228
          %v230 = vld [vmem:[%s44 + $0x2e0] sm:$0xff]
          %231 = vst [vmem:[%s45 + $0x2e0] sm:$0xff] %v230
          %v232 = vld [vmem:[%s44 + $0x2e8] sm:$0xff]
          %233 = vst [vmem:[%s45 + $0x2e8] sm:$0xff] %v232
          %v234 = vld [vmem:[%s44 + $0x2f0] sm:$0xff]
          %235 = vst [vmem:[%s45 + $0x2f0] sm:$0xff] %v234
          %v236 = vld [vmem:[%s44 + $0x2f8] sm:$0xff]
          %237 = vst [vmem:[%s45 + $0x2f8] sm:$0xff] %v236
          %v238 = vld [vmem:[%s44 + $0x300] sm:$0xff]
          %239 = vst [vmem:[%s45 + $0x300] sm:$0xff] %v238
          %v240 = vld [vmem:[%s44 + $0x308] sm:$0xff]
          %241 = vst [vmem:[%s45 + $0x308] sm:$0xff] %v240
          %v242 = vld [vmem:[%s44 + $0x310] sm:$0xff]
          %243 = vst [vmem:[%s45 + $0x310] sm:$0xff] %v242
          %v244 = vld [vmem:[%s44 + $0x318] sm:$0xff]
          %245 = vst [vmem:[%s45 + $0x318] sm:$0xff] %v244
          %v246 = vld [vmem:[%s44 + $0x320] sm:$0xff]
          %247 = vst [vmem:[%s45 + $0x320] sm:$0xff] %v246
          %v248 = vld [vmem:[%s44 + $0x328] sm:$0xff]
          %249 = vst [vmem:[%s45 + $0x328] sm:$0xff] %v248
          %v250 = vld [vmem:[%s44 + $0x330] sm:$0xff]
          %251 = vst [vmem:[%s45 + $0x330] sm:$0xff] %v250
          %v252 = vld [vmem:[%s44 + $0x338] sm:$0xff]
          %253 = vst [vmem:[%s45 + $0x338] sm:$0xff] %v252
          %v254 = vld [vmem:[%s44 + $0x340] sm:$0xff]
          %255 = vst [vmem:[%s45 + $0x340] sm:$0xff] %v254
          %v256 = vld [vmem:[%s44 + $0x348] sm:$0xff]
          %257 = vst [vmem:[%s45 + $0x348] sm:$0xff] %v256
          %v258 = vld [vmem:[%s44 + $0x350] sm:$0xff]
          %259 = vst [vmem:[%s45 + $0x350] sm:$0xff] %v258
          %v260 = vld [vmem:[%s44 + $0x358] sm:$0xff]
          %261 = vst [vmem:[%s45 + $0x358] sm:$0xff] %v260
          %v262 = vld [vmem:[%s44 + $0x360] sm:$0xff]
          %263 = vst [vmem:[%s45 + $0x360] sm:$0xff] %v262
          %v264 = vld [vmem:[%s44 + $0x368] sm:$0xff]
          %265 = vst [vmem:[%s45 + $0x368] sm:$0xff] %v264
          %v266 = vld [vmem:[%s44 + $0x370] sm:$0xff]
          %267 = vst [vmem:[%s45 + $0x370] sm:$0xff] %v266
          %v268 = vld [vmem:[%s44 + $0x378] sm:$0xff]
          %269 = vst [vmem:[%s45 + $0x378] sm:$0xff] %v268
          %v270 = vld [vmem:[%s44 + $0x380] sm:$0xff]
          %271 = vst [vmem:[%s45 + $0x380] sm:$0xff] %v270
          %v272 = vld [vmem:[%s44 + $0x388] sm:$0xff]
          %273 = vst [vmem:[%s45 + $0x388] sm:$0xff] %v272
          %v274 = vld [vmem:[%s44 + $0x390] sm:$0xff]
          %275 = vst [vmem:[%s45 + $0x390] sm:$0xff] %v274
          %v276 = vld [vmem:[%s44 + $0x398] sm:$0xff]
          %277 = vst [vmem:[%s45 + $0x398] sm:$0xff] %v276
          %v278 = vld [vmem:[%s44 + $0x3a0] sm:$0xff]
          %279 = vst [vmem:[%s45 + $0x3a0] sm:$0xff] %v278
          %v280 = vld [vmem:[%s44 + $0x3a8] sm:$0xff]
          %281 = vst [vmem:[%s45 + $0x3a8] sm:$0xff] %v280
          %v282 = vld [vmem:[%s44 + $0x3b0] sm:$0xff]
          %283 = vst [vmem:[%s45 + $0x3b0] sm:$0xff] %v282
          %v284 = vld [vmem:[%s44 + $0x3b8] sm:$0xff]
          %285 = vst [vmem:[%s45 + $0x3b8] sm:$0xff] %v284
          %v286 = vld [vmem:[%s44 + $0x3c0] sm:$0xff]
          %287 = vst [vmem:[%s45 + $0x3c0] sm:$0xff] %v286
          %v288 = vld [vmem:[%s44 + $0x3c8] sm:$0xff]
          %289 = vst [vmem:[%s45 + $0x3c8] sm:$0xff] %v288
          %v290 = vld [vmem:[%s44 + $0x3d0] sm:$0xff]
          %291 = vst [vmem:[%s45 + $0x3d0] sm:$0xff] %v290
          %v292 = vld [vmem:[%s44 + $0x3d8] sm:$0xff]
          %293 = vst [vmem:[%s45 + $0x3d8] sm:$0xff] %v292
          %v294 = vld [vmem:[%s44 + $0x3e0] sm:$0xff]
          %295 = vst [vmem:[%s45 + $0x3e0] sm:$0xff] %v294
          %v296 = vld [vmem:[%s44 + $0x3e8] sm:$0xff]
          %297 = vst [vmem:[%s45 + $0x3e8] sm:$0xff] %v296
          %v298 = vld [vmem:[%s44 + $0x3f0] sm:$0xff]
          %299 = vst [vmem:[%s45 + $0x3f0] sm:$0xff] %v298
          %v300 = vld [vmem:[%s44 + $0x3f8] sm:$0xff]
          %301 = vst [vmem:[%s45 + $0x3f8] sm:$0xff] %v300
          %v302 = vld [vmem:[%s44 + $0x400] sm:$0xff]
          %303 = vst [vmem:[%s45 + $0x400] sm:$0xff] %v302
          %v304 = vld [vmem:[%s44 + $0x408] sm:$0xff]
          %305 = vst [vmem:[%s45 + $0x408] sm:$0xff] %v304
          %v306 = vld [vmem:[%s44 + $0x410] sm:$0xff]
          %307 = vst [vmem:[%s45 + $0x410] sm:$0xff] %v306
          %v308 = vld [vmem:[%s44 + $0x418] sm:$0xff]
          %309 = vst [vmem:[%s45 + $0x418] sm:$0xff] %v308
          %v310 = vld [vmem:[%s44 + $0x420] sm:$0xff]
          %311 = vst [vmem:[%s45 + $0x420] sm:$0xff] %v310
          %v312 = vld [vmem:[%s44 + $0x428] sm:$0xff]
          %313 = vst [vmem:[%s45 + $0x428] sm:$0xff] %v312
          %v314 = vld [vmem:[%s44 + $0x430] sm:$0xff]
          %315 = vst [vmem:[%s45 + $0x430] sm:$0xff] %v314
          %v316 = vld [vmem:[%s44 + $0x438] sm:$0xff]
          %317 = vst [vmem:[%s45 + $0x438] sm:$0xff] %v316
          %v318 = vld [vmem:[%s44 + $0x440] sm:$0xff]
          %319 = vst [vmem:[%s45 + $0x440] sm:$0xff] %v318
          %v320 = vld [vmem:[%s44 + $0x448] sm:$0xff]
          %321 = vst [vmem:[%s45 + $0x448] sm:$0xff] %v320
          %v322 = vld [vmem:[%s44 + $0x450] sm:$0xff]
          %323 = vst [vmem:[%s45 + $0x450] sm:$0xff] %v322
          %v324 = vld [vmem:[%s44 + $0x458] sm:$0xff]
          %325 = vst [vmem:[%s45 + $0x458] sm:$0xff] %v324
          %v326 = vld [vmem:[%s44 + $0x460] sm:$0xff]
          %327 = vst [vmem:[%s45 + $0x460] sm:$0xff] %v326
          %v328 = vld [vmem:[%s44 + $0x468] sm:$0xff]
          %329 = vst [vmem:[%s45 + $0x468] sm:$0xff] %v328
          %v330 = vld [vmem:[%s44 + $0x470] sm:$0xff]
          %331 = vst [vmem:[%s45 + $0x470] sm:$0xff] %v330
          %v332 = vld [vmem:[%s44 + $0x478] sm:$0xff]
          %333 = vst [vmem:[%s45 + $0x478] sm:$0xff] %v332
        $region33: #{net_forward.1} parent=27 // loop_footer
          %s43 = sadd.s32 1, %s39
        $region34: #{net_forward.1} parent=27 // loop_footer_branch
          %38 = sbr.rel target = $region30
        $region35: #{net_forward.1} parent=27 // loop_exit
          _
      $region28: #{net_forward.1} parent=12 // pred_fallthru
        _
      %p334 = pneg %p34
      // Predicated region
      $region36: #{net_forward.1} parent=12 // pred_check
        _
      $region37: #{net_forward.1} parent=12 // pred_check_branch
        %336 = sbr.rel (%p34) target = $region39
      $region38: #{net_forward.1} parent=12 // pred_region
        %s337 = sand.u32 1152, 7
      $region39: #{net_forward.1} parent=12 // pred_fallthru
        _
    $region13: #{net_forward.1} parent=1 // pred_fallthru
      _
    // Predicated region
    $region14: #{net_forward.1} parent=1 // pred_check
      %p18 = pneg %p14
    $region15: #{net_forward.1} parent=1 // pred_check_branch
      %20 = sbr.rel (%p18) target = $region17
    $region16: #{net_forward.1} parent=1 // pred_region
      %s21 = sshll.u32 1, 1152
      %s22 = ssub.s32 %s21, 1
      loop: start=0, step=1, limit=1
      $region18: #{net_forward.1} parent=16 // loop_pre_header
        _
      $region19: #{net_forward.1} parent=16 // loop_header
        %s24 = sphi 0, %s28
        %p25 = scmp.ge.s32.totalorder %s24, 1
        %s29 = sphi %s2, %s2
        %s30 = sphi [#allocation3], [#allocation3]
      $region20: #{net_forward.1} parent=16 // loop_header_branch
        %27 = sbr.rel (%p25) target = $region24
      $region21: #{net_forward.1} parent=16 // loop_body
        %v31 = vld [vmem:[%s29] sm:%s22]
        %32 = vst [vmem:[%s30] sm:%s22] %v31
      $region22: #{net_forward.1} parent=16 // loop_footer
        %s28 = sadd.s32 1, %s24
      $region23: #{net_forward.1} parent=16 // loop_footer_branch
        %23 = sbr.rel target = $region19
      $region24: #{net_forward.1} parent=16 // loop_exit
        _
    $region17: #{net_forward.1} parent=1 // pred_fallthru
      _
    // Predicated region
    $region40: #{net_forward.1} parent=1 // pred_check
      _
    $region41: #{net_forward.1} parent=1 // pred_check_branch
      %340 = sbr.rel (0) target = $region43
    $region42: #{net_forward.1} parent=1 // pred_region
      %341 = vsyncadd [#allocation4], 18432
    $region43: #{net_forward.1} parent=1 // pred_fallthru
      _
    %v342 = vld [vmem:[%s0] sm:$0x1]
    %v343 = vld [vmem:[%s0 + $0x1] sm:$0x1]
    %s344 = scalar_lea.vmem %s0, 2
    %v345 = vld [vmem:[%s344] sm:$0x1]
    %v346 = vld [vmem:[%s344 + $0x1] sm:$0x1]
    %s347 = scalar_lea.vmem %s0, 4
    %v348 = vld [vmem:[%s347] sm:$0x1]
    %v349 = vld [vmem:[%s347 + $0x1] sm:$0x1]
    %s350 = scalar_lea.vmem %s0, 6
    %v351 = vld [vmem:[%s350] sm:$0x1]
    %v352 = vld [vmem:[%s350 + $0x1] sm:$0x1]
    %v355 = vlaneseq
    %v356 = vshrl.u32 %v355, 7
    %v357 = vsub.s32 0, %v356
    %v358 = vrot.slane %v342, %v357
    %v359 = vlaneseq
    %v360 = vshrl.u32 %v359, 7
    %v361 = vsub.s32 0, %v360
    %v362 = vrot.slane %v343, %v361
    %v367 = vlaneseq
    %v368 = vshrl.u32 %v367, 7
    %v369 = vsub.s32 0, %v368
    %v370 = vrot.slane %v345, %v369
    %v371 = vlaneseq
    %v372 = vshrl.u32 %v371, 7
    %v373 = vsub.s32 0, %v372
    %v374 = vrot.slane %v346, %v373
    %v379 = vlaneseq
    %v380 = vshrl.u32 %v379, 7
    %v381 = vsub.s32 0, %v380
    %v382 = vrot.slane %v348, %v381
    %v383 = vlaneseq
    %v384 = vshrl.u32 %v383, 7
    %v385 = vsub.s32 0, %v384
    %v386 = vrot.slane %v349, %v385
    %v391 = vlaneseq
    %v392 = vshrl.u32 %v391, 7
    %v393 = vsub.s32 0, %v392
    %v394 = vrot.slane %v351, %v393
    %v395 = vlaneseq
    %v396 = vshrl.u32 %v395, 7
    %v397 = vsub.s32 0, %v396
    %v398 = vrot.slane %v352, %v397
    %v401 = vld [vmem:[%s1] sm:$0xff]
    %403 = vset.pattern.permute.xlu0 4
    %404 = vperm.xlu0 %403, %v401
    %v405 = vpop.permute.xlu0 %404
    %407 = vset.pattern.permute.xlu0 0
    %408 = vperm.xlu0 %407, %v401
    %v409 = vpop.permute.xlu0 %408
    %v411 = vmul.f32 %v409, %v358
    %v412 = vmul.f32 %v409, %v362
    %v413 = vadd.f32 %v405, %v411
    %v414 = vadd.f32 %v405, %v412
    %415 = vset.pattern.permute.xlu0 1
    %416 = vperm.xlu0 %415, %v401
    %v417 = vpop.permute.xlu0 %416
    %v419 = vmul.f32 %v417, %v370
    %v420 = vmul.f32 %v417, %v374
    %v421 = vadd.f32 %v413, %v419
    %v422 = vadd.f32 %v414, %v420
    %423 = vset.pattern.permute.xlu0 2
    %424 = vperm.xlu0 %423, %v401
    %v425 = vpop.permute.xlu0 %424
    %v427 = vmul.f32 %v425, %v382
    %v428 = vmul.f32 %v425, %v386
    %v429 = vadd.f32 %v421, %v427
    %v430 = vadd.f32 %v422, %v428
    %431 = vset.pattern.permute.xlu0 3
    %432 = vperm.xlu0 %431, %v401
    %v433 = vpop.permute.xlu0 %432
    %v435 = vmul.f32 %v433, %v394
    %v436 = vmul.f32 %v433, %v398
    %v437 = vadd.f32 %v429, %v435
    %v438 = vadd.f32 %v430, %v436
    %v439 = vmax.f32 %v437, 0.0
    %v440 = vmax.f32 %v438, 0.0
    %v441 = vmul.f32 %v409, %v370
    %v442 = vmul.f32 %v409, %v374
    %v443 = vadd.f32 %v405, %v441
    %v444 = vadd.f32 %v405, %v442
    %v445 = vmul.f32 %v417, %v382
    %v446 = vmul.f32 %v417, %v386
    %v447 = vadd.f32 %v443, %v445
    %v448 = vadd.f32 %v444, %v446
    %v449 = vmul.f32 %v425, %v394
    %v450 = vmul.f32 %v425, %v398
    %v451 = vadd.f32 %v447, %v449
    %v452 = vadd.f32 %v448, %v450
    %v453 = vmul.f32 %v433, %v358
    %v454 = vmul.f32 %v433, %v362
    %457 = vrot.lane.b32.xlu0 %v453, 127
    %v458 = vpop.permute.xlu0 %457
    %459 = vrot.lane.b32.xlu0 %v454, 127
    %v460 = vpop.permute.xlu0 %459
    %v463 = vadd.f32 %v451, %v458
    %v464 = vadd.f32 %v452, %v460
    %v465 = vmax.f32 %v463, 0.0
    %v466 = vmax.f32 %v464, 0.0
    %v467 = vmul.f32 %v409, %v382
    %v468 = vmul.f32 %v409, %v386
    %v469 = vadd.f32 %v405, %v467
    %v470 = vadd.f32 %v405, %v468
    %v471 = vmul.f32 %v417, %v394
    %v472 = vmul.f32 %v417, %v398
    %v473 = vadd.f32 %v469, %v471
    %v474 = vadd.f32 %v470, %v472
    %v475 = vmul.f32 %v425, %v358
    %v476 = vmul.f32 %v425, %v362
    %479 = vrot.lane.b32.xlu0 %v475, 127
    %v480 = vpop.permute.xlu0 %479
    %481 = vrot.lane.b32.xlu0 %v476, 127
    %v482 = vpop.permute.xlu0 %481
    %v485 = vadd.f32 %v473, %v480
    %v486 = vadd.f32 %v474, %v482
    %v487 = vmul.f32 %v433, %v370
    %v488 = vmul.f32 %v433, %v374
    %491 = vrot.lane.b32.xlu0 %v487, 127
    %v492 = vpop.permute.xlu0 %491
    %493 = vrot.lane.b32.xlu0 %v488, 127
    %v494 = vpop.permute.xlu0 %493
    %v497 = vadd.f32 %v485, %v492
    %v498 = vadd.f32 %v486, %v494
    %v499 = vmax.f32 %v497, 0.0
    %v500 = vmax.f32 %v498, 0.0
    %v501 = vmul.f32 %v409, %v394
    %v502 = vmul.f32 %v409, %v398
    %v503 = vadd.f32 %v405, %v501
    %v504 = vadd.f32 %v405, %v502
    %v505 = vmul.f32 %v417, %v358
    %v506 = vmul.f32 %v417, %v362
    %509 = vrot.lane.b32.xlu0 %v505, 127
    %v510 = vpop.permute.xlu0 %509
    %511 = vrot.lane.b32.xlu0 %v506, 127
    %v512 = vpop.permute.xlu0 %511
    %v515 = vadd.f32 %v503, %v510
    %v516 = vadd.f32 %v504, %v512
    %v517 = vmul.f32 %v425, %v370
    %v518 = vmul.f32 %v425, %v374
    %521 = vrot.lane.b32.xlu0 %v517, 127
    %v522 = vpop.permute.xlu0 %521
    %523 = vrot.lane.b32.xlu0 %v518, 127
    %v524 = vpop.permute.xlu0 %523
    %v527 = vadd.f32 %v515, %v522
    %v528 = vadd.f32 %v516, %v524
    %v529 = vmul.f32 %v433, %v382
    %v530 = vmul.f32 %v433, %v386
    %533 = vrot.lane.b32.xlu0 %v529, 127
    %v534 = vpop.permute.xlu0 %533
    %535 = vrot.lane.b32.xlu0 %v530, 127
    %v536 = vpop.permute.xlu0 %535
    %v539 = vadd.f32 %v527, %v534
    %v540 = vadd.f32 %v528, %v536
    %v541 = vmax.f32 %v539, 0.0
    %v542 = vmax.f32 %v540, 0.0
    %v543 = vmax.f32 %v439, %v465
    %v544 = vmax.f32 %v440, %v466
    %v545 = vmax.f32 %v499, %v541
    %v546 = vmax.f32 %v500, %v542
    %547 = vst [vmem:[#allocation2] sm:$0xff] 0.0
    %548 = vst [vmem:[#allocation2 + $0x8] sm:$0xff] 0.0
    %549 = vst [vmem:[#allocation2 + $0x10] sm:$0xff] 0.0
    %550 = vst [vmem:[#allocation2 + $0x18] sm:$0xff] 0.0
    %553 = vrot.lane.b32.xlu0 %v545, 2
    %v554 = vpop.permute.xlu0 %553
    %555 = vrot.lane.b32.xlu0 %v546, 2
    %v556 = vpop.permute.xlu0 %555
    %vm559 = vcmask 605200
    %560 = vst.msk [vmem:[#allocation2] sm:$0xff] %vm559, %v554
    %561 = vst.msk [vmem:[#allocation2 + $0x10] sm:$0xff] %vm559, %v556
    %564 = vrot.lane.b32.xlu0 %v543, 1
    %v565 = vpop.permute.xlu0 %564
    %566 = vrot.lane.b32.xlu0 %v544, 1
    %v567 = vpop.permute.xlu0 %566
    %vm570 = vcmask 597000
    %571 = vst.msk [vmem:[#allocation2 + $0x8] sm:$0xff] %vm570, %v565
    %572 = vst.msk [vmem:[#allocation2 + $0x18] sm:$0xff] %vm570, %v567
    %v573 = vld [vmem:[#allocation2] sm:$0xff]
    %v574 = vld [vmem:[#allocation2 + $0x8] sm:$0xff]
    %v575 = vld [vmem:[#allocation2 + $0x10] sm:$0xff]
    %v576 = vld [vmem:[#allocation2 + $0x18] sm:$0xff]
    %v577 = vld [vmem:[#allocation2] sm:$0xff]
    %v578 = vld [vmem:[#allocation2 + $0x10] sm:$0xff]
    %v579 = vld [vmem:[%s1 + $0x8] sm:$0xff]
    %v580 = vld [vmem:[%s1 + $0x10] sm:$0xff]
    %582 = vset.pattern.permute.xlu0 48
    %583 = vperm.xlu0 %582, %v579
    %v584 = vpop.permute.xlu0 %583
    %587 = vset.pattern.permute.xlu0 48
    %588 = vperm.xlu0 %587, %v580
    %v589 = vpop.permute.xlu0 %588
    %591 = vset.pattern.permute.xlu0 0
    %592 = vperm.xlu0 %591, %v579
    %v593 = vpop.permute.xlu0 %592
    %595 = vset.pattern.permute.xlu0 0
    %596 = vperm.xlu0 %595, %v580
    %v597 = vpop.permute.xlu0 %596
    %v599 = vlaneseq
    %v600 = vshrl.u32 %v599, 7
    %v601 = vsub.s32 0, %v600
    %v602 = vrot.slane %v573, %v601
    %v603 = vlaneseq
    %v604 = vshrl.u32 %v603, 7
    %v605 = vsub.s32 0, %v604
    %v606 = vrot.slane %v575, %v605
    %v607 = vmul.f32 %v593, %v602
    %v608 = vmul.f32 %v597, %v602
    %v609 = vmul.f32 %v593, %v606
    %v610 = vmul.f32 %v597, %v606
    %v611 = vadd.f32 %v584, %v607
    %v612 = vadd.f32 %v589, %v608
    %v613 = vadd.f32 %v584, %v609
    %v614 = vadd.f32 %v589, %v610
    %615 = vset.pattern.permute.xlu0 1
    %616 = vperm.xlu0 %615, %v579
    %v617 = vpop.permute.xlu0 %616
    %619 = vset.pattern.permute.xlu0 1
    %620 = vperm.xlu0 %619, %v580
    %v621 = vpop.permute.xlu0 %620
    %v623 = vlaneseq
    %v624 = vshrl.u32 %v623, 7
    %v625 = vsub.s32 0, %v624
    %v626 = vrot.slane %v574, %v625
    %v627 = vlaneseq
    %v628 = vshrl.u32 %v627, 7
    %v629 = vsub.s32 0, %v628
    %v630 = vrot.slane %v576, %v629
    %v631 = vmul.f32 %v617, %v626
    %v632 = vmul.f32 %v621, %v626
    %v633 = vmul.f32 %v617, %v630
    %v634 = vmul.f32 %v621, %v630
    %v635 = vadd.f32 %v611, %v631
    %v636 = vadd.f32 %v612, %v632
    %v637 = vadd.f32 %v613, %v633
    %v638 = vadd.f32 %v614, %v634
    %v639 = vmul.f32 %v593, %v626
    %v640 = vmul.f32 %v597, %v626
    %v641 = vmul.f32 %v593, %v630
    %v642 = vmul.f32 %v597, %v630
    %v643 = vadd.f32 %v584, %v639
    %v644 = vadd.f32 %v589, %v640
    %v645 = vadd.f32 %v584, %v641
    %v646 = vadd.f32 %v589, %v642
    %v647 = vmul.f32 %v617, %v602
    %v648 = vmul.f32 %v621, %v602
    %v649 = vmul.f32 %v617, %v606
    %v650 = vmul.f32 %v621, %v606
    %655 = vrot.lane.b32.xlu0 %v647, 127
    %v656 = vpop.permute.xlu0 %655
    %657 = vrot.lane.b32.xlu0 %v648, 127
    %v658 = vpop.permute.xlu0 %657
    %659 = vrot.lane.b32.xlu0 %v649, 127
    %v660 = vpop.permute.xlu0 %659
    %661 = vrot.lane.b32.xlu0 %v650, 127
    %v662 = vpop.permute.xlu0 %661
    %v667 = vadd.f32 %v643, %v656
    %v668 = vadd.f32 %v644, %v658
    %v669 = vadd.f32 %v645, %v660
    %v670 = vadd.f32 %v646, %v662
    %671 = vset.pattern.permute.xlu0 2
    %672 = vperm.xlu0 %671, %v579
    %v673 = vpop.permute.xlu0 %672
    %675 = vset.pattern.permute.xlu0 2
    %676 = vperm.xlu0 %675, %v580
    %v677 = vpop.permute.xlu0 %676
    %v679 = vmul.f32 %v673, %v602
    %v680 = vmul.f32 %v677, %v602
    %v681 = vmul.f32 %v673, %v606
    %v682 = vmul.f32 %v677, %v606
    %687 = vrot.lane.b32.xlu0 %v679, 127
    %v688 = vpop.permute.xlu0 %687
    %689 = vrot.lane.b32.xlu0 %v680, 127
    %v690 = vpop.permute.xlu0 %689
    %691 = vrot.lane.b32.xlu0 %v681, 127
    %v692 = vpop.permute.xlu0 %691
    %693 = vrot.lane.b32.xlu0 %v682, 127
    %v694 = vpop.permute.xlu0 %693
    %v699 = vadd.f32 %v635, %v688
    %v700 = vadd.f32 %v636, %v690
    %v701 = vadd.f32 %v637, %v692
    %v702 = vadd.f32 %v638, %v694
    %703 = vset.pattern.permute.xlu0 3
    %704 = vperm.xlu0 %703, %v579
    %v705 = vpop.permute.xlu0 %704
    %707 = vset.pattern.permute.xlu0 3
    %708 = vperm.xlu0 %707, %v580
    %v709 = vpop.permute.xlu0 %708
    %v711 = vmul.f32 %v705, %v626
    %v712 = vmul.f32 %v709, %v626
    %v713 = vmul.f32 %v705, %v630
    %v714 = vmul.f32 %v709, %v630
    %719 = vrot.lane.b32.xlu0 %v711, 127
    %v720 = vpop.permute.xlu0 %719
    %721 = vrot.lane.b32.xlu0 %v712, 127
    %v722 = vpop.permute.xlu0 %721
    %723 = vrot.lane.b32.xlu0 %v713, 127
    %v724 = vpop.permute.xlu0 %723
    %725 = vrot.lane.b32.xlu0 %v714, 127
    %v726 = vpop.permute.xlu0 %725
    %v731 = vadd.f32 %v699, %v720
    %v732 = vadd.f32 %v700, %v722
    %v733 = vadd.f32 %v701, %v724
    %v734 = vadd.f32 %v702, %v726
    %v735 = vmul.f32 %v673, %v626
    %v736 = vmul.f32 %v677, %v626
    %v737 = vmul.f32 %v673, %v630
    %v738 = vmul.f32 %v677, %v630
    %743 = vrot.lane.b32.xlu0 %v735, 127
    %v744 = vpop.permute.xlu0 %743
    %745 = vrot.lane.b32.xlu0 %v736, 127
    %v746 = vpop.permute.xlu0 %745
    %747 = vrot.lane.b32.xlu0 %v737, 127
    %v748 = vpop.permute.xlu0 %747
    %749 = vrot.lane.b32.xlu0 %v738, 127
    %v750 = vpop.permute.xlu0 %749
    %v755 = vadd.f32 %v667, %v744
    %v756 = vadd.f32 %v668, %v746
    %v757 = vadd.f32 %v669, %v748
    %v758 = vadd.f32 %v670, %v750
    %v759 = vmul.f32 %v705, %v602
    %v760 = vmul.f32 %v709, %v602
    %v761 = vmul.f32 %v705, %v606
    %v762 = vmul.f32 %v709, %v606
    %767 = vrot.lane.b32.xlu0 %v759, 126
    %v768 = vpop.permute.xlu0 %767
    %769 = vrot.lane.b32.xlu0 %v760, 126
    %v770 = vpop.permute.xlu0 %769
    %771 = vrot.lane.b32.xlu0 %v761, 126
    %v772 = vpop.permute.xlu0 %771
    %773 = vrot.lane.b32.xlu0 %v762, 126
    %v774 = vpop.permute.xlu0 %773
    %v779 = vadd.f32 %v755, %v768
    %v780 = vadd.f32 %v756, %v770
    %v781 = vadd.f32 %v757, %v772
    %v782 = vadd.f32 %v758, %v774
    %783 = vset.pattern.permute.xlu0 4
    %784 = vperm.xlu0 %783, %v579
    %v785 = vpop.permute.xlu0 %784
    %787 = vset.pattern.permute.xlu0 4
    %788 = vperm.xlu0 %787, %v580
    %v789 = vpop.permute.xlu0 %788
    %v791 = vmul.f32 %v785, %v602
    %v792 = vmul.f32 %v789, %v602
    %v793 = vmul.f32 %v785, %v606
    %v794 = vmul.f32 %v789, %v606
    %799 = vrot.lane.b32.xlu0 %v791, 126
    %v800 = vpop.permute.xlu0 %799
    %801 = vrot.lane.b32.xlu0 %v792, 126
    %v802 = vpop.permute.xlu0 %801
    %803 = vrot.lane.b32.xlu0 %v793, 126
    %v804 = vpop.permute.xlu0 %803
    %805 = vrot.lane.b32.xlu0 %v794, 126
    %v806 = vpop.permute.xlu0 %805
    %v811 = vadd.f32 %v731, %v800
    %v812 = vadd.f32 %v732, %v802
    %v813 = vadd.f32 %v733, %v804
    %v814 = vadd.f32 %v734, %v806
    %815 = vset.pattern.permute.xlu0 5
    %816 = vperm.xlu0 %815, %v579
    %v817 = vpop.permute.xlu0 %816
    %819 = vset.pattern.permute.xlu0 5
    %820 = vperm.xlu0 %819, %v580
    %v821 = vpop.permute.xlu0 %820
    %v823 = vmul.f32 %v817, %v626
    %v824 = vmul.f32 %v821, %v626
    %v825 = vmul.f32 %v817, %v630
    %v826 = vmul.f32 %v821, %v630
    %831 = vrot.lane.b32.xlu0 %v823, 126
    %v832 = vpop.permute.xlu0 %831
    %833 = vrot.lane.b32.xlu0 %v824, 126
    %v834 = vpop.permute.xlu0 %833
    %835 = vrot.lane.b32.xlu0 %v825, 126
    %v836 = vpop.permute.xlu0 %835
    %837 = vrot.lane.b32.xlu0 %v826, 126
    %v838 = vpop.permute.xlu0 %837
    %v843 = vadd.f32 %v811, %v832
    %v844 = vadd.f32 %v812, %v834
    %v845 = vadd.f32 %v813, %v836
    %v846 = vadd.f32 %v814, %v838
    %v847 = vmul.f32 %v785, %v626
    %v848 = vmul.f32 %v789, %v626
    %v849 = vmul.f32 %v785, %v630
    %v850 = vmul.f32 %v789, %v630
    %855 = vrot.lane.b32.xlu0 %v847, 126
    %v856 = vpop.permute.xlu0 %855
    %857 = vrot.lane.b32.xlu0 %v848, 126
    %v858 = vpop.permute.xlu0 %857
    %859 = vrot.lane.b32.xlu0 %v849, 126
    %v860 = vpop.permute.xlu0 %859
    %861 = vrot.lane.b32.xlu0 %v850, 126
    %v862 = vpop.permute.xlu0 %861
    %v867 = vadd.f32 %v779, %v856
    %v868 = vadd.f32 %v780, %v858
    %v869 = vadd.f32 %v781, %v860
    %v870 = vadd.f32 %v782, %v862
    %v871 = vlaneseq
    %v872 = vshrl.u32 %v871, 7
    %v873 = vsub.s32 0, %v872
    %v874 = vrot.slane %v577, %v873
    %v875 = vlaneseq
    %v876 = vshrl.u32 %v875, 7
    %v877 = vsub.s32 0, %v876
    %v878 = vrot.slane %v578, %v877
    %v879 = vmul.f32 %v817, %v874
    %v880 = vmul.f32 %v821, %v874
    %v881 = vmul.f32 %v817, %v878
    %v882 = vmul.f32 %v821, %v878
    %887 = vrot.lane.b32.xlu0 %v879, 125
    %v888 = vpop.permute.xlu0 %887
    %889 = vrot.lane.b32.xlu0 %v880, 125
    %v890 = vpop.permute.xlu0 %889
    %891 = vrot.lane.b32.xlu0 %v881, 125
    %v892 = vpop.permute.xlu0 %891
    %893 = vrot.lane.b32.xlu0 %v882, 125
    %v894 = vpop.permute.xlu0 %893
    %v899 = vadd.f32 %v867, %v888
    %v900 = vadd.f32 %v868, %v890
    %v901 = vadd.f32 %v869, %v892
    %v902 = vadd.f32 %v870, %v894
    %903 = vset.pattern.permute.xlu0 6
    %904 = vperm.xlu0 %903, %v579
    %v905 = vpop.permute.xlu0 %904
    %907 = vset.pattern.permute.xlu0 6
    %908 = vperm.xlu0 %907, %v580
    %v909 = vpop.permute.xlu0 %908
    %v911 = vlaneseq
    %v912 = vshrl.u32 %v911, 7
    %v913 = vsub.s32 1, %v912
    %v914 = vrot.slane %v573, %v913
    %v915 = vlaneseq
    %v916 = vshrl.u32 %v915, 7
    %v917 = vsub.s32 1, %v916
    %v918 = vrot.slane %v575, %v917
    %v919 = vmul.f32 %v905, %v914
    %v920 = vmul.f32 %v909, %v914
    %v921 = vmul.f32 %v905, %v918
    %v922 = vmul.f32 %v909, %v918
    %v923 = vadd.f32 %v843, %v919
    %v924 = vadd.f32 %v844, %v920
    %v925 = vadd.f32 %v845, %v921
    %v926 = vadd.f32 %v846, %v922
    %927 = vset.pattern.permute.xlu0 7
    %928 = vperm.xlu0 %927, %v579
    %v929 = vpop.permute.xlu0 %928
    %931 = vset.pattern.permute.xlu0 7
    %932 = vperm.xlu0 %931, %v580
    %v933 = vpop.permute.xlu0 %932
    %v935 = vlaneseq
    %v936 = vshrl.u32 %v935, 7
    %v937 = vsub.s32 1, %v936
    %v938 = vrot.slane %v574, %v937
    %v939 = vlaneseq
    %v940 = vshrl.u32 %v939, 7
    %v941 = vsub.s32 1, %v940
    %v942 = vrot.slane %v576, %v941
    %v943 = vmul.f32 %v929, %v938
    %v944 = vmul.f32 %v933, %v938
    %v945 = vmul.f32 %v929, %v942
    %v946 = vmul.f32 %v933, %v942
    %v947 = vadd.f32 %v923, %v943
    %v948 = vadd.f32 %v924, %v944
    %v949 = vadd.f32 %v925, %v945
    %v950 = vadd.f32 %v926, %v946
    %v951 = vmul.f32 %v905, %v938
    %v952 = vmul.f32 %v909, %v938
    %v953 = vmul.f32 %v905, %v942
    %v954 = vmul.f32 %v909, %v942
    %v955 = vadd.f32 %v899, %v951
    %v956 = vadd.f32 %v900, %v952
    %v957 = vadd.f32 %v901, %v953
    %v958 = vadd.f32 %v902, %v954
    %v959 = vmul.f32 %v929, %v914
    %v960 = vmul.f32 %v933, %v914
    %v961 = vmul.f32 %v929, %v918
    %v962 = vmul.f32 %v933, %v918
    %967 = vrot.lane.b32.xlu0 %v959, 127
    %v968 = vpop.permute.xlu0 %967
    %969 = vrot.lane.b32.xlu0 %v960, 127
    %v970 = vpop.permute.xlu0 %969
    %971 = vrot.lane.b32.xlu0 %v961, 127
    %v972 = vpop.permute.xlu0 %971
    %973 = vrot.lane.b32.xlu0 %v962, 127
    %v974 = vpop.permute.xlu0 %973
    %v979 = vadd.f32 %v955, %v968
    %v980 = vadd.f32 %v956, %v970
    %v981 = vadd.f32 %v957, %v972
    %v982 = vadd.f32 %v958, %v974
    %983 = vset.pattern.permute.xlu0 8
    %984 = vperm.xlu0 %983, %v579
    %v985 = vpop.permute.xlu0 %984
    %987 = vset.pattern.permute.xlu0 8
    %988 = vperm.xlu0 %987, %v580
    %v989 = vpop.permute.xlu0 %988
    %v991 = vmul.f32 %v985, %v914
    %v992 = vmul.f32 %v989, %v914
    %v993 = vmul.f32 %v985, %v918
    %v994 = vmul.f32 %v989, %v918
    %999 = vrot.lane.b32.xlu0 %v991, 127
    %v1000 = vpop.permute.xlu0 %999
    %1001 = vrot.lane.b32.xlu0 %v992, 127
    %v1002 = vpop.permute.xlu0 %1001
    %1003 = vrot.lane.b32.xlu0 %v993, 127
    %v1004 = vpop.permute.xlu0 %1003
    %1005 = vrot.lane.b32.xlu0 %v994, 127
    %v1006 = vpop.permute.xlu0 %1005
    %v1011 = vadd.f32 %v947, %v1000
    %v1012 = vadd.f32 %v948, %v1002
    %v1013 = vadd.f32 %v949, %v1004
    %v1014 = vadd.f32 %v950, %v1006
    %1015 = vset.pattern.permute.xlu0 9
    %1016 = vperm.xlu0 %1015, %v579
    %v1017 = vpop.permute.xlu0 %1016
    %1019 = vset.pattern.permute.xlu0 9
    %1020 = vperm.xlu0 %1019, %v580
    %v1021 = vpop.permute.xlu0 %1020
    %v1023 = vmul.f32 %v1017, %v938
    %v1024 = vmul.f32 %v1021, %v938
    %v1025 = vmul.f32 %v1017, %v942
    %v1026 = vmul.f32 %v1021, %v942
    %1031 = vrot.lane.b32.xlu0 %v1023, 127
    %v1032 = vpop.permute.xlu0 %1031
    %1033 = vrot.lane.b32.xlu0 %v1024, 127
    %v1034 = vpop.permute.xlu0 %1033
    %1035 = vrot.lane.b32.xlu0 %v1025, 127
    %v1036 = vpop.permute.xlu0 %1035
    %1037 = vrot.lane.b32.xlu0 %v1026, 127
    %v1038 = vpop.permute.xlu0 %1037
    %v1043 = vadd.f32 %v1011, %v1032
    %v1044 = vadd.f32 %v1012, %v1034
    %v1045 = vadd.f32 %v1013, %v1036
    %v1046 = vadd.f32 %v1014, %v1038
    %v1047 = vmul.f32 %v985, %v938
    %v1048 = vmul.f32 %v989, %v938
    %v1049 = vmul.f32 %v985, %v942
    %v1050 = vmul.f32 %v989, %v942
    %1055 = vrot.lane.b32.xlu0 %v1047, 127
    %v1056 = vpop.permute.xlu0 %1055
    %1057 = vrot.lane.b32.xlu0 %v1048, 127
    %v1058 = vpop.permute.xlu0 %1057
    %1059 = vrot.lane.b32.xlu0 %v1049, 127
    %v1060 = vpop.permute.xlu0 %1059
    %1061 = vrot.lane.b32.xlu0 %v1050, 127
    %v1062 = vpop.permute.xlu0 %1061
    %v1067 = vadd.f32 %v979, %v1056
    %v1068 = vadd.f32 %v980, %v1058
    %v1069 = vadd.f32 %v981, %v1060
    %v1070 = vadd.f32 %v982, %v1062
    %v1071 = vmul.f32 %v1017, %v914
    %v1072 = vmul.f32 %v1021, %v914
    %v1073 = vmul.f32 %v1017, %v918
    %v1074 = vmul.f32 %v1021, %v918
    %1079 = vrot.lane.b32.xlu0 %v1071, 126
    %v1080 = vpop.permute.xlu0 %1079
    %1081 = vrot.lane.b32.xlu0 %v1072, 126
    %v1082 = vpop.permute.xlu0 %1081
    %1083 = vrot.lane.b32.xlu0 %v1073, 126
    %v1084 = vpop.permute.xlu0 %1083
    %1085 = vrot.lane.b32.xlu0 %v1074, 126
    %v1086 = vpop.permute.xlu0 %1085
    %v1091 = vadd.f32 %v1067, %v1080
    %v1092 = vadd.f32 %v1068, %v1082
    %v1093 = vadd.f32 %v1069, %v1084
    %v1094 = vadd.f32 %v1070, %v1086
    %1095 = vset.pattern.permute.xlu0 10
    %1096 = vperm.xlu0 %1095, %v579
    %v1097 = vpop.permute.xlu0 %1096
    %1099 = vset.pattern.permute.xlu0 10
    %1100 = vperm.xlu0 %1099, %v580
    %v1101 = vpop.permute.xlu0 %1100
    %v1103 = vmul.f32 %v1097, %v914
    %v1104 = vmul.f32 %v1101, %v914
    %v1105 = vmul.f32 %v1097, %v918
    %v1106 = vmul.f32 %v1101, %v918
    %1111 = vrot.lane.b32.xlu0 %v1103, 126
    %v1112 = vpop.permute.xlu0 %1111
    %1113 = vrot.lane.b32.xlu0 %v1104, 126
    %v1114 = vpop.permute.xlu0 %1113
    %1115 = vrot.lane.b32.xlu0 %v1105, 126
    %v1116 = vpop.permute.xlu0 %1115
    %1117 = vrot.lane.b32.xlu0 %v1106, 126
    %v1118 = vpop.permute.xlu0 %1117
    %v1123 = vadd.f32 %v1043, %v1112
    %v1124 = vadd.f32 %v1044, %v1114
    %v1125 = vadd.f32 %v1045, %v1116
    %v1126 = vadd.f32 %v1046, %v1118
    %1127 = vset.pattern.permute.xlu0 11
    %1128 = vperm.xlu0 %1127, %v579
    %v1129 = vpop.permute.xlu0 %1128
    %1131 = vset.pattern.permute.xlu0 11
    %1132 = vperm.xlu0 %1131, %v580
    %v1133 = vpop.permute.xlu0 %1132
    %v1135 = vmul.f32 %v1129, %v938
    %v1136 = vmul.f32 %v1133, %v938
    %v1137 = vmul.f32 %v1129, %v942
    %v1138 = vmul.f32 %v1133, %v942
    %1143 = vrot.lane.b32.xlu0 %v1135, 126
    %v1144 = vpop.permute.xlu0 %1143
    %1145 = vrot.lane.b32.xlu0 %v1136, 126
    %v1146 = vpop.permute.xlu0 %1145
    %1147 = vrot.lane.b32.xlu0 %v1137, 126
    %v1148 = vpop.permute.xlu0 %1147
    %1149 = vrot.lane.b32.xlu0 %v1138, 126
    %v1150 = vpop.permute.xlu0 %1149
    %v1155 = vadd.f32 %v1123, %v1144
    %v1156 = vadd.f32 %v1124, %v1146
    %v1157 = vadd.f32 %v1125, %v1148
    %v1158 = vadd.f32 %v1126, %v1150
    %v1159 = vmul.f32 %v1097, %v938
    %v1160 = vmul.f32 %v1101, %v938
    %v1161 = vmul.f32 %v1097, %v942
    %v1162 = vmul.f32 %v1101, %v942
    %1167 = vrot.lane.b32.xlu0 %v1159, 126
    %v1168 = vpop.permute.xlu0 %1167
    %1169 = vrot.lane.b32.xlu0 %v1160, 126
    %v1170 = vpop.permute.xlu0 %1169
    %1171 = vrot.lane.b32.xlu0 %v1161, 126
    %v1172 = vpop.permute.xlu0 %1171
    %1173 = vrot.lane.b32.xlu0 %v1162, 126
    %v1174 = vpop.permute.xlu0 %1173
    %v1179 = vadd.f32 %v1091, %v1168
    %v1180 = vadd.f32 %v1092, %v1170
    %v1181 = vadd.f32 %v1093, %v1172
    %v1182 = vadd.f32 %v1094, %v1174
    %v1183 = vlaneseq
    %v1184 = vshrl.u32 %v1183, 7
    %v1185 = vsub.s32 1, %v1184
    %v1186 = vrot.slane %v577, %v1185
    %v1187 = vlaneseq
    %v1188 = vshrl.u32 %v1187, 7
    %v1189 = vsub.s32 1, %v1188
    %v1190 = vrot.slane %v578, %v1189
    %v1191 = vmul.f32 %v1129, %v1186
    %v1192 = vmul.f32 %v1133, %v1186
    %v1193 = vmul.f32 %v1129, %v1190
    %v1194 = vmul.f32 %v1133, %v1190
    %1199 = vrot.lane.b32.xlu0 %v1191, 125
    %v1200 = vpop.permute.xlu0 %1199
    %1201 = vrot.lane.b32.xlu0 %v1192, 125
    %v1202 = vpop.permute.xlu0 %1201
    %1203 = vrot.lane.b32.xlu0 %v1193, 125
    %v1204 = vpop.permute.xlu0 %1203
    %1205 = vrot.lane.b32.xlu0 %v1194, 125
    %v1206 = vpop.permute.xlu0 %1205
    %v1211 = vadd.f32 %v1179, %v1200
    %v1212 = vadd.f32 %v1180, %v1202
    %v1213 = vadd.f32 %v1181, %v1204
    %v1214 = vadd.f32 %v1182, %v1206
    %1215 = vset.pattern.permute.xlu0 12
    %1216 = vperm.xlu0 %1215, %v579
    %v1217 = vpop.permute.xlu0 %1216
    %1219 = vset.pattern.permute.xlu0 12
    %1220 = vperm.xlu0 %1219, %v580
    %v1221 = vpop.permute.xlu0 %1220
    %v1223 = vlaneseq
    %v1224 = vshrl.u32 %v1223, 7
    %v1225 = vsub.s32 2, %v1224
    %v1226 = vrot.slane %v573, %v1225
    %v1227 = vlaneseq
    %v1228 = vshrl.u32 %v1227, 7
    %v1229 = vsub.s32 2, %v1228
    %v1230 = vrot.slane %v575, %v1229
    %v1231 = vmul.f32 %v1217, %v1226
    %v1232 = vmul.f32 %v1221, %v1226
    %v1233 = vmul.f32 %v1217, %v1230
    %v1234 = vmul.f32 %v1221, %v1230
    %v1235 = vadd.f32 %v1155, %v1231
    %v1236 = vadd.f32 %v1156, %v1232
    %v1237 = vadd.f32 %v1157, %v1233
    %v1238 = vadd.f32 %v1158, %v1234
    %1239 = vset.pattern.permute.xlu0 13
    %1240 = vperm.xlu0 %1239, %v579
    %v1241 = vpop.permute.xlu0 %1240
    %1243 = vset.pattern.permute.xlu0 13
    %1244 = vperm.xlu0 %1243, %v580
    %v1245 = vpop.permute.xlu0 %1244
    %v1247 = vlaneseq
    %v1248 = vshrl.u32 %v1247, 7
    %v1249 = vsub.s32 2, %v1248
    %v1250 = vrot.slane %v574, %v1249
    %v1251 = vlaneseq
    %v1252 = vshrl.u32 %v1251, 7
    %v1253 = vsub.s32 2, %v1252
    %v1254 = vrot.slane %v576, %v1253
    %v1255 = vmul.f32 %v1241, %v1250
    %v1256 = vmul.f32 %v1245, %v1250
    %v1257 = vmul.f32 %v1241, %v1254
    %v1258 = vmul.f32 %v1245, %v1254
    %v1259 = vadd.f32 %v1235, %v1255
    %v1260 = vadd.f32 %v1236, %v1256
    %v1261 = vadd.f32 %v1237, %v1257
    %v1262 = vadd.f32 %v1238, %v1258
    %v1263 = vmul.f32 %v1217, %v1250
    %v1264 = vmul.f32 %v1221, %v1250
    %v1265 = vmul.f32 %v1217, %v1254
    %v1266 = vmul.f32 %v1221, %v1254
    %v1267 = vadd.f32 %v1211, %v1263
    %v1268 = vadd.f32 %v1212, %v1264
    %v1269 = vadd.f32 %v1213, %v1265
    %v1270 = vadd.f32 %v1214, %v1266
    %v1271 = vmul.f32 %v1241, %v1226
    %v1272 = vmul.f32 %v1245, %v1226
    %v1273 = vmul.f32 %v1241, %v1230
    %v1274 = vmul.f32 %v1245, %v1230
    %1279 = vrot.lane.b32.xlu0 %v1271, 127
    %v1280 = vpop.permute.xlu0 %1279
    %1281 = vrot.lane.b32.xlu0 %v1272, 127
    %v1282 = vpop.permute.xlu0 %1281
    %1283 = vrot.lane.b32.xlu0 %v1273, 127
    %v1284 = vpop.permute.xlu0 %1283
    %1285 = vrot.lane.b32.xlu0 %v1274, 127
    %v1286 = vpop.permute.xlu0 %1285
    %v1291 = vadd.f32 %v1267, %v1280
    %v1292 = vadd.f32 %v1268, %v1282
    %v1293 = vadd.f32 %v1269, %v1284
    %v1294 = vadd.f32 %v1270, %v1286
    %1295 = vset.pattern.permute.xlu0 14
    %1296 = vperm.xlu0 %1295, %v579
    %v1297 = vpop.permute.xlu0 %1296
    %1299 = vset.pattern.permute.xlu0 14
    %1300 = vperm.xlu0 %1299, %v580
    %v1301 = vpop.permute.xlu0 %1300
    %v1303 = vmul.f32 %v1297, %v1226
    %v1304 = vmul.f32 %v1301, %v1226
    %v1305 = vmul.f32 %v1297, %v1230
    %v1306 = vmul.f32 %v1301, %v1230
    %1311 = vrot.lane.b32.xlu0 %v1303, 127
    %v1312 = vpop.permute.xlu0 %1311
    %1313 = vrot.lane.b32.xlu0 %v1304, 127
    %v1314 = vpop.permute.xlu0 %1313
    %1315 = vrot.lane.b32.xlu0 %v1305, 127
    %v1316 = vpop.permute.xlu0 %1315
    %1317 = vrot.lane.b32.xlu0 %v1306, 127
    %v1318 = vpop.permute.xlu0 %1317
    %v1323 = vadd.f32 %v1259, %v1312
    %v1324 = vadd.f32 %v1260, %v1314
    %v1325 = vadd.f32 %v1261, %v1316
    %v1326 = vadd.f32 %v1262, %v1318
    %1327 = vset.pattern.permute.xlu0 15
    %1328 = vperm.xlu0 %1327, %v579
    %v1329 = vpop.permute.xlu0 %1328
    %1331 = vset.pattern.permute.xlu0 15
    %1332 = vperm.xlu0 %1331, %v580
    %v1333 = vpop.permute.xlu0 %1332
    %v1335 = vmul.f32 %v1329, %v1250
    %v1336 = vmul.f32 %v1333, %v1250
    %v1337 = vmul.f32 %v1329, %v1254
    %v1338 = vmul.f32 %v1333, %v1254
    %1343 = vrot.lane.b32.xlu0 %v1335, 127
    %v1344 = vpop.permute.xlu0 %1343
    %1345 = vrot.lane.b32.xlu0 %v1336, 127
    %v1346 = vpop.permute.xlu0 %1345
    %1347 = vrot.lane.b32.xlu0 %v1337, 127
    %v1348 = vpop.permute.xlu0 %1347
    %1349 = vrot.lane.b32.xlu0 %v1338, 127
    %v1350 = vpop.permute.xlu0 %1349
    %v1355 = vadd.f32 %v1323, %v1344
    %v1356 = vadd.f32 %v1324, %v1346
    %v1357 = vadd.f32 %v1325, %v1348
    %v1358 = vadd.f32 %v1326, %v1350
    %v1359 = vmul.f32 %v1297, %v1250
    %v1360 = vmul.f32 %v1301, %v1250
    %v1361 = vmul.f32 %v1297, %v1254
    %v1362 = vmul.f32 %v1301, %v1254
    %1367 = vrot.lane.b32.xlu0 %v1359, 127
    %v1368 = vpop.permute.xlu0 %1367
    %1369 = vrot.lane.b32.xlu0 %v1360, 127
    %v1370 = vpop.permute.xlu0 %1369
    %1371 = vrot.lane.b32.xlu0 %v1361, 127
    %v1372 = vpop.permute.xlu0 %1371
    %1373 = vrot.lane.b32.xlu0 %v1362, 127
    %v1374 = vpop.permute.xlu0 %1373
    %v1379 = vadd.f32 %v1291, %v1368
    %v1380 = vadd.f32 %v1292, %v1370
    %v1381 = vadd.f32 %v1293, %v1372
    %v1382 = vadd.f32 %v1294, %v1374
    %v1383 = vmul.f32 %v1329, %v1226
    %v1384 = vmul.f32 %v1333, %v1226
    %v1385 = vmul.f32 %v1329, %v1230
    %v1386 = vmul.f32 %v1333, %v1230
    %1391 = vrot.lane.b32.xlu0 %v1383, 126
    %v1392 = vpop.permute.xlu0 %1391
    %1393 = vrot.lane.b32.xlu0 %v1384, 126
    %v1394 = vpop.permute.xlu0 %1393
    %1395 = vrot.lane.b32.xlu0 %v1385, 126
    %v1396 = vpop.permute.xlu0 %1395
    %1397 = vrot.lane.b32.xlu0 %v1386, 126
    %v1398 = vpop.permute.xlu0 %1397
    %v1403 = vadd.f32 %v1379, %v1392
    %v1404 = vadd.f32 %v1380, %v1394
    %v1405 = vadd.f32 %v1381, %v1396
    %v1406 = vadd.f32 %v1382, %v1398
    %1407 = vset.pattern.permute.xlu0 16
    %1408 = vperm.xlu0 %1407, %v579
    %v1409 = vpop.permute.xlu0 %1408
    %1411 = vset.pattern.permute.xlu0 16
    %1412 = vperm.xlu0 %1411, %v580
    %v1413 = vpop.permute.xlu0 %1412
    %v1415 = vmul.f32 %v1409, %v1226
    %v1416 = vmul.f32 %v1413, %v1226
    %v1417 = vmul.f32 %v1409, %v1230
    %v1418 = vmul.f32 %v1413, %v1230
    %1423 = vrot.lane.b32.xlu0 %v1415, 126
    %v1424 = vpop.permute.xlu0 %1423
    %1425 = vrot.lane.b32.xlu0 %v1416, 126
    %v1426 = vpop.permute.xlu0 %1425
    %1427 = vrot.lane.b32.xlu0 %v1417, 126
    %v1428 = vpop.permute.xlu0 %1427
    %1429 = vrot.lane.b32.xlu0 %v1418, 126
    %v1430 = vpop.permute.xlu0 %1429
    %v1435 = vadd.f32 %v1355, %v1424
    %v1436 = vadd.f32 %v1356, %v1426
    %v1437 = vadd.f32 %v1357, %v1428
    %v1438 = vadd.f32 %v1358, %v1430
    %1439 = vset.pattern.permute.xlu0 17
    %1440 = vperm.xlu0 %1439, %v579
    %v1441 = vpop.permute.xlu0 %1440
    %1443 = vset.pattern.permute.xlu0 17
    %1444 = vperm.xlu0 %1443, %v580
    %v1445 = vpop.permute.xlu0 %1444
    %v1447 = vmul.f32 %v1441, %v1250
    %v1448 = vmul.f32 %v1445, %v1250
    %v1449 = vmul.f32 %v1441, %v1254
    %v1450 = vmul.f32 %v1445, %v1254
    %1455 = vrot.lane.b32.xlu0 %v1447, 126
    %v1456 = vpop.permute.xlu0 %1455
    %1457 = vrot.lane.b32.xlu0 %v1448, 126
    %v1458 = vpop.permute.xlu0 %1457
    %1459 = vrot.lane.b32.xlu0 %v1449, 126
    %v1460 = vpop.permute.xlu0 %1459
    %1461 = vrot.lane.b32.xlu0 %v1450, 126
    %v1462 = vpop.permute.xlu0 %1461
    %v1467 = vadd.f32 %v1435, %v1456
    %v1468 = vadd.f32 %v1436, %v1458
    %v1469 = vadd.f32 %v1437, %v1460
    %v1470 = vadd.f32 %v1438, %v1462
    %v1471 = vmul.f32 %v1409, %v1250
    %v1472 = vmul.f32 %v1413, %v1250
    %v1473 = vmul.f32 %v1409, %v1254
    %v1474 = vmul.f32 %v1413, %v1254
    %1479 = vrot.lane.b32.xlu0 %v1471, 126
    %v1480 = vpop.permute.xlu0 %1479
    %1481 = vrot.lane.b32.xlu0 %v1472, 126
    %v1482 = vpop.permute.xlu0 %1481
    %1483 = vrot.lane.b32.xlu0 %v1473, 126
    %v1484 = vpop.permute.xlu0 %1483
    %1485 = vrot.lane.b32.xlu0 %v1474, 126
    %v1486 = vpop.permute.xlu0 %1485
    %v1491 = vadd.f32 %v1403, %v1480
    %v1492 = vadd.f32 %v1404, %v1482
    %v1493 = vadd.f32 %v1405, %v1484
    %v1494 = vadd.f32 %v1406, %v1486
    %v1495 = vlaneseq
    %v1496 = vshrl.u32 %v1495, 7
    %v1497 = vsub.s32 2, %v1496
    %v1498 = vrot.slane %v577, %v1497
    %v1499 = vlaneseq
    %v1500 = vshrl.u32 %v1499, 7
    %v1501 = vsub.s32 2, %v1500
    %v1502 = vrot.slane %v578, %v1501
    %v1503 = vmul.f32 %v1441, %v1498
    %v1504 = vmul.f32 %v1445, %v1498
    %v1505 = vmul.f32 %v1441, %v1502
    %v1506 = vmul.f32 %v1445, %v1502
    %1511 = vrot.lane.b32.xlu0 %v1503, 125
    %v1512 = vpop.permute.xlu0 %1511
    %1513 = vrot.lane.b32.xlu0 %v1504, 125
    %v1514 = vpop.permute.xlu0 %1513
    %1515 = vrot.lane.b32.xlu0 %v1505, 125
    %v1516 = vpop.permute.xlu0 %1515
    %1517 = vrot.lane.b32.xlu0 %v1506, 125
    %v1518 = vpop.permute.xlu0 %1517
    %v1523 = vadd.f32 %v1491, %v1512
    %v1524 = vadd.f32 %v1492, %v1514
    %v1525 = vadd.f32 %v1493, %v1516
    %v1526 = vadd.f32 %v1494, %v1518
    %1527 = vset.pattern.permute.xlu0 18
    %1528 = vperm.xlu0 %1527, %v579
    %v1529 = vpop.permute.xlu0 %1528
    %1531 = vset.pattern.permute.xlu0 18
    %1532 = vperm.xlu0 %1531, %v580
    %v1533 = vpop.permute.xlu0 %1532
    %v1535 = vlaneseq
    %v1536 = vshrl.u32 %v1535, 7
    %v1537 = vsub.s32 3, %v1536
    %v1538 = vrot.slane %v573, %v1537
    %v1539 = vlaneseq
    %v1540 = vshrl.u32 %v1539, 7
    %v1541 = vsub.s32 3, %v1540
    %v1542 = vrot.slane %v575, %v1541
    %v1543 = vmul.f32 %v1529, %v1538
    %v1544 = vmul.f32 %v1533, %v1538
    %v1545 = vmul.f32 %v1529, %v1542
    %v1546 = vmul.f32 %v1533, %v1542
    %v1547 = vadd.f32 %v1467, %v1543
    %v1548 = vadd.f32 %v1468, %v1544
    %v1549 = vadd.f32 %v1469, %v1545
    %v1550 = vadd.f32 %v1470, %v1546
    %1551 = vset.pattern.permute.xlu0 19
    %1552 = vperm.xlu0 %1551, %v579
    %v1553 = vpop.permute.xlu0 %1552
    %1555 = vset.pattern.permute.xlu0 19
    %1556 = vperm.xlu0 %1555, %v580
    %v1557 = vpop.permute.xlu0 %1556
    %v1559 = vlaneseq
    %v1560 = vshrl.u32 %v1559, 7
    %v1561 = vsub.s32 3, %v1560
    %v1562 = vrot.slane %v574, %v1561
    %v1563 = vlaneseq
    %v1564 = vshrl.u32 %v1563, 7
    %v1565 = vsub.s32 3, %v1564
    %v1566 = vrot.slane %v576, %v1565
    %v1567 = vmul.f32 %v1553, %v1562
    %v1568 = vmul.f32 %v1557, %v1562
    %v1569 = vmul.f32 %v1553, %v1566
    %v1570 = vmul.f32 %v1557, %v1566
    %v1571 = vadd.f32 %v1547, %v1567
    %v1572 = vadd.f32 %v1548, %v1568
    %v1573 = vadd.f32 %v1549, %v1569
    %v1574 = vadd.f32 %v1550, %v1570
    %v1575 = vmul.f32 %v1529, %v1562
    %v1576 = vmul.f32 %v1533, %v1562
    %v1577 = vmul.f32 %v1529, %v1566
    %v1578 = vmul.f32 %v1533, %v1566
    %v1579 = vadd.f32 %v1523, %v1575
    %v1580 = vadd.f32 %v1524, %v1576
    %v1581 = vadd.f32 %v1525, %v1577
    %v1582 = vadd.f32 %v1526, %v1578
    %v1583 = vmul.f32 %v1553, %v1538
    %v1584 = vmul.f32 %v1557, %v1538
    %v1585 = vmul.f32 %v1553, %v1542
    %v1586 = vmul.f32 %v1557, %v1542
    %1591 = vrot.lane.b32.xlu0 %v1583, 127
    %v1592 = vpop.permute.xlu0 %1591
    %1593 = vrot.lane.b32.xlu0 %v1584, 127
    %v1594 = vpop.permute.xlu0 %1593
    %1595 = vrot.lane.b32.xlu0 %v1585, 127
    %v1596 = vpop.permute.xlu0 %1595
    %1597 = vrot.lane.b32.xlu0 %v1586, 127
    %v1598 = vpop.permute.xlu0 %1597
    %v1603 = vadd.f32 %v1579, %v1592
    %v1604 = vadd.f32 %v1580, %v1594
    %v1605 = vadd.f32 %v1581, %v1596
    %v1606 = vadd.f32 %v1582, %v1598
    %1607 = vset.pattern.permute.xlu0 20
    %1608 = vperm.xlu0 %1607, %v579
    %v1609 = vpop.permute.xlu0 %1608
    %1611 = vset.pattern.permute.xlu0 20
    %1612 = vperm.xlu0 %1611, %v580
    %v1613 = vpop.permute.xlu0 %1612
    %v1615 = vmul.f32 %v1609, %v1538
    %v1616 = vmul.f32 %v1613, %v1538
    %v1617 = vmul.f32 %v1609, %v1542
    %v1618 = vmul.f32 %v1613, %v1542
    %1623 = vrot.lane.b32.xlu0 %v1615, 127
    %v1624 = vpop.permute.xlu0 %1623
    %1625 = vrot.lane.b32.xlu0 %v1616, 127
    %v1626 = vpop.permute.xlu0 %1625
    %1627 = vrot.lane.b32.xlu0 %v1617, 127
    %v1628 = vpop.permute.xlu0 %1627
    %1629 = vrot.lane.b32.xlu0 %v1618, 127
    %v1630 = vpop.permute.xlu0 %1629
    %v1635 = vadd.f32 %v1571, %v1624
    %v1636 = vadd.f32 %v1572, %v1626
    %v1637 = vadd.f32 %v1573, %v1628
    %v1638 = vadd.f32 %v1574, %v1630
    %1639 = vset.pattern.permute.xlu0 21
    %1640 = vperm.xlu0 %1639, %v579
    %v1641 = vpop.permute.xlu0 %1640
    %1643 = vset.pattern.permute.xlu0 21
    %1644 = vperm.xlu0 %1643, %v580
    %v1645 = vpop.permute.xlu0 %1644
    %v1647 = vmul.f32 %v1641, %v1562
    %v1648 = vmul.f32 %v1645, %v1562
    %v1649 = vmul.f32 %v1641, %v1566
    %v1650 = vmul.f32 %v1645, %v1566
    %1655 = vrot.lane.b32.xlu0 %v1647, 127
    %v1656 = vpop.permute.xlu0 %1655
    %1657 = vrot.lane.b32.xlu0 %v1648, 127
    %v1658 = vpop.permute.xlu0 %1657
    %1659 = vrot.lane.b32.xlu0 %v1649, 127
    %v1660 = vpop.permute.xlu0 %1659
    %1661 = vrot.lane.b32.xlu0 %v1650, 127
    %v1662 = vpop.permute.xlu0 %1661
    %v1667 = vadd.f32 %v1635, %v1656
    %v1668 = vadd.f32 %v1636, %v1658
    %v1669 = vadd.f32 %v1637, %v1660
    %v1670 = vadd.f32 %v1638, %v1662
    %v1671 = vmul.f32 %v1609, %v1562
    %v1672 = vmul.f32 %v1613, %v1562
    %v1673 = vmul.f32 %v1609, %v1566
    %v1674 = vmul.f32 %v1613, %v1566
    %1679 = vrot.lane.b32.xlu0 %v1671, 127
    %v1680 = vpop.permute.xlu0 %1679
    %1681 = vrot.lane.b32.xlu0 %v1672, 127
    %v1682 = vpop.permute.xlu0 %1681
    %1683 = vrot.lane.b32.xlu0 %v1673, 127
    %v1684 = vpop.permute.xlu0 %1683
    %1685 = vrot.lane.b32.xlu0 %v1674, 127
    %v1686 = vpop.permute.xlu0 %1685
    %v1691 = vadd.f32 %v1603, %v1680
    %v1692 = vadd.f32 %v1604, %v1682
    %v1693 = vadd.f32 %v1605, %v1684
    %v1694 = vadd.f32 %v1606, %v1686
    %v1695 = vmul.f32 %v1641, %v1538
    %v1696 = vmul.f32 %v1645, %v1538
    %v1697 = vmul.f32 %v1641, %v1542
    %v1698 = vmul.f32 %v1645, %v1542
    %1703 = vrot.lane.b32.xlu0 %v1695, 126
    %v1704 = vpop.permute.xlu0 %1703
    %1705 = vrot.lane.b32.xlu0 %v1696, 126
    %v1706 = vpop.permute.xlu0 %1705
    %1707 = vrot.lane.b32.xlu0 %v1697, 126
    %v1708 = vpop.permute.xlu0 %1707
    %1709 = vrot.lane.b32.xlu0 %v1698, 126
    %v1710 = vpop.permute.xlu0 %1709
    %v1715 = vadd.f32 %v1691, %v1704
    %v1716 = vadd.f32 %v1692, %v1706
    %v1717 = vadd.f32 %v1693, %v1708
    %v1718 = vadd.f32 %v1694, %v1710
    %1719 = vset.pattern.permute.xlu0 22
    %1720 = vperm.xlu0 %1719, %v579
    %v1721 = vpop.permute.xlu0 %1720
    %1723 = vset.pattern.permute.xlu0 22
    %1724 = vperm.xlu0 %1723, %v580
    %v1725 = vpop.permute.xlu0 %1724
    %v1727 = vmul.f32 %v1721, %v1538
    %v1728 = vmul.f32 %v1725, %v1538
    %v1729 = vmul.f32 %v1721, %v1542
    %v1730 = vmul.f32 %v1725, %v1542
    %1735 = vrot.lane.b32.xlu0 %v1727, 126
    %v1736 = vpop.permute.xlu0 %1735
    %1737 = vrot.lane.b32.xlu0 %v1728, 126
    %v1738 = vpop.permute.xlu0 %1737
    %1739 = vrot.lane.b32.xlu0 %v1729, 126
    %v1740 = vpop.permute.xlu0 %1739
    %1741 = vrot.lane.b32.xlu0 %v1730, 126
    %v1742 = vpop.permute.xlu0 %1741
    %v1747 = vadd.f32 %v1667, %v1736
    %v1748 = vadd.f32 %v1668, %v1738
    %v1749 = vadd.f32 %v1669, %v1740
    %v1750 = vadd.f32 %v1670, %v1742
    %1751 = vset.pattern.permute.xlu0 23
    %1752 = vperm.xlu0 %1751, %v579
    %v1753 = vpop.permute.xlu0 %1752
    %1755 = vset.pattern.permute.xlu0 23
    %1756 = vperm.xlu0 %1755, %v580
    %v1757 = vpop.permute.xlu0 %1756
    %v1759 = vmul.f32 %v1753, %v1562
    %v1760 = vmul.f32 %v1757, %v1562
    %v1761 = vmul.f32 %v1753, %v1566
    %v1762 = vmul.f32 %v1757, %v1566
    %1767 = vrot.lane.b32.xlu0 %v1759, 126
    %v1768 = vpop.permute.xlu0 %1767
    %1769 = vrot.lane.b32.xlu0 %v1760, 126
    %v1770 = vpop.permute.xlu0 %1769
    %1771 = vrot.lane.b32.xlu0 %v1761, 126
    %v1772 = vpop.permute.xlu0 %1771
    %1773 = vrot.lane.b32.xlu0 %v1762, 126
    %v1774 = vpop.permute.xlu0 %1773
    %v1779 = vadd.f32 %v1747, %v1768
    %v1780 = vadd.f32 %v1748, %v1770
    %v1781 = vadd.f32 %v1749, %v1772
    %v1782 = vadd.f32 %v1750, %v1774
    %v1783 = vmul.f32 %v1721, %v1562
    %v1784 = vmul.f32 %v1725, %v1562
    %v1785 = vmul.f32 %v1721, %v1566
    %v1786 = vmul.f32 %v1725, %v1566
    %1791 = vrot.lane.b32.xlu0 %v1783, 126
    %v1792 = vpop.permute.xlu0 %1791
    %1793 = vrot.lane.b32.xlu0 %v1784, 126
    %v1794 = vpop.permute.xlu0 %1793
    %1795 = vrot.lane.b32.xlu0 %v1785, 126
    %v1796 = vpop.permute.xlu0 %1795
    %1797 = vrot.lane.b32.xlu0 %v1786, 126
    %v1798 = vpop.permute.xlu0 %1797
    %v1803 = vadd.f32 %v1715, %v1792
    %v1804 = vadd.f32 %v1716, %v1794
    %v1805 = vadd.f32 %v1717, %v1796
    %v1806 = vadd.f32 %v1718, %v1798
    %v1807 = vlaneseq
    %v1808 = vshrl.u32 %v1807, 7
    %v1809 = vsub.s32 3, %v1808
    %v1810 = vrot.slane %v577, %v1809
    %v1811 = vlaneseq
    %v1812 = vshrl.u32 %v1811, 7
    %v1813 = vsub.s32 3, %v1812
    %v1814 = vrot.slane %v578, %v1813
    %v1815 = vmul.f32 %v1753, %v1810
    %v1816 = vmul.f32 %v1757, %v1810
    %v1817 = vmul.f32 %v1753, %v1814
    %v1818 = vmul.f32 %v1757, %v1814
    %1823 = vrot.lane.b32.xlu0 %v1815, 125
    %v1824 = vpop.permute.xlu0 %1823
    %1825 = vrot.lane.b32.xlu0 %v1816, 125
    %v1826 = vpop.permute.xlu0 %1825
    %1827 = vrot.lane.b32.xlu0 %v1817, 125
    %v1828 = vpop.permute.xlu0 %1827
    %1829 = vrot.lane.b32.xlu0 %v1818, 125
    %v1830 = vpop.permute.xlu0 %1829
    %v1835 = vadd.f32 %v1803, %v1824
    %v1836 = vadd.f32 %v1804, %v1826
    %v1837 = vadd.f32 %v1805, %v1828
    %v1838 = vadd.f32 %v1806, %v1830
    %1839 = vset.pattern.permute.xlu0 24
    %1840 = vperm.xlu0 %1839, %v579
    %v1841 = vpop.permute.xlu0 %1840
    %1843 = vset.pattern.permute.xlu0 24
    %1844 = vperm.xlu0 %1843, %v580
    %v1845 = vpop.permute.xlu0 %1844
    %v1847 = vlaneseq
    %v1848 = vshrl.u32 %v1847, 7
    %v1849 = vsub.s32 4, %v1848
    %v1850 = vrot.slane %v573, %v1849
    %v1851 = vlaneseq
    %v1852 = vshrl.u32 %v1851, 7
    %v1853 = vsub.s32 4, %v1852
    %v1854 = vrot.slane %v575, %v1853
    %v1855 = vmul.f32 %v1841, %v1850
    %v1856 = vmul.f32 %v1845, %v1850
    %v1857 = vmul.f32 %v1841, %v1854
    %v1858 = vmul.f32 %v1845, %v1854
    %v1859 = vadd.f32 %v1779, %v1855
    %v1860 = vadd.f32 %v1780, %v1856
    %v1861 = vadd.f32 %v1781, %v1857
    %v1862 = vadd.f32 %v1782, %v1858
    %1863 = vset.pattern.permute.xlu0 25
    %1864 = vperm.xlu0 %1863, %v579
    %v1865 = vpop.permute.xlu0 %1864
    %1867 = vset.pattern.permute.xlu0 25
    %1868 = vperm.xlu0 %1867, %v580
    %v1869 = vpop.permute.xlu0 %1868
    %v1871 = vlaneseq
    %v1872 = vshrl.u32 %v1871, 7
    %v1873 = vsub.s32 4, %v1872
    %v1874 = vrot.slane %v574, %v1873
    %v1875 = vlaneseq
    %v1876 = vshrl.u32 %v1875, 7
    %v1877 = vsub.s32 4, %v1876
    %v1878 = vrot.slane %v576, %v1877
    %v1879 = vmul.f32 %v1865, %v1874
    %v1880 = vmul.f32 %v1869, %v1874
    %v1881 = vmul.f32 %v1865, %v1878
    %v1882 = vmul.f32 %v1869, %v1878
    %v1883 = vadd.f32 %v1859, %v1879
    %v1884 = vadd.f32 %v1860, %v1880
    %v1885 = vadd.f32 %v1861, %v1881
    %v1886 = vadd.f32 %v1862, %v1882
    %v1887 = vmul.f32 %v1841, %v1874
    %v1888 = vmul.f32 %v1845, %v1874
    %v1889 = vmul.f32 %v1841, %v1878
    %v1890 = vmul.f32 %v1845, %v1878
    %v1891 = vadd.f32 %v1835, %v1887
    %v1892 = vadd.f32 %v1836, %v1888
    %v1893 = vadd.f32 %v1837, %v1889
    %v1894 = vadd.f32 %v1838, %v1890
    %v1895 = vmul.f32 %v1865, %v1850
    %v1896 = vmul.f32 %v1869, %v1850
    %v1897 = vmul.f32 %v1865, %v1854
    %v1898 = vmul.f32 %v1869, %v1854
    %1903 = vrot.lane.b32.xlu0 %v1895, 127
    %v1904 = vpop.permute.xlu0 %1903
    %1905 = vrot.lane.b32.xlu0 %v1896, 127
    %v1906 = vpop.permute.xlu0 %1905
    %1907 = vrot.lane.b32.xlu0 %v1897, 127
    %v1908 = vpop.permute.xlu0 %1907
    %1909 = vrot.lane.b32.xlu0 %v1898, 127
    %v1910 = vpop.permute.xlu0 %1909
    %v1915 = vadd.f32 %v1891, %v1904
    %v1916 = vadd.f32 %v1892, %v1906
    %v1917 = vadd.f32 %v1893, %v1908
    %v1918 = vadd.f32 %v1894, %v1910
    %1919 = vset.pattern.permute.xlu0 26
    %1920 = vperm.xlu0 %1919, %v579
    %v1921 = vpop.permute.xlu0 %1920
    %1923 = vset.pattern.permute.xlu0 26
    %1924 = vperm.xlu0 %1923, %v580
    %v1925 = vpop.permute.xlu0 %1924
    %v1927 = vmul.f32 %v1921, %v1850
    %v1928 = vmul.f32 %v1925, %v1850
    %v1929 = vmul.f32 %v1921, %v1854
    %v1930 = vmul.f32 %v1925, %v1854
    %1935 = vrot.lane.b32.xlu0 %v1927, 127
    %v1936 = vpop.permute.xlu0 %1935
    %1937 = vrot.lane.b32.xlu0 %v1928, 127
    %v1938 = vpop.permute.xlu0 %1937
    %1939 = vrot.lane.b32.xlu0 %v1929, 127
    %v1940 = vpop.permute.xlu0 %1939
    %1941 = vrot.lane.b32.xlu0 %v1930, 127
    %v1942 = vpop.permute.xlu0 %1941
    %v1947 = vadd.f32 %v1883, %v1936
    %v1948 = vadd.f32 %v1884, %v1938
    %v1949 = vadd.f32 %v1885, %v1940
    %v1950 = vadd.f32 %v1886, %v1942
    %1951 = vset.pattern.permute.xlu0 27
    %1952 = vperm.xlu0 %1951, %v579
    %v1953 = vpop.permute.xlu0 %1952
    %1955 = vset.pattern.permute.xlu0 27
    %1956 = vperm.xlu0 %1955, %v580
    %v1957 = vpop.permute.xlu0 %1956
    %v1959 = vmul.f32 %v1953, %v1874
    %v1960 = vmul.f32 %v1957, %v1874
    %v1961 = vmul.f32 %v1953, %v1878
    %v1962 = vmul.f32 %v1957, %v1878
    %1967 = vrot.lane.b32.xlu0 %v1959, 127
    %v1968 = vpop.permute.xlu0 %1967
    %1969 = vrot.lane.b32.xlu0 %v1960, 127
    %v1970 = vpop.permute.xlu0 %1969
    %1971 = vrot.lane.b32.xlu0 %v1961, 127
    %v1972 = vpop.permute.xlu0 %1971
    %1973 = vrot.lane.b32.xlu0 %v1962, 127
    %v1974 = vpop.permute.xlu0 %1973
    %v1979 = vadd.f32 %v1947, %v1968
    %v1980 = vadd.f32 %v1948, %v1970
    %v1981 = vadd.f32 %v1949, %v1972
    %v1982 = vadd.f32 %v1950, %v1974
    %v1983 = vmul.f32 %v1921, %v1874
    %v1984 = vmul.f32 %v1925, %v1874
    %v1985 = vmul.f32 %v1921, %v1878
    %v1986 = vmul.f32 %v1925, %v1878
    %1991 = vrot.lane.b32.xlu0 %v1983, 127
    %v1992 = vpop.permute.xlu0 %1991
    %1993 = vrot.lane.b32.xlu0 %v1984, 127
    %v1994 = vpop.permute.xlu0 %1993
    %1995 = vrot.lane.b32.xlu0 %v1985, 127
    %v1996 = vpop.permute.xlu0 %1995
    %1997 = vrot.lane.b32.xlu0 %v1986, 127
    %v1998 = vpop.permute.xlu0 %1997
    %v2003 = vadd.f32 %v1915, %v1992
    %v2004 = vadd.f32 %v1916, %v1994
    %v2005 = vadd.f32 %v1917, %v1996
    %v2006 = vadd.f32 %v1918, %v1998
    %v2007 = vmul.f32 %v1953, %v1850
    %v2008 = vmul.f32 %v1957, %v1850
    %v2009 = vmul.f32 %v1953, %v1854
    %v2010 = vmul.f32 %v1957, %v1854
    %2015 = vrot.lane.b32.xlu0 %v2007, 126
    %v2016 = vpop.permute.xlu0 %2015
    %2017 = vrot.lane.b32.xlu0 %v2008, 126
    %v2018 = vpop.permute.xlu0 %2017
    %2019 = vrot.lane.b32.xlu0 %v2009, 126
    %v2020 = vpop.permute.xlu0 %2019
    %2021 = vrot.lane.b32.xlu0 %v2010, 126
    %v2022 = vpop.permute.xlu0 %2021
    %v2027 = vadd.f32 %v2003, %v2016
    %v2028 = vadd.f32 %v2004, %v2018
    %v2029 = vadd.f32 %v2005, %v2020
    %v2030 = vadd.f32 %v2006, %v2022
    %2031 = vset.pattern.permute.xlu0 28
    %2032 = vperm.xlu0 %2031, %v579
    %v2033 = vpop.permute.xlu0 %2032
    %2035 = vset.pattern.permute.xlu0 28
    %2036 = vperm.xlu0 %2035, %v580
    %v2037 = vpop.permute.xlu0 %2036
    %v2039 = vmul.f32 %v2033, %v1850
    %v2040 = vmul.f32 %v2037, %v1850
    %v2041 = vmul.f32 %v2033, %v1854
    %v2042 = vmul.f32 %v2037, %v1854
    %2047 = vrot.lane.b32.xlu0 %v2039, 126
    %v2048 = vpop.permute.xlu0 %2047
    %2049 = vrot.lane.b32.xlu0 %v2040, 126
    %v2050 = vpop.permute.xlu0 %2049
    %2051 = vrot.lane.b32.xlu0 %v2041, 126
    %v2052 = vpop.permute.xlu0 %2051
    %2053 = vrot.lane.b32.xlu0 %v2042, 126
    %v2054 = vpop.permute.xlu0 %2053
    %v2059 = vadd.f32 %v1979, %v2048
    %v2060 = vadd.f32 %v1980, %v2050
    %v2061 = vadd.f32 %v1981, %v2052
    %v2062 = vadd.f32 %v1982, %v2054
    %2063 = vset.pattern.permute.xlu0 29
    %2064 = vperm.xlu0 %2063, %v579
    %v2065 = vpop.permute.xlu0 %2064
    %2067 = vset.pattern.permute.xlu0 29
    %2068 = vperm.xlu0 %2067, %v580
    %v2069 = vpop.permute.xlu0 %2068
    %v2071 = vmul.f32 %v2065, %v1874
    %v2072 = vmul.f32 %v2069, %v1874
    %v2073 = vmul.f32 %v2065, %v1878
    %v2074 = vmul.f32 %v2069, %v1878
    %2079 = vrot.lane.b32.xlu0 %v2071, 126
    %v2080 = vpop.permute.xlu0 %2079
    %2081 = vrot.lane.b32.xlu0 %v2072, 126
    %v2082 = vpop.permute.xlu0 %2081
    %2083 = vrot.lane.b32.xlu0 %v2073, 126
    %v2084 = vpop.permute.xlu0 %2083
    %2085 = vrot.lane.b32.xlu0 %v2074, 126
    %v2086 = vpop.permute.xlu0 %2085
    %v2091 = vadd.f32 %v2059, %v2080
    %v2092 = vadd.f32 %v2060, %v2082
    %v2093 = vadd.f32 %v2061, %v2084
    %v2094 = vadd.f32 %v2062, %v2086
    %v2095 = vmul.f32 %v2033, %v1874
    %v2096 = vmul.f32 %v2037, %v1874
    %v2097 = vmul.f32 %v2033, %v1878
    %v2098 = vmul.f32 %v2037, %v1878
    %2103 = vrot.lane.b32.xlu0 %v2095, 126
    %v2104 = vpop.permute.xlu0 %2103
    %2105 = vrot.lane.b32.xlu0 %v2096, 126
    %v2106 = vpop.permute.xlu0 %2105
    %2107 = vrot.lane.b32.xlu0 %v2097, 126
    %v2108 = vpop.permute.xlu0 %2107
    %2109 = vrot.lane.b32.xlu0 %v2098, 126
    %v2110 = vpop.permute.xlu0 %2109
    %v2115 = vadd.f32 %v2027, %v2104
    %v2116 = vadd.f32 %v2028, %v2106
    %v2117 = vadd.f32 %v2029, %v2108
    %v2118 = vadd.f32 %v2030, %v2110
    %v2119 = vlaneseq
    %v2120 = vshrl.u32 %v2119, 7
    %v2121 = vsub.s32 4, %v2120
    %v2122 = vrot.slane %v577, %v2121
    %v2123 = vlaneseq
    %v2124 = vshrl.u32 %v2123, 7
    %v2125 = vsub.s32 4, %v2124
    %v2126 = vrot.slane %v578, %v2125
    %v2127 = vmul.f32 %v2065, %v2122
    %v2128 = vmul.f32 %v2069, %v2122
    %v2129 = vmul.f32 %v2065, %v2126
    %v2130 = vmul.f32 %v2069, %v2126
    %2135 = vrot.lane.b32.xlu0 %v2127, 125
    %v2136 = vpop.permute.xlu0 %2135
    %2137 = vrot.lane.b32.xlu0 %v2128, 125
    %v2138 = vpop.permute.xlu0 %2137
    %2139 = vrot.lane.b32.xlu0 %v2129, 125
    %v2140 = vpop.permute.xlu0 %2139
    %2141 = vrot.lane.b32.xlu0 %v2130, 125
    %v2142 = vpop.permute.xlu0 %2141
    %v2147 = vadd.f32 %v2115, %v2136
    %v2148 = vadd.f32 %v2116, %v2138
    %v2149 = vadd.f32 %v2117, %v2140
    %v2150 = vadd.f32 %v2118, %v2142
    %2151 = vset.pattern.permute.xlu0 30
    %2152 = vperm.xlu0 %2151, %v579
    %v2153 = vpop.permute.xlu0 %2152
    %2155 = vset.pattern.permute.xlu0 30
    %2156 = vperm.xlu0 %2155, %v580
    %v2157 = vpop.permute.xlu0 %2156
    %v2159 = vlaneseq
    %v2160 = vshrl.u32 %v2159, 7
    %v2161 = vsub.s32 5, %v2160
    %v2162 = vrot.slane %v573, %v2161
    %v2163 = vlaneseq
    %v2164 = vshrl.u32 %v2163, 7
    %v2165 = vsub.s32 5, %v2164
    %v2166 = vrot.slane %v575, %v2165
    %v2167 = vmul.f32 %v2153, %v2162
    %v2168 = vmul.f32 %v2157, %v2162
    %v2169 = vmul.f32 %v2153, %v2166
    %v2170 = vmul.f32 %v2157, %v2166
    %v2171 = vadd.f32 %v2091, %v2167
    %v2172 = vadd.f32 %v2092, %v2168
    %v2173 = vadd.f32 %v2093, %v2169
    %v2174 = vadd.f32 %v2094, %v2170
    %2175 = vset.pattern.permute.xlu0 31
    %2176 = vperm.xlu0 %2175, %v579
    %v2177 = vpop.permute.xlu0 %2176
    %2179 = vset.pattern.permute.xlu0 31
    %2180 = vperm.xlu0 %2179, %v580
    %v2181 = vpop.permute.xlu0 %2180
    %v2183 = vlaneseq
    %v2184 = vshrl.u32 %v2183, 7
    %v2185 = vsub.s32 5, %v2184
    %v2186 = vrot.slane %v574, %v2185
    %v2187 = vlaneseq
    %v2188 = vshrl.u32 %v2187, 7
    %v2189 = vsub.s32 5, %v2188
    %v2190 = vrot.slane %v576, %v2189
    %v2191 = vmul.f32 %v2177, %v2186
    %v2192 = vmul.f32 %v2181, %v2186
    %v2193 = vmul.f32 %v2177, %v2190
    %v2194 = vmul.f32 %v2181, %v2190
    %v2195 = vadd.f32 %v2171, %v2191
    %v2196 = vadd.f32 %v2172, %v2192
    %v2197 = vadd.f32 %v2173, %v2193
    %v2198 = vadd.f32 %v2174, %v2194
    %v2199 = vmul.f32 %v2153, %v2186
    %v2200 = vmul.f32 %v2157, %v2186
    %v2201 = vmul.f32 %v2153, %v2190
    %v2202 = vmul.f32 %v2157, %v2190
    %v2203 = vadd.f32 %v2147, %v2199
    %v2204 = vadd.f32 %v2148, %v2200
    %v2205 = vadd.f32 %v2149, %v2201
    %v2206 = vadd.f32 %v2150, %v2202
    %v2207 = vmul.f32 %v2177, %v2162
    %v2208 = vmul.f32 %v2181, %v2162
    %v2209 = vmul.f32 %v2177, %v2166
    %v2210 = vmul.f32 %v2181, %v2166
    %2215 = vrot.lane.b32.xlu0 %v2207, 127
    %v2216 = vpop.permute.xlu0 %2215
    %2217 = vrot.lane.b32.xlu0 %v2208, 127
    %v2218 = vpop.permute.xlu0 %2217
    %2219 = vrot.lane.b32.xlu0 %v2209, 127
    %v2220 = vpop.permute.xlu0 %2219
    %2221 = vrot.lane.b32.xlu0 %v2210, 127
    %v2222 = vpop.permute.xlu0 %2221
    %v2227 = vadd.f32 %v2203, %v2216
    %v2228 = vadd.f32 %v2204, %v2218
    %v2229 = vadd.f32 %v2205, %v2220
    %v2230 = vadd.f32 %v2206, %v2222
    %2231 = vset.pattern.permute.xlu0 32
    %2232 = vperm.xlu0 %2231, %v579
    %v2233 = vpop.permute.xlu0 %2232
    %2235 = vset.pattern.permute.xlu0 32
    %2236 = vperm.xlu0 %2235, %v580
    %v2237 = vpop.permute.xlu0 %2236
    %v2239 = vmul.f32 %v2233, %v2162
    %v2240 = vmul.f32 %v2237, %v2162
    %v2241 = vmul.f32 %v2233, %v2166
    %v2242 = vmul.f32 %v2237, %v2166
    %2247 = vrot.lane.b32.xlu0 %v2239, 127
    %v2248 = vpop.permute.xlu0 %2247
    %2249 = vrot.lane.b32.xlu0 %v2240, 127
    %v2250 = vpop.permute.xlu0 %2249
    %2251 = vrot.lane.b32.xlu0 %v2241, 127
    %v2252 = vpop.permute.xlu0 %2251
    %2253 = vrot.lane.b32.xlu0 %v2242, 127
    %v2254 = vpop.permute.xlu0 %2253
    %v2259 = vadd.f32 %v2195, %v2248
    %v2260 = vadd.f32 %v2196, %v2250
    %v2261 = vadd.f32 %v2197, %v2252
    %v2262 = vadd.f32 %v2198, %v2254
    %2263 = vset.pattern.permute.xlu0 33
    %2264 = vperm.xlu0 %2263, %v579
    %v2265 = vpop.permute.xlu0 %2264
    %2267 = vset.pattern.permute.xlu0 33
    %2268 = vperm.xlu0 %2267, %v580
    %v2269 = vpop.permute.xlu0 %2268
    %v2271 = vmul.f32 %v2265, %v2186
    %v2272 = vmul.f32 %v2269, %v2186
    %v2273 = vmul.f32 %v2265, %v2190
    %v2274 = vmul.f32 %v2269, %v2190
    %2279 = vrot.lane.b32.xlu0 %v2271, 127
    %v2280 = vpop.permute.xlu0 %2279
    %2281 = vrot.lane.b32.xlu0 %v2272, 127
    %v2282 = vpop.permute.xlu0 %2281
    %2283 = vrot.lane.b32.xlu0 %v2273, 127
    %v2284 = vpop.permute.xlu0 %2283
    %2285 = vrot.lane.b32.xlu0 %v2274, 127
    %v2286 = vpop.permute.xlu0 %2285
    %v2291 = vadd.f32 %v2259, %v2280
    %v2292 = vadd.f32 %v2260, %v2282
    %v2293 = vadd.f32 %v2261, %v2284
    %v2294 = vadd.f32 %v2262, %v2286
    %v2295 = vmul.f32 %v2233, %v2186
    %v2296 = vmul.f32 %v2237, %v2186
    %v2297 = vmul.f32 %v2233, %v2190
    %v2298 = vmul.f32 %v2237, %v2190
    %2303 = vrot.lane.b32.xlu0 %v2295, 127
    %v2304 = vpop.permute.xlu0 %2303
    %2305 = vrot.lane.b32.xlu0 %v2296, 127
    %v2306 = vpop.permute.xlu0 %2305
    %2307 = vrot.lane.b32.xlu0 %v2297, 127
    %v2308 = vpop.permute.xlu0 %2307
    %2309 = vrot.lane.b32.xlu0 %v2298, 127
    %v2310 = vpop.permute.xlu0 %2309
    %v2315 = vadd.f32 %v2227, %v2304
    %v2316 = vadd.f32 %v2228, %v2306
    %v2317 = vadd.f32 %v2229, %v2308
    %v2318 = vadd.f32 %v2230, %v2310
    %v2319 = vmul.f32 %v2265, %v2162
    %v2320 = vmul.f32 %v2269, %v2162
    %v2321 = vmul.f32 %v2265, %v2166
    %v2322 = vmul.f32 %v2269, %v2166
    %2327 = vrot.lane.b32.xlu0 %v2319, 126
    %v2328 = vpop.permute.xlu0 %2327
    %2329 = vrot.lane.b32.xlu0 %v2320, 126
    %v2330 = vpop.permute.xlu0 %2329
    %2331 = vrot.lane.b32.xlu0 %v2321, 126
    %v2332 = vpop.permute.xlu0 %2331
    %2333 = vrot.lane.b32.xlu0 %v2322, 126
    %v2334 = vpop.permute.xlu0 %2333
    %v2339 = vadd.f32 %v2315, %v2328
    %v2340 = vadd.f32 %v2316, %v2330
    %v2341 = vadd.f32 %v2317, %v2332
    %v2342 = vadd.f32 %v2318, %v2334
    %2343 = vset.pattern.permute.xlu0 34
    %2344 = vperm.xlu0 %2343, %v579
    %v2345 = vpop.permute.xlu0 %2344
    %2347 = vset.pattern.permute.xlu0 34
    %2348 = vperm.xlu0 %2347, %v580
    %v2349 = vpop.permute.xlu0 %2348
    %v2351 = vmul.f32 %v2345, %v2162
    %v2352 = vmul.f32 %v2349, %v2162
    %v2353 = vmul.f32 %v2345, %v2166
    %v2354 = vmul.f32 %v2349, %v2166
    %2359 = vrot.lane.b32.xlu0 %v2351, 126
    %v2360 = vpop.permute.xlu0 %2359
    %2361 = vrot.lane.b32.xlu0 %v2352, 126
    %v2362 = vpop.permute.xlu0 %2361
    %2363 = vrot.lane.b32.xlu0 %v2353, 126
    %v2364 = vpop.permute.xlu0 %2363
    %2365 = vrot.lane.b32.xlu0 %v2354, 126
    %v2366 = vpop.permute.xlu0 %2365
    %v2371 = vadd.f32 %v2291, %v2360
    %v2372 = vadd.f32 %v2292, %v2362
    %v2373 = vadd.f32 %v2293, %v2364
    %v2374 = vadd.f32 %v2294, %v2366
    %2375 = vset.pattern.permute.xlu0 35
    %2376 = vperm.xlu0 %2375, %v579
    %v2377 = vpop.permute.xlu0 %2376
    %2379 = vset.pattern.permute.xlu0 35
    %2380 = vperm.xlu0 %2379, %v580
    %v2381 = vpop.permute.xlu0 %2380
    %v2383 = vmul.f32 %v2377, %v2186
    %v2384 = vmul.f32 %v2381, %v2186
    %v2385 = vmul.f32 %v2377, %v2190
    %v2386 = vmul.f32 %v2381, %v2190
    %2391 = vrot.lane.b32.xlu0 %v2383, 126
    %v2392 = vpop.permute.xlu0 %2391
    %2393 = vrot.lane.b32.xlu0 %v2384, 126
    %v2394 = vpop.permute.xlu0 %2393
    %2395 = vrot.lane.b32.xlu0 %v2385, 126
    %v2396 = vpop.permute.xlu0 %2395
    %2397 = vrot.lane.b32.xlu0 %v2386, 126
    %v2398 = vpop.permute.xlu0 %2397
    %v2403 = vadd.f32 %v2371, %v2392
    %v2404 = vadd.f32 %v2372, %v2394
    %v2405 = vadd.f32 %v2373, %v2396
    %v2406 = vadd.f32 %v2374, %v2398
    %v2407 = vmul.f32 %v2345, %v2186
    %v2408 = vmul.f32 %v2349, %v2186
    %v2409 = vmul.f32 %v2345, %v2190
    %v2410 = vmul.f32 %v2349, %v2190
    %2415 = vrot.lane.b32.xlu0 %v2407, 126
    %v2416 = vpop.permute.xlu0 %2415
    %2417 = vrot.lane.b32.xlu0 %v2408, 126
    %v2418 = vpop.permute.xlu0 %2417
    %2419 = vrot.lane.b32.xlu0 %v2409, 126
    %v2420 = vpop.permute.xlu0 %2419
    %2421 = vrot.lane.b32.xlu0 %v2410, 126
    %v2422 = vpop.permute.xlu0 %2421
    %v2427 = vadd.f32 %v2339, %v2416
    %v2428 = vadd.f32 %v2340, %v2418
    %v2429 = vadd.f32 %v2341, %v2420
    %v2430 = vadd.f32 %v2342, %v2422
    %v2431 = vlaneseq
    %v2432 = vshrl.u32 %v2431, 7
    %v2433 = vsub.s32 5, %v2432
    %v2434 = vrot.slane %v577, %v2433
    %v2435 = vlaneseq
    %v2436 = vshrl.u32 %v2435, 7
    %v2437 = vsub.s32 5, %v2436
    %v2438 = vrot.slane %v578, %v2437
    %v2439 = vmul.f32 %v2377, %v2434
    %v2440 = vmul.f32 %v2381, %v2434
    %v2441 = vmul.f32 %v2377, %v2438
    %v2442 = vmul.f32 %v2381, %v2438
    %2447 = vrot.lane.b32.xlu0 %v2439, 125
    %v2448 = vpop.permute.xlu0 %2447
    %2449 = vrot.lane.b32.xlu0 %v2440, 125
    %v2450 = vpop.permute.xlu0 %2449
    %2451 = vrot.lane.b32.xlu0 %v2441, 125
    %v2452 = vpop.permute.xlu0 %2451
    %2453 = vrot.lane.b32.xlu0 %v2442, 125
    %v2454 = vpop.permute.xlu0 %2453
    %v2459 = vadd.f32 %v2427, %v2448
    %v2460 = vadd.f32 %v2428, %v2450
    %v2461 = vadd.f32 %v2429, %v2452
    %v2462 = vadd.f32 %v2430, %v2454
    %2463 = vset.pattern.permute.xlu0 36
    %2464 = vperm.xlu0 %2463, %v579
    %v2465 = vpop.permute.xlu0 %2464
    %2467 = vset.pattern.permute.xlu0 36
    %2468 = vperm.xlu0 %2467, %v580
    %v2469 = vpop.permute.xlu0 %2468
    %v2471 = vlaneseq
    %v2472 = vshrl.u32 %v2471, 7
    %v2473 = vsub.s32 6, %v2472
    %v2474 = vrot.slane %v573, %v2473
    %v2475 = vlaneseq
    %v2476 = vshrl.u32 %v2475, 7
    %v2477 = vsub.s32 6, %v2476
    %v2478 = vrot.slane %v575, %v2477
    %v2479 = vmul.f32 %v2465, %v2474
    %v2480 = vmul.f32 %v2469, %v2474
    %v2481 = vmul.f32 %v2465, %v2478
    %v2482 = vmul.f32 %v2469, %v2478
    %v2483 = vadd.f32 %v2403, %v2479
    %v2484 = vadd.f32 %v2404, %v2480
    %v2485 = vadd.f32 %v2405, %v2481
    %v2486 = vadd.f32 %v2406, %v2482
    %2487 = vset.pattern.permute.xlu0 37
    %2488 = vperm.xlu0 %2487, %v579
    %v2489 = vpop.permute.xlu0 %2488
    %2491 = vset.pattern.permute.xlu0 37
    %2492 = vperm.xlu0 %2491, %v580
    %v2493 = vpop.permute.xlu0 %2492
    %v2495 = vlaneseq
    %v2496 = vshrl.u32 %v2495, 7
    %v2497 = vsub.s32 6, %v2496
    %v2498 = vrot.slane %v574, %v2497
    %v2499 = vlaneseq
    %v2500 = vshrl.u32 %v2499, 7
    %v2501 = vsub.s32 6, %v2500
    %v2502 = vrot.slane %v576, %v2501
    %v2503 = vmul.f32 %v2489, %v2498
    %v2504 = vmul.f32 %v2493, %v2498
    %v2505 = vmul.f32 %v2489, %v2502
    %v2506 = vmul.f32 %v2493, %v2502
    %v2507 = vadd.f32 %v2483, %v2503
    %v2508 = vadd.f32 %v2484, %v2504
    %v2509 = vadd.f32 %v2485, %v2505
    %v2510 = vadd.f32 %v2486, %v2506
    %v2511 = vmul.f32 %v2465, %v2498
    %v2512 = vmul.f32 %v2469, %v2498
    %v2513 = vmul.f32 %v2465, %v2502
    %v2514 = vmul.f32 %v2469, %v2502
    %v2515 = vadd.f32 %v2459, %v2511
    %v2516 = vadd.f32 %v2460, %v2512
    %v2517 = vadd.f32 %v2461, %v2513
    %v2518 = vadd.f32 %v2462, %v2514
    %v2519 = vmul.f32 %v2489, %v2474
    %v2520 = vmul.f32 %v2493, %v2474
    %v2521 = vmul.f32 %v2489, %v2478
    %v2522 = vmul.f32 %v2493, %v2478
    %2527 = vrot.lane.b32.xlu0 %v2519, 127
    %v2528 = vpop.permute.xlu0 %2527
    %2529 = vrot.lane.b32.xlu0 %v2520, 127
    %v2530 = vpop.permute.xlu0 %2529
    %2531 = vrot.lane.b32.xlu0 %v2521, 127
    %v2532 = vpop.permute.xlu0 %2531
    %2533 = vrot.lane.b32.xlu0 %v2522, 127
    %v2534 = vpop.permute.xlu0 %2533
    %v2539 = vadd.f32 %v2515, %v2528
    %v2540 = vadd.f32 %v2516, %v2530
    %v2541 = vadd.f32 %v2517, %v2532
    %v2542 = vadd.f32 %v2518, %v2534
    %2543 = vset.pattern.permute.xlu0 38
    %2544 = vperm.xlu0 %2543, %v579
    %v2545 = vpop.permute.xlu0 %2544
    %2547 = vset.pattern.permute.xlu0 38
    %2548 = vperm.xlu0 %2547, %v580
    %v2549 = vpop.permute.xlu0 %2548
    %v2551 = vmul.f32 %v2545, %v2474
    %v2552 = vmul.f32 %v2549, %v2474
    %v2553 = vmul.f32 %v2545, %v2478
    %v2554 = vmul.f32 %v2549, %v2478
    %2559 = vrot.lane.b32.xlu0 %v2551, 127
    %v2560 = vpop.permute.xlu0 %2559
    %2561 = vrot.lane.b32.xlu0 %v2552, 127
    %v2562 = vpop.permute.xlu0 %2561
    %2563 = vrot.lane.b32.xlu0 %v2553, 127
    %v2564 = vpop.permute.xlu0 %2563
    %2565 = vrot.lane.b32.xlu0 %v2554, 127
    %v2566 = vpop.permute.xlu0 %2565
    %v2571 = vadd.f32 %v2507, %v2560
    %v2572 = vadd.f32 %v2508, %v2562
    %v2573 = vadd.f32 %v2509, %v2564
    %v2574 = vadd.f32 %v2510, %v2566
    %2575 = vset.pattern.permute.xlu0 39
    %2576 = vperm.xlu0 %2575, %v579
    %v2577 = vpop.permute.xlu0 %2576
    %2579 = vset.pattern.permute.xlu0 39
    %2580 = vperm.xlu0 %2579, %v580
    %v2581 = vpop.permute.xlu0 %2580
    %v2583 = vmul.f32 %v2577, %v2498
    %v2584 = vmul.f32 %v2581, %v2498
    %v2585 = vmul.f32 %v2577, %v2502
    %v2586 = vmul.f32 %v2581, %v2502
    %2591 = vrot.lane.b32.xlu0 %v2583, 127
    %v2592 = vpop.permute.xlu0 %2591
    %2593 = vrot.lane.b32.xlu0 %v2584, 127
    %v2594 = vpop.permute.xlu0 %2593
    %2595 = vrot.lane.b32.xlu0 %v2585, 127
    %v2596 = vpop.permute.xlu0 %2595
    %2597 = vrot.lane.b32.xlu0 %v2586, 127
    %v2598 = vpop.permute.xlu0 %2597
    %v2603 = vadd.f32 %v2571, %v2592
    %v2604 = vadd.f32 %v2572, %v2594
    %v2605 = vadd.f32 %v2573, %v2596
    %v2606 = vadd.f32 %v2574, %v2598
    %v2607 = vmul.f32 %v2545, %v2498
    %v2608 = vmul.f32 %v2549, %v2498
    %v2609 = vmul.f32 %v2545, %v2502
    %v2610 = vmul.f32 %v2549, %v2502
    %2615 = vrot.lane.b32.xlu0 %v2607, 127
    %v2616 = vpop.permute.xlu0 %2615
    %2617 = vrot.lane.b32.xlu0 %v2608, 127
    %v2618 = vpop.permute.xlu0 %2617
    %2619 = vrot.lane.b32.xlu0 %v2609, 127
    %v2620 = vpop.permute.xlu0 %2619
    %2621 = vrot.lane.b32.xlu0 %v2610, 127
    %v2622 = vpop.permute.xlu0 %2621
    %v2627 = vadd.f32 %v2539, %v2616
    %v2628 = vadd.f32 %v2540, %v2618
    %v2629 = vadd.f32 %v2541, %v2620
    %v2630 = vadd.f32 %v2542, %v2622
    %v2631 = vmul.f32 %v2577, %v2474
    %v2632 = vmul.f32 %v2581, %v2474
    %v2633 = vmul.f32 %v2577, %v2478
    %v2634 = vmul.f32 %v2581, %v2478
    %2639 = vrot.lane.b32.xlu0 %v2631, 126
    %v2640 = vpop.permute.xlu0 %2639
    %2641 = vrot.lane.b32.xlu0 %v2632, 126
    %v2642 = vpop.permute.xlu0 %2641
    %2643 = vrot.lane.b32.xlu0 %v2633, 126
    %v2644 = vpop.permute.xlu0 %2643
    %2645 = vrot.lane.b32.xlu0 %v2634, 126
    %v2646 = vpop.permute.xlu0 %2645
    %v2651 = vadd.f32 %v2627, %v2640
    %v2652 = vadd.f32 %v2628, %v2642
    %v2653 = vadd.f32 %v2629, %v2644
    %v2654 = vadd.f32 %v2630, %v2646
    %2655 = vset.pattern.permute.xlu0 40
    %2656 = vperm.xlu0 %2655, %v579
    %v2657 = vpop.permute.xlu0 %2656
    %2659 = vset.pattern.permute.xlu0 40
    %2660 = vperm.xlu0 %2659, %v580
    %v2661 = vpop.permute.xlu0 %2660
    %v2663 = vmul.f32 %v2657, %v2474
    %v2664 = vmul.f32 %v2661, %v2474
    %v2665 = vmul.f32 %v2657, %v2478
    %v2666 = vmul.f32 %v2661, %v2478
    %2671 = vrot.lane.b32.xlu0 %v2663, 126
    %v2672 = vpop.permute.xlu0 %2671
    %2673 = vrot.lane.b32.xlu0 %v2664, 126
    %v2674 = vpop.permute.xlu0 %2673
    %2675 = vrot.lane.b32.xlu0 %v2665, 126
    %v2676 = vpop.permute.xlu0 %2675
    %2677 = vrot.lane.b32.xlu0 %v2666, 126
    %v2678 = vpop.permute.xlu0 %2677
    %v2683 = vadd.f32 %v2603, %v2672
    %v2684 = vadd.f32 %v2604, %v2674
    %v2685 = vadd.f32 %v2605, %v2676
    %v2686 = vadd.f32 %v2606, %v2678
    %2687 = vset.pattern.permute.xlu0 41
    %2688 = vperm.xlu0 %2687, %v579
    %v2689 = vpop.permute.xlu0 %2688
    %2691 = vset.pattern.permute.xlu0 41
    %2692 = vperm.xlu0 %2691, %v580
    %v2693 = vpop.permute.xlu0 %2692
    %v2695 = vmul.f32 %v2689, %v2498
    %v2696 = vmul.f32 %v2693, %v2498
    %v2697 = vmul.f32 %v2689, %v2502
    %v2698 = vmul.f32 %v2693, %v2502
    %2703 = vrot.lane.b32.xlu0 %v2695, 126
    %v2704 = vpop.permute.xlu0 %2703
    %2705 = vrot.lane.b32.xlu0 %v2696, 126
    %v2706 = vpop.permute.xlu0 %2705
    %2707 = vrot.lane.b32.xlu0 %v2697, 126
    %v2708 = vpop.permute.xlu0 %2707
    %2709 = vrot.lane.b32.xlu0 %v2698, 126
    %v2710 = vpop.permute.xlu0 %2709
    %v2715 = vadd.f32 %v2683, %v2704
    %v2716 = vadd.f32 %v2684, %v2706
    %v2717 = vadd.f32 %v2685, %v2708
    %v2718 = vadd.f32 %v2686, %v2710
    %v2719 = vmul.f32 %v2657, %v2498
    %v2720 = vmul.f32 %v2661, %v2498
    %v2721 = vmul.f32 %v2657, %v2502
    %v2722 = vmul.f32 %v2661, %v2502
    %2727 = vrot.lane.b32.xlu0 %v2719, 126
    %v2728 = vpop.permute.xlu0 %2727
    %2729 = vrot.lane.b32.xlu0 %v2720, 126
    %v2730 = vpop.permute.xlu0 %2729
    %2731 = vrot.lane.b32.xlu0 %v2721, 126
    %v2732 = vpop.permute.xlu0 %2731
    %2733 = vrot.lane.b32.xlu0 %v2722, 126
    %v2734 = vpop.permute.xlu0 %2733
    %v2739 = vadd.f32 %v2651, %v2728
    %v2740 = vadd.f32 %v2652, %v2730
    %v2741 = vadd.f32 %v2653, %v2732
    %v2742 = vadd.f32 %v2654, %v2734
    %v2743 = vlaneseq
    %v2744 = vshrl.u32 %v2743, 7
    %v2745 = vsub.s32 6, %v2744
    %v2746 = vrot.slane %v577, %v2745
    %v2747 = vlaneseq
    %v2748 = vshrl.u32 %v2747, 7
    %v2749 = vsub.s32 6, %v2748
    %v2750 = vrot.slane %v578, %v2749
    %v2751 = vmul.f32 %v2689, %v2746
    %v2752 = vmul.f32 %v2693, %v2746
    %v2753 = vmul.f32 %v2689, %v2750
    %v2754 = vmul.f32 %v2693, %v2750
    %2759 = vrot.lane.b32.xlu0 %v2751, 125
    %v2760 = vpop.permute.xlu0 %2759
    %2761 = vrot.lane.b32.xlu0 %v2752, 125
    %v2762 = vpop.permute.xlu0 %2761
    %2763 = vrot.lane.b32.xlu0 %v2753, 125
    %v2764 = vpop.permute.xlu0 %2763
    %2765 = vrot.lane.b32.xlu0 %v2754, 125
    %v2766 = vpop.permute.xlu0 %2765
    %v2771 = vadd.f32 %v2739, %v2760
    %v2772 = vadd.f32 %v2740, %v2762
    %v2773 = vadd.f32 %v2741, %v2764
    %v2774 = vadd.f32 %v2742, %v2766
    %2775 = vset.pattern.permute.xlu0 42
    %2776 = vperm.xlu0 %2775, %v579
    %v2777 = vpop.permute.xlu0 %2776
    %2779 = vset.pattern.permute.xlu0 42
    %2780 = vperm.xlu0 %2779, %v580
    %v2781 = vpop.permute.xlu0 %2780
    %v2783 = vlaneseq
    %v2784 = vshrl.u32 %v2783, 7
    %v2785 = vsub.s32 7, %v2784
    %v2786 = vrot.slane %v573, %v2785
    %v2787 = vlaneseq
    %v2788 = vshrl.u32 %v2787, 7
    %v2789 = vsub.s32 7, %v2788
    %v2790 = vrot.slane %v575, %v2789
    %v2791 = vmul.f32 %v2777, %v2786
    %v2792 = vmul.f32 %v2781, %v2786
    %v2793 = vmul.f32 %v2777, %v2790
    %v2794 = vmul.f32 %v2781, %v2790
    %v2795 = vadd.f32 %v2715, %v2791
    %v2796 = vadd.f32 %v2716, %v2792
    %v2797 = vadd.f32 %v2717, %v2793
    %v2798 = vadd.f32 %v2718, %v2794
    %2799 = vset.pattern.permute.xlu0 43
    %2800 = vperm.xlu0 %2799, %v579
    %v2801 = vpop.permute.xlu0 %2800
    %2803 = vset.pattern.permute.xlu0 43
    %2804 = vperm.xlu0 %2803, %v580
    %v2805 = vpop.permute.xlu0 %2804
    %v2807 = vlaneseq
    %v2808 = vshrl.u32 %v2807, 7
    %v2809 = vsub.s32 7, %v2808
    %v2810 = vrot.slane %v574, %v2809
    %v2811 = vlaneseq
    %v2812 = vshrl.u32 %v2811, 7
    %v2813 = vsub.s32 7, %v2812
    %v2814 = vrot.slane %v576, %v2813
    %v2815 = vmul.f32 %v2801, %v2810
    %v2816 = vmul.f32 %v2805, %v2810
    %v2817 = vmul.f32 %v2801, %v2814
    %v2818 = vmul.f32 %v2805, %v2814
    %v2819 = vadd.f32 %v2795, %v2815
    %v2820 = vadd.f32 %v2796, %v2816
    %v2821 = vadd.f32 %v2797, %v2817
    %v2822 = vadd.f32 %v2798, %v2818
    %v2823 = vmul.f32 %v2777, %v2810
    %v2824 = vmul.f32 %v2781, %v2810
    %v2825 = vmul.f32 %v2777, %v2814
    %v2826 = vmul.f32 %v2781, %v2814
    %v2827 = vadd.f32 %v2771, %v2823
    %v2828 = vadd.f32 %v2772, %v2824
    %v2829 = vadd.f32 %v2773, %v2825
    %v2830 = vadd.f32 %v2774, %v2826
    %v2831 = vmul.f32 %v2801, %v2786
    %v2832 = vmul.f32 %v2805, %v2786
    %v2833 = vmul.f32 %v2801, %v2790
    %v2834 = vmul.f32 %v2805, %v2790
    %2839 = vrot.lane.b32.xlu0 %v2831, 127
    %v2840 = vpop.permute.xlu0 %2839
    %2841 = vrot.lane.b32.xlu0 %v2832, 127
    %v2842 = vpop.permute.xlu0 %2841
    %2843 = vrot.lane.b32.xlu0 %v2833, 127
    %v2844 = vpop.permute.xlu0 %2843
    %2845 = vrot.lane.b32.xlu0 %v2834, 127
    %v2846 = vpop.permute.xlu0 %2845
    %v2851 = vadd.f32 %v2827, %v2840
    %v2852 = vadd.f32 %v2828, %v2842
    %v2853 = vadd.f32 %v2829, %v2844
    %v2854 = vadd.f32 %v2830, %v2846
    %2855 = vset.pattern.permute.xlu0 44
    %2856 = vperm.xlu0 %2855, %v579
    %v2857 = vpop.permute.xlu0 %2856
    %2859 = vset.pattern.permute.xlu0 44
    %2860 = vperm.xlu0 %2859, %v580
    %v2861 = vpop.permute.xlu0 %2860
    %v2863 = vmul.f32 %v2857, %v2786
    %v2864 = vmul.f32 %v2861, %v2786
    %v2865 = vmul.f32 %v2857, %v2790
    %v2866 = vmul.f32 %v2861, %v2790
    %2871 = vrot.lane.b32.xlu0 %v2863, 127
    %v2872 = vpop.permute.xlu0 %2871
    %2873 = vrot.lane.b32.xlu0 %v2864, 127
    %v2874 = vpop.permute.xlu0 %2873
    %2875 = vrot.lane.b32.xlu0 %v2865, 127
    %v2876 = vpop.permute.xlu0 %2875
    %2877 = vrot.lane.b32.xlu0 %v2866, 127
    %v2878 = vpop.permute.xlu0 %2877
    %v2883 = vadd.f32 %v2819, %v2872
    %v2884 = vadd.f32 %v2820, %v2874
    %v2885 = vadd.f32 %v2821, %v2876
    %v2886 = vadd.f32 %v2822, %v2878
    %2887 = vset.pattern.permute.xlu0 45
    %2888 = vperm.xlu0 %2887, %v579
    %v2889 = vpop.permute.xlu0 %2888
    %2891 = vset.pattern.permute.xlu0 45
    %2892 = vperm.xlu0 %2891, %v580
    %v2893 = vpop.permute.xlu0 %2892
    %v2895 = vmul.f32 %v2889, %v2810
    %v2896 = vmul.f32 %v2893, %v2810
    %v2897 = vmul.f32 %v2889, %v2814
    %v2898 = vmul.f32 %v2893, %v2814
    %2903 = vrot.lane.b32.xlu0 %v2895, 127
    %v2904 = vpop.permute.xlu0 %2903
    %2905 = vrot.lane.b32.xlu0 %v2896, 127
    %v2906 = vpop.permute.xlu0 %2905
    %2907 = vrot.lane.b32.xlu0 %v2897, 127
    %v2908 = vpop.permute.xlu0 %2907
    %2909 = vrot.lane.b32.xlu0 %v2898, 127
    %v2910 = vpop.permute.xlu0 %2909
    %v2915 = vadd.f32 %v2883, %v2904
    %v2916 = vadd.f32 %v2884, %v2906
    %v2917 = vadd.f32 %v2885, %v2908
    %v2918 = vadd.f32 %v2886, %v2910
    %v2919 = vmul.f32 %v2857, %v2810
    %v2920 = vmul.f32 %v2861, %v2810
    %v2921 = vmul.f32 %v2857, %v2814
    %v2922 = vmul.f32 %v2861, %v2814
    %2927 = vrot.lane.b32.xlu0 %v2919, 127
    %v2928 = vpop.permute.xlu0 %2927
    %2929 = vrot.lane.b32.xlu0 %v2920, 127
    %v2930 = vpop.permute.xlu0 %2929
    %2931 = vrot.lane.b32.xlu0 %v2921, 127
    %v2932 = vpop.permute.xlu0 %2931
    %2933 = vrot.lane.b32.xlu0 %v2922, 127
    %v2934 = vpop.permute.xlu0 %2933
    %v2939 = vadd.f32 %v2851, %v2928
    %v2940 = vadd.f32 %v2852, %v2930
    %v2941 = vadd.f32 %v2853, %v2932
    %v2942 = vadd.f32 %v2854, %v2934
    %v2943 = vmul.f32 %v2889, %v2786
    %v2944 = vmul.f32 %v2893, %v2786
    %v2945 = vmul.f32 %v2889, %v2790
    %v2946 = vmul.f32 %v2893, %v2790
    %2951 = vrot.lane.b32.xlu0 %v2943, 126
    %v2952 = vpop.permute.xlu0 %2951
    %2953 = vrot.lane.b32.xlu0 %v2944, 126
    %v2954 = vpop.permute.xlu0 %2953
    %2955 = vrot.lane.b32.xlu0 %v2945, 126
    %v2956 = vpop.permute.xlu0 %2955
    %2957 = vrot.lane.b32.xlu0 %v2946, 126
    %v2958 = vpop.permute.xlu0 %2957
    %v2963 = vadd.f32 %v2939, %v2952
    %v2964 = vadd.f32 %v2940, %v2954
    %v2965 = vadd.f32 %v2941, %v2956
    %v2966 = vadd.f32 %v2942, %v2958
    %2967 = vset.pattern.permute.xlu0 46
    %2968 = vperm.xlu0 %2967, %v579
    %v2969 = vpop.permute.xlu0 %2968
    %2971 = vset.pattern.permute.xlu0 46
    %2972 = vperm.xlu0 %2971, %v580
    %v2973 = vpop.permute.xlu0 %2972
    %v2975 = vmul.f32 %v2969, %v2786
    %v2976 = vmul.f32 %v2973, %v2786
    %v2977 = vmul.f32 %v2969, %v2790
    %v2978 = vmul.f32 %v2973, %v2790
    %2983 = vrot.lane.b32.xlu0 %v2975, 126
    %v2984 = vpop.permute.xlu0 %2983
    %2985 = vrot.lane.b32.xlu0 %v2976, 126
    %v2986 = vpop.permute.xlu0 %2985
    %2987 = vrot.lane.b32.xlu0 %v2977, 126
    %v2988 = vpop.permute.xlu0 %2987
    %2989 = vrot.lane.b32.xlu0 %v2978, 126
    %v2990 = vpop.permute.xlu0 %2989
    %v2995 = vadd.f32 %v2915, %v2984
    %v2996 = vadd.f32 %v2916, %v2986
    %v2997 = vadd.f32 %v2917, %v2988
    %v2998 = vadd.f32 %v2918, %v2990
    %2999 = vset.pattern.permute.xlu0 47
    %3000 = vperm.xlu0 %2999, %v579
    %v3001 = vpop.permute.xlu0 %3000
    %3003 = vset.pattern.permute.xlu0 47
    %3004 = vperm.xlu0 %3003, %v580
    %v3005 = vpop.permute.xlu0 %3004
    %v3007 = vmul.f32 %v3001, %v2810
    %v3008 = vmul.f32 %v3005, %v2810
    %v3009 = vmul.f32 %v3001, %v2814
    %v3010 = vmul.f32 %v3005, %v2814
    %3015 = vrot.lane.b32.xlu0 %v3007, 126
    %v3016 = vpop.permute.xlu0 %3015
    %3017 = vrot.lane.b32.xlu0 %v3008, 126
    %v3018 = vpop.permute.xlu0 %3017
    %3019 = vrot.lane.b32.xlu0 %v3009, 126
    %v3020 = vpop.permute.xlu0 %3019
    %3021 = vrot.lane.b32.xlu0 %v3010, 126
    %v3022 = vpop.permute.xlu0 %3021
    %v3027 = vadd.f32 %v2995, %v3016
    %v3028 = vadd.f32 %v2996, %v3018
    %v3029 = vadd.f32 %v2997, %v3020
    %v3030 = vadd.f32 %v2998, %v3022
    %v3031 = vmul.f32 %v2969, %v2810
    %v3032 = vmul.f32 %v2973, %v2810
    %v3033 = vmul.f32 %v2969, %v2814
    %v3034 = vmul.f32 %v2973, %v2814
    %3039 = vrot.lane.b32.xlu0 %v3031, 126
    %v3040 = vpop.permute.xlu0 %3039
    %3041 = vrot.lane.b32.xlu0 %v3032, 126
    %v3042 = vpop.permute.xlu0 %3041
    %3043 = vrot.lane.b32.xlu0 %v3033, 126
    %v3044 = vpop.permute.xlu0 %3043
    %3045 = vrot.lane.b32.xlu0 %v3034, 126
    %v3046 = vpop.permute.xlu0 %3045
    %v3051 = vadd.f32 %v2963, %v3040
    %v3052 = vadd.f32 %v2964, %v3042
    %v3053 = vadd.f32 %v2965, %v3044
    %v3054 = vadd.f32 %v2966, %v3046
    %v3055 = vlaneseq
    %v3056 = vshrl.u32 %v3055, 7
    %v3057 = vsub.s32 7, %v3056
    %v3058 = vrot.slane %v577, %v3057
    %v3059 = vlaneseq
    %v3060 = vshrl.u32 %v3059, 7
    %v3061 = vsub.s32 7, %v3060
    %v3062 = vrot.slane %v578, %v3061
    %v3063 = vmul.f32 %v3001, %v3058
    %v3064 = vmul.f32 %v3005, %v3058
    %v3065 = vmul.f32 %v3001, %v3062
    %v3066 = vmul.f32 %v3005, %v3062
    %3071 = vrot.lane.b32.xlu0 %v3063, 125
    %v3072 = vpop.permute.xlu0 %3071
    %3073 = vrot.lane.b32.xlu0 %v3064, 125
    %v3074 = vpop.permute.xlu0 %3073
    %3075 = vrot.lane.b32.xlu0 %v3065, 125
    %v3076 = vpop.permute.xlu0 %3075
    %3077 = vrot.lane.b32.xlu0 %v3066, 125
    %v3078 = vpop.permute.xlu0 %3077
    %v3083 = vadd.f32 %v3051, %v3072
    %v3084 = vadd.f32 %v3052, %v3074
    %v3085 = vadd.f32 %v3053, %v3076
    %v3086 = vadd.f32 %v3054, %v3078
    %v3087 = vmax.f32 %v3027, %v3083
    %v3088 = vmax.f32 %v3028, %v3084
    %v3089 = vmax.f32 %v3029, %v3085
    %v3090 = vmax.f32 %v3030, %v3086
    %v3091 = vmax.f32 %v3087, 0.0
    %v3092 = vmax.f32 %v3088, 0.0
    %v3093 = vmax.f32 %v3089, 0.0
    %v3094 = vmax.f32 %v3090, 0.0
    %s3095 = smul.u32 16, 72
    %s3096 = smul.u32 %s3095, 1
    %s3097 = sshll.u32 %s3096, 4
    %3098 = dma.done [#allocation4], %s3097
    %v3099 = vld [vmem:[%s1 + $0x70] sm:$0x1]
    %v3100 = vlaneseq
    %v3101 = vshrl.u32 %v3100, 7
    %v3102 = vsub.s32 0, %v3101
    %v3103 = vrot.slane %v3099, %v3102
    %v3104 = vld [vmem:[#allocation3] sm:$0xff]
    %v3105 = vld [vmem:[#allocation3 + $0x8] sm:$0xff]
    %v3106 = vld [vmem:[#allocation3 + $0x10] sm:$0xff]
    %v3107 = vld [vmem:[#allocation3 + $0x18] sm:$0xff]
    %v3108 = vld [vmem:[#allocation3 + $0x20] sm:$0xff]
    %v3109 = vld [vmem:[#allocation3 + $0x28] sm:$0xff]
    %v3110 = vld [vmem:[#allocation3 + $0x30] sm:$0xff]
    %v3111 = vld [vmem:[#allocation3 + $0x38] sm:$0xff]
    %v3112 = vld [vmem:[#allocation3 + $0x40] sm:$0xff]
    %v3115 = vrot.slane %v3093, 7
    %vm3116 = vcmask 1041409
    %v3117 = vsel %vm3116, %v3115, %v3091
    %vm3118 = vcmask 588800
    %v3119 = vsel %vm3118, %v3117, 0
    %3121 = vmatprep.subr.mxu0 0.0
    %3122 = vmatpush1.msra.mxu0 0.0
    %3123 = vmatprep.subr.mxu0 0.0
    %3124 = vmatpush1.msra.mxu0 0.0
    %3125 = vmatprep.subr.mxu0 0.0
    %3126 = vmatpush1.msra.mxu0 0.0
    %3127 = vmatprep.subr.mxu0 0.0
    %3128 = vmatpush1.msra.mxu0 0.0
    %3129 = vmatprep.subr.mxu0 0.0
    %3130 = vmatpush1.msra.mxu0 0.0
    %3131 = vmatprep.subr.mxu0 0.0
    %3132 = vmatpush1.msra.mxu0 0.0
    %3133 = vmatprep.subr.mxu0 0.0
    %3134 = vmatpush1.msra.mxu0 0.0
    %3135 = vmatprep.subr.mxu0 0.0
    %3136 = vmatpush1.msra.mxu0 %v3112
    %3137 = vmatprep.subr.mxu0 0.0
    %3138 = vmatpush1.msra.mxu0 %v3111
    %3139 = vmatprep.subr.mxu0 0.0
    %3140 = vmatpush1.msra.mxu0 %v3110
    %3141 = vmatprep.subr.mxu0 0.0
    %3142 = vmatpush1.msra.mxu0 %v3109
    %3143 = vmatprep.subr.mxu0 0.0
    %3144 = vmatpush1.msra.mxu0 %v3108
    %3145 = vmatprep.subr.mxu0 0.0
    %3146 = vmatpush1.msra.mxu0 %v3107
    %3147 = vmatprep.subr.mxu0 0.0
    %3148 = vmatpush1.msra.mxu0 %v3106
    %3149 = vmatprep.subr.mxu0 0.0
    %3150 = vmatpush1.msra.mxu0 %v3105
    %3151 = vmatprep.subr.mxu0 0.0
    %3152 = vmatpush1.msra.mxu0 %v3104
    %3153 = vmatprep.subr.mxu0 0.0
    %3154 = vmatpush2.msra.mxu0 0.0
    %3155 = vmatprep.subr.mxu0 0.0
    %3156 = vmatpush2.msra.mxu0 0.0
    %3157 = vmatprep.subr.mxu0 0.0
    %3158 = vmatpush2.msra.mxu0 0.0
    %3159 = vmatprep.subr.mxu0 0.0
    %3160 = vmatpush2.msra.mxu0 0.0
    %3161 = vmatprep.subr.mxu0 0.0
    %3162 = vmatpush2.msra.mxu0 0.0
    %3163 = vmatprep.subr.mxu0 0.0
    %3164 = vmatpush2.msra.mxu0 0.0
    %3165 = vmatprep.subr.mxu0 0.0
    %3166 = vmatpush2.msra.mxu0 0.0
    %3167 = vmatprep.subr.mxu0 0.0
    %3168 = vmatpush2.msra.mxu0 0.0
    %3169 = vmatprep.subr.mxu0 0.0
    %3170 = vmatpush2.msra.mxu0 0.0
    %3171 = vmatprep.subr.mxu0 0.0
    %3172 = vmatpush2.msra.mxu0 0.0
    %3173 = vmatprep.subr.mxu0 0.0
    %3174 = vmatpush2.msra.mxu0 0.0
    %3175 = vmatprep.subr.mxu0 0.0
    %3176 = vmatpush2.msra.mxu0 0.0
    %3177 = vmatprep.subr.mxu0 0.0
    %3178 = vmatpush2.msra.mxu0 0.0
    %3179 = vmatprep.subr.mxu0 0.0
    %3180 = vmatpush2.msra.mxu0 0.0
    %3181 = vmatprep.subr.mxu0 0.0
    %3182 = vmatpush2.msra.mxu0 0.0
    %3183 = vmatprep.subr.mxu0 0.0
    %3184 = vmatpush2.msra.mxu0 0.0
    %3185 = vmatprep.mubr.f32.mxu0 0.0
    %3186 = vmatmul.mubr.f32.gmra.mxu0 %v3119
    %v3187 = vpop.f32.mrf.mxu0
    %v3188 = vadd.f32 0.0, %v3187
    %v3189 = vpop.f32.mrf.mxu0
    %3190 = vdwg.mxu0
    %v3191 = vadd.f32 %v3103, %v3188
    %s3192 = scalar_lea.vmem [#allocation3], 72
    %v3193 = vld [vmem:[%s3192] sm:$0xff]
    %v3194 = vld [vmem:[%s3192 + $0x8] sm:$0xff]
    %v3195 = vld [vmem:[%s3192 + $0x10] sm:$0xff]
    %v3196 = vld [vmem:[%s3192 + $0x18] sm:$0xff]
    %v3197 = vld [vmem:[%s3192 + $0x20] sm:$0xff]
    %v3198 = vld [vmem:[%s3192 + $0x28] sm:$0xff]
    %v3199 = vld [vmem:[%s3192 + $0x30] sm:$0xff]
    %v3200 = vld [vmem:[%s3192 + $0x38] sm:$0xff]
    %v3201 = vld [vmem:[%s3192 + $0x40] sm:$0xff]
    %v3202 = vrot.slane %v3091, 1
    %v3203 = vsel %vm3116, %v3093, %v3202
    %v3204 = vsel %vm3118, %v3203, 0
    %3206 = vmatprep.subr.mxu0 0.0
    %3207 = vmatpush1.msra.mxu0 0.0
    %3208 = vmatprep.subr.mxu0 0.0
    %3209 = vmatpush1.msra.mxu0 0.0
    %3210 = vmatprep.subr.mxu0 0.0
    %3211 = vmatpush1.msra.mxu0 0.0
    %3212 = vmatprep.subr.mxu0 0.0
    %3213 = vmatpush1.msra.mxu0 0.0
    %3214 = vmatprep.subr.mxu0 0.0
    %3215 = vmatpush1.msra.mxu0 0.0
    %3216 = vmatprep.subr.mxu0 0.0
    %3217 = vmatpush1.msra.mxu0 0.0
    %3218 = vmatprep.subr.mxu0 0.0
    %3219 = vmatpush1.msra.mxu0 0.0
    %3220 = vmatprep.subr.mxu0 0.0
    %3221 = vmatpush1.msra.mxu0 %v3201
    %3222 = vmatprep.subr.mxu0 0.0
    %3223 = vmatpush1.msra.mxu0 %v3200
    %3224 = vmatprep.subr.mxu0 0.0
    %3225 = vmatpush1.msra.mxu0 %v3199
    %3226 = vmatprep.subr.mxu0 0.0
    %3227 = vmatpush1.msra.mxu0 %v3198
    %3228 = vmatprep.subr.mxu0 0.0
    %3229 = vmatpush1.msra.mxu0 %v3197
    %3230 = vmatprep.subr.mxu0 0.0
    %3231 = vmatpush1.msra.mxu0 %v3196
    %3232 = vmatprep.subr.mxu0 0.0
    %3233 = vmatpush1.msra.mxu0 %v3195
    %3234 = vmatprep.subr.mxu0 0.0
    %3235 = vmatpush1.msra.mxu0 %v3194
    %3236 = vmatprep.subr.mxu0 0.0
    %3237 = vmatpush1.msra.mxu0 %v3193
    %3238 = vmatprep.subr.mxu0 0.0
    %3239 = vmatpush2.msra.mxu0 0.0
    %3240 = vmatprep.subr.mxu0 0.0
    %3241 = vmatpush2.msra.mxu0 0.0
    %3242 = vmatprep.subr.mxu0 0.0
    %3243 = vmatpush2.msra.mxu0 0.0
    %3244 = vmatprep.subr.mxu0 0.0
    %3245 = vmatpush2.msra.mxu0 0.0
    %3246 = vmatprep.subr.mxu0 0.0
    %3247 = vmatpush2.msra.mxu0 0.0
    %3248 = vmatprep.subr.mxu0 0.0
    %3249 = vmatpush2.msra.mxu0 0.0
    %3250 = vmatprep.subr.mxu0 0.0
    %3251 = vmatpush2.msra.mxu0 0.0
    %3252 = vmatprep.subr.mxu0 0.0
    %3253 = vmatpush2.msra.mxu0 0.0
    %3254 = vmatprep.subr.mxu0 0.0
    %3255 = vmatpush2.msra.mxu0 0.0
    %3256 = vmatprep.subr.mxu0 0.0
    %3257 = vmatpush2.msra.mxu0 0.0
    %3258 = vmatprep.subr.mxu0 0.0
    %3259 = vmatpush2.msra.mxu0 0.0
    %3260 = vmatprep.subr.mxu0 0.0
    %3261 = vmatpush2.msra.mxu0 0.0
    %3262 = vmatprep.subr.mxu0 0.0
    %3263 = vmatpush2.msra.mxu0 0.0
    %3264 = vmatprep.subr.mxu0 0.0
    %3265 = vmatpush2.msra.mxu0 0.0
    %3266 = vmatprep.subr.mxu0 0.0
    %3267 = vmatpush2.msra.mxu0 0.0
    %3268 = vmatprep.subr.mxu0 0.0
    %3269 = vmatpush2.msra.mxu0 0.0
    %3270 = vmatprep.mubr.f32.mxu0 0.0
    %3271 = vmatmul.mubr.f32.gmra.mxu0 %v3204
    %v3272 = vpop.f32.mrf.mxu0
    %v3273 = vadd.f32 0.0, %v3272
    %v3274 = vpop.f32.mrf.mxu0
    %3275 = vdwg.mxu0
    %v3276 = vadd.f32 %v3191, %v3273
    %s3277 = scalar_lea.vmem [#allocation3], 144
    %v3278 = vld [vmem:[%s3277] sm:$0xff]
    %v3279 = vld [vmem:[%s3277 + $0x8] sm:$0xff]
    %v3280 = vld [vmem:[%s3277 + $0x10] sm:$0xff]
    %v3281 = vld [vmem:[%s3277 + $0x18] sm:$0xff]
    %v3282 = vld [vmem:[%s3277 + $0x20] sm:$0xff]
    %v3283 = vld [vmem:[%s3277 + $0x28] sm:$0xff]
    %v3284 = vld [vmem:[%s3277 + $0x30] sm:$0xff]
    %v3285 = vld [vmem:[%s3277 + $0x38] sm:$0xff]
    %v3286 = vld [vmem:[%s3277 + $0x40] sm:$0xff]
    %v3287 = vrot.slane %v3091, 2
    %v3288 = vrot.slane %v3093, 1
    %v3289 = vsel %vm3116, %v3288, %v3287
    %v3290 = vsel %vm3118, %v3289, 0
    %3292 = vmatprep.subr.mxu0 0.0
    %3293 = vmatpush1.msra.mxu0 0.0
    %3294 = vmatprep.subr.mxu0 0.0
    %3295 = vmatpush1.msra.mxu0 0.0
    %3296 = vmatprep.subr.mxu0 0.0
    %3297 = vmatpush1.msra.mxu0 0.0
    %3298 = vmatprep.subr.mxu0 0.0
    %3299 = vmatpush1.msra.mxu0 0.0
    %3300 = vmatprep.subr.mxu0 0.0
    %3301 = vmatpush1.msra.mxu0 0.0
    %3302 = vmatprep.subr.mxu0 0.0
    %3303 = vmatpush1.msra.mxu0 0.0
    %3304 = vmatprep.subr.mxu0 0.0
    %3305 = vmatpush1.msra.mxu0 0.0
    %3306 = vmatprep.subr.mxu0 0.0
    %3307 = vmatpush1.msra.mxu0 %v3286
    %3308 = vmatprep.subr.mxu0 0.0
    %3309 = vmatpush1.msra.mxu0 %v3285
    %3310 = vmatprep.subr.mxu0 0.0
    %3311 = vmatpush1.msra.mxu0 %v3284
    %3312 = vmatprep.subr.mxu0 0.0
    %3313 = vmatpush1.msra.mxu0 %v3283
    %3314 = vmatprep.subr.mxu0 0.0
    %3315 = vmatpush1.msra.mxu0 %v3282
    %3316 = vmatprep.subr.mxu0 0.0
    %3317 = vmatpush1.msra.mxu0 %v3281
    %3318 = vmatprep.subr.mxu0 0.0
    %3319 = vmatpush1.msra.mxu0 %v3280
    %3320 = vmatprep.subr.mxu0 0.0
    %3321 = vmatpush1.msra.mxu0 %v3279
    %3322 = vmatprep.subr.mxu0 0.0
    %3323 = vmatpush1.msra.mxu0 %v3278
    %3324 = vmatprep.subr.mxu0 0.0
    %3325 = vmatpush2.msra.mxu0 0.0
    %3326 = vmatprep.subr.mxu0 0.0
    %3327 = vmatpush2.msra.mxu0 0.0
    %3328 = vmatprep.subr.mxu0 0.0
    %3329 = vmatpush2.msra.mxu0 0.0
    %3330 = vmatprep.subr.mxu0 0.0
    %3331 = vmatpush2.msra.mxu0 0.0
    %3332 = vmatprep.subr.mxu0 0.0
    %3333 = vmatpush2.msra.mxu0 0.0
    %3334 = vmatprep.subr.mxu0 0.0
    %3335 = vmatpush2.msra.mxu0 0.0
    %3336 = vmatprep.subr.mxu0 0.0
    %3337 = vmatpush2.msra.mxu0 0.0
    %3338 = vmatprep.subr.mxu0 0.0
    %3339 = vmatpush2.msra.mxu0 0.0
    %3340 = vmatprep.subr.mxu0 0.0
    %3341 = vmatpush2.msra.mxu0 0.0
    %3342 = vmatprep.subr.mxu0 0.0
    %3343 = vmatpush2.msra.mxu0 0.0
    %3344 = vmatprep.subr.mxu0 0.0
    %3345 = vmatpush2.msra.mxu0 0.0
    %3346 = vmatprep.subr.mxu0 0.0
    %3347 = vmatpush2.msra.mxu0 0.0
    %3348 = vmatprep.subr.mxu0 0.0
    %3349 = vmatpush2.msra.mxu0 0.0
    %3350 = vmatprep.subr.mxu0 0.0
    %3351 = vmatpush2.msra.mxu0 0.0
    %3352 = vmatprep.subr.mxu0 0.0
    %3353 = vmatpush2.msra.mxu0 0.0
    %3354 = vmatprep.subr.mxu0 0.0
    %3355 = vmatpush2.msra.mxu0 0.0
    %3356 = vmatprep.mubr.f32.mxu0 0.0
    %3357 = vmatmul.mubr.f32.gmra.mxu0 %v3290
    %v3358 = vpop.f32.mrf.mxu0
    %v3359 = vadd.f32 0.0, %v3358
    %v3360 = vpop.f32.mrf.mxu0
    %3361 = vdwg.mxu0
    %v3362 = vadd.f32 %v3276, %v3359
    %s3363 = scalar_lea.vmem [#allocation3], 216
    %v3364 = vld [vmem:[%s3363] sm:$0xff]
    %v3365 = vld [vmem:[%s3363 + $0x8] sm:$0xff]
    %v3366 = vld [vmem:[%s3363 + $0x10] sm:$0xff]
    %v3367 = vld [vmem:[%s3363 + $0x18] sm:$0xff]
    %v3368 = vld [vmem:[%s3363 + $0x20] sm:$0xff]
    %v3369 = vld [vmem:[%s3363 + $0x28] sm:$0xff]
    %v3370 = vld [vmem:[%s3363 + $0x30] sm:$0xff]
    %v3371 = vld [vmem:[%s3363 + $0x38] sm:$0xff]
    %v3372 = vld [vmem:[%s3363 + $0x40] sm:$0xff]
    %v3373 = vrot.slane %v3091, 3
    %v3374 = vrot.slane %v3093, 2
    %v3375 = vsel %vm3116, %v3374, %v3373
    %v3376 = vsel %vm3118, %v3375, 0
    %3378 = vmatprep.subr.mxu0 0.0
    %3379 = vmatpush1.msra.mxu0 0.0
    %3380 = vmatprep.subr.mxu0 0.0
    %3381 = vmatpush1.msra.mxu0 0.0
    %3382 = vmatprep.subr.mxu0 0.0
    %3383 = vmatpush1.msra.mxu0 0.0
    %3384 = vmatprep.subr.mxu0 0.0
    %3385 = vmatpush1.msra.mxu0 0.0
    %3386 = vmatprep.subr.mxu0 0.0
    %3387 = vmatpush1.msra.mxu0 0.0
    %3388 = vmatprep.subr.mxu0 0.0
    %3389 = vmatpush1.msra.mxu0 0.0
    %3390 = vmatprep.subr.mxu0 0.0
    %3391 = vmatpush1.msra.mxu0 0.0
    %3392 = vmatprep.subr.mxu0 0.0
    %3393 = vmatpush1.msra.mxu0 %v3372
    %3394 = vmatprep.subr.mxu0 0.0
    %3395 = vmatpush1.msra.mxu0 %v3371
    %3396 = vmatprep.subr.mxu0 0.0
    %3397 = vmatpush1.msra.mxu0 %v3370
    %3398 = vmatprep.subr.mxu0 0.0
    %3399 = vmatpush1.msra.mxu0 %v3369
    %3400 = vmatprep.subr.mxu0 0.0
    %3401 = vmatpush1.msra.mxu0 %v3368
    %3402 = vmatprep.subr.mxu0 0.0
    %3403 = vmatpush1.msra.mxu0 %v3367
    %3404 = vmatprep.subr.mxu0 0.0
    %3405 = vmatpush1.msra.mxu0 %v3366
    %3406 = vmatprep.subr.mxu0 0.0
    %3407 = vmatpush1.msra.mxu0 %v3365
    %3408 = vmatprep.subr.mxu0 0.0
    %3409 = vmatpush1.msra.mxu0 %v3364
    %3410 = vmatprep.subr.mxu0 0.0
    %3411 = vmatpush2.msra.mxu0 0.0
    %3412 = vmatprep.subr.mxu0 0.0
    %3413 = vmatpush2.msra.mxu0 0.0
    %3414 = vmatprep.subr.mxu0 0.0
    %3415 = vmatpush2.msra.mxu0 0.0
    %3416 = vmatprep.subr.mxu0 0.0
    %3417 = vmatpush2.msra.mxu0 0.0
    %3418 = vmatprep.subr.mxu0 0.0
    %3419 = vmatpush2.msra.mxu0 0.0
    %3420 = vmatprep.subr.mxu0 0.0
    %3421 = vmatpush2.msra.mxu0 0.0
    %3422 = vmatprep.subr.mxu0 0.0
    %3423 = vmatpush2.msra.mxu0 0.0
    %3424 = vmatprep.subr.mxu0 0.0
    %3425 = vmatpush2.msra.mxu0 0.0
    %3426 = vmatprep.subr.mxu0 0.0
    %3427 = vmatpush2.msra.mxu0 0.0
    %3428 = vmatprep.subr.mxu0 0.0
    %3429 = vmatpush2.msra.mxu0 0.0
    %3430 = vmatprep.subr.mxu0 0.0
    %3431 = vmatpush2.msra.mxu0 0.0
    %3432 = vmatprep.subr.mxu0 0.0
    %3433 = vmatpush2.msra.mxu0 0.0
    %3434 = vmatprep.subr.mxu0 0.0
    %3435 = vmatpush2.msra.mxu0 0.0
    %3436 = vmatprep.subr.mxu0 0.0
    %3437 = vmatpush2.msra.mxu0 0.0
    %3438 = vmatprep.subr.mxu0 0.0
    %3439 = vmatpush2.msra.mxu0 0.0
    %3440 = vmatprep.subr.mxu0 0.0
    %3441 = vmatpush2.msra.mxu0 0.0
    %3442 = vmatprep.mubr.f32.mxu0 0.0
    %3443 = vmatmul.mubr.f32.gmra.mxu0 %v3376
    %v3444 = vpop.f32.mrf.mxu0
    %v3445 = vadd.f32 0.0, %v3444
    %v3446 = vpop.f32.mrf.mxu0
    %3447 = vdwg.mxu0
    %v3448 = vadd.f32 %v3362, %v3445
    %s3449 = scalar_lea.vmem [#allocation3], 288
    %v3450 = vld [vmem:[%s3449] sm:$0xff]
    %v3451 = vld [vmem:[%s3449 + $0x8] sm:$0xff]
    %v3452 = vld [vmem:[%s3449 + $0x10] sm:$0xff]
    %v3453 = vld [vmem:[%s3449 + $0x18] sm:$0xff]
    %v3454 = vld [vmem:[%s3449 + $0x20] sm:$0xff]
    %v3455 = vld [vmem:[%s3449 + $0x28] sm:$0xff]
    %v3456 = vld [vmem:[%s3449 + $0x30] sm:$0xff]
    %v3457 = vld [vmem:[%s3449 + $0x38] sm:$0xff]
    %v3458 = vld [vmem:[%s3449 + $0x40] sm:$0xff]
    %v3459 = vrot.slane %v3091, 4
    %v3460 = vrot.slane %v3093, 3
    %v3461 = vsel %vm3116, %v3460, %v3459
    %v3462 = vsel %vm3118, %v3461, 0
    %3464 = vmatprep.subr.mxu0 0.0
    %3465 = vmatpush1.msra.mxu0 0.0
    %3466 = vmatprep.subr.mxu0 0.0
    %3467 = vmatpush1.msra.mxu0 0.0
    %3468 = vmatprep.subr.mxu0 0.0
    %3469 = vmatpush1.msra.mxu0 0.0
    %3470 = vmatprep.subr.mxu0 0.0
    %3471 = vmatpush1.msra.mxu0 0.0
    %3472 = vmatprep.subr.mxu0 0.0
    %3473 = vmatpush1.msra.mxu0 0.0
    %3474 = vmatprep.subr.mxu0 0.0
    %3475 = vmatpush1.msra.mxu0 0.0
    %3476 = vmatprep.subr.mxu0 0.0
    %3477 = vmatpush1.msra.mxu0 0.0
    %3478 = vmatprep.subr.mxu0 0.0
    %3479 = vmatpush1.msra.mxu0 %v3458
    %3480 = vmatprep.subr.mxu0 0.0
    %3481 = vmatpush1.msra.mxu0 %v3457
    %3482 = vmatprep.subr.mxu0 0.0
    %3483 = vmatpush1.msra.mxu0 %v3456
    %3484 = vmatprep.subr.mxu0 0.0
    %3485 = vmatpush1.msra.mxu0 %v3455
    %3486 = vmatprep.subr.mxu0 0.0
    %3487 = vmatpush1.msra.mxu0 %v3454
    %3488 = vmatprep.subr.mxu0 0.0
    %3489 = vmatpush1.msra.mxu0 %v3453
    %3490 = vmatprep.subr.mxu0 0.0
    %3491 = vmatpush1.msra.mxu0 %v3452
    %3492 = vmatprep.subr.mxu0 0.0
    %3493 = vmatpush1.msra.mxu0 %v3451
    %3494 = vmatprep.subr.mxu0 0.0
    %3495 = vmatpush1.msra.mxu0 %v3450
    %3496 = vmatprep.subr.mxu0 0.0
    %3497 = vmatpush2.msra.mxu0 0.0
    %3498 = vmatprep.subr.mxu0 0.0
    %3499 = vmatpush2.msra.mxu0 0.0
    %3500 = vmatprep.subr.mxu0 0.0
    %3501 = vmatpush2.msra.mxu0 0.0
    %3502 = vmatprep.subr.mxu0 0.0
    %3503 = vmatpush2.msra.mxu0 0.0
    %3504 = vmatprep.subr.mxu0 0.0
    %3505 = vmatpush2.msra.mxu0 0.0
    %3506 = vmatprep.subr.mxu0 0.0
    %3507 = vmatpush2.msra.mxu0 0.0
    %3508 = vmatprep.subr.mxu0 0.0
    %3509 = vmatpush2.msra.mxu0 0.0
    %3510 = vmatprep.subr.mxu0 0.0
    %3511 = vmatpush2.msra.mxu0 0.0
    %3512 = vmatprep.subr.mxu0 0.0
    %3513 = vmatpush2.msra.mxu0 0.0
    %3514 = vmatprep.subr.mxu0 0.0
    %3515 = vmatpush2.msra.mxu0 0.0
    %3516 = vmatprep.subr.mxu0 0.0
    %3517 = vmatpush2.msra.mxu0 0.0
    %3518 = vmatprep.subr.mxu0 0.0
    %3519 = vmatpush2.msra.mxu0 0.0
    %3520 = vmatprep.subr.mxu0 0.0
    %3521 = vmatpush2.msra.mxu0 0.0
    %3522 = vmatprep.subr.mxu0 0.0
    %3523 = vmatpush2.msra.mxu0 0.0
    %3524 = vmatprep.subr.mxu0 0.0
    %3525 = vmatpush2.msra.mxu0 0.0
    %3526 = vmatprep.subr.mxu0 0.0
    %3527 = vmatpush2.msra.mxu0 0.0
    %3528 = vmatprep.mubr.f32.mxu0 0.0
    %3529 = vmatmul.mubr.f32.gmra.mxu0 %v3462
    %v3530 = vpop.f32.mrf.mxu0
    %v3531 = vadd.f32 0.0, %v3530
    %v3532 = vpop.f32.mrf.mxu0
    %3533 = vdwg.mxu0
    %v3534 = vadd.f32 %v3448, %v3531
    %s3535 = scalar_lea.vmem [#allocation3], 360
    %v3536 = vld [vmem:[%s3535] sm:$0xff]
    %v3537 = vld [vmem:[%s3535 + $0x8] sm:$0xff]
    %v3538 = vld [vmem:[%s3535 + $0x10] sm:$0xff]
    %v3539 = vld [vmem:[%s3535 + $0x18] sm:$0xff]
    %v3540 = vld [vmem:[%s3535 + $0x20] sm:$0xff]
    %v3541 = vld [vmem:[%s3535 + $0x28] sm:$0xff]
    %v3542 = vld [vmem:[%s3535 + $0x30] sm:$0xff]
    %v3543 = vld [vmem:[%s3535 + $0x38] sm:$0xff]
    %v3544 = vld [vmem:[%s3535 + $0x40] sm:$0xff]
    %v3545 = vrot.slane %v3091, 5
    %v3546 = vrot.slane %v3093, 4
    %v3547 = vsel %vm3116, %v3546, %v3545
    %v3548 = vsel %vm3118, %v3547, 0
    %3550 = vmatprep.subr.mxu0 0.0
    %3551 = vmatpush1.msra.mxu0 0.0
    %3552 = vmatprep.subr.mxu0 0.0
    %3553 = vmatpush1.msra.mxu0 0.0
    %3554 = vmatprep.subr.mxu0 0.0
    %3555 = vmatpush1.msra.mxu0 0.0
    %3556 = vmatprep.subr.mxu0 0.0
    %3557 = vmatpush1.msra.mxu0 0.0
    %3558 = vmatprep.subr.mxu0 0.0
    %3559 = vmatpush1.msra.mxu0 0.0
    %3560 = vmatprep.subr.mxu0 0.0
    %3561 = vmatpush1.msra.mxu0 0.0
    %3562 = vmatprep.subr.mxu0 0.0
    %3563 = vmatpush1.msra.mxu0 0.0
    %3564 = vmatprep.subr.mxu0 0.0
    %3565 = vmatpush1.msra.mxu0 %v3544
    %3566 = vmatprep.subr.mxu0 0.0
    %3567 = vmatpush1.msra.mxu0 %v3543
    %3568 = vmatprep.subr.mxu0 0.0
    %3569 = vmatpush1.msra.mxu0 %v3542
    %3570 = vmatprep.subr.mxu0 0.0
    %3571 = vmatpush1.msra.mxu0 %v3541
    %3572 = vmatprep.subr.mxu0 0.0
    %3573 = vmatpush1.msra.mxu0 %v3540
    %3574 = vmatprep.subr.mxu0 0.0
    %3575 = vmatpush1.msra.mxu0 %v3539
    %3576 = vmatprep.subr.mxu0 0.0
    %3577 = vmatpush1.msra.mxu0 %v3538
    %3578 = vmatprep.subr.mxu0 0.0
    %3579 = vmatpush1.msra.mxu0 %v3537
    %3580 = vmatprep.subr.mxu0 0.0
    %3581 = vmatpush1.msra.mxu0 %v3536
    %3582 = vmatprep.subr.mxu0 0.0
    %3583 = vmatpush2.msra.mxu0 0.0
    %3584 = vmatprep.subr.mxu0 0.0
    %3585 = vmatpush2.msra.mxu0 0.0
    %3586 = vmatprep.subr.mxu0 0.0
    %3587 = vmatpush2.msra.mxu0 0.0
    %3588 = vmatprep.subr.mxu0 0.0
    %3589 = vmatpush2.msra.mxu0 0.0
    %3590 = vmatprep.subr.mxu0 0.0
    %3591 = vmatpush2.msra.mxu0 0.0
    %3592 = vmatprep.subr.mxu0 0.0
    %3593 = vmatpush2.msra.mxu0 0.0
    %3594 = vmatprep.subr.mxu0 0.0
    %3595 = vmatpush2.msra.mxu0 0.0
    %3596 = vmatprep.subr.mxu0 0.0
    %3597 = vmatpush2.msra.mxu0 0.0
    %3598 = vmatprep.subr.mxu0 0.0
    %3599 = vmatpush2.msra.mxu0 0.0
    %3600 = vmatprep.subr.mxu0 0.0
    %3601 = vmatpush2.msra.mxu0 0.0
    %3602 = vmatprep.subr.mxu0 0.0
    %3603 = vmatpush2.msra.mxu0 0.0
    %3604 = vmatprep.subr.mxu0 0.0
    %3605 = vmatpush2.msra.mxu0 0.0
    %3606 = vmatprep.subr.mxu0 0.0
    %3607 = vmatpush2.msra.mxu0 0.0
    %3608 = vmatprep.subr.mxu0 0.0
    %3609 = vmatpush2.msra.mxu0 0.0
    %3610 = vmatprep.subr.mxu0 0.0
    %3611 = vmatpush2.msra.mxu0 0.0
    %3612 = vmatprep.subr.mxu0 0.0
    %3613 = vmatpush2.msra.mxu0 0.0
    %3614 = vmatprep.mubr.f32.mxu0 0.0
    %3615 = vmatmul.mubr.f32.gmra.mxu0 %v3548
    %v3616 = vpop.f32.mrf.mxu0
    %v3617 = vadd.f32 0.0, %v3616
    %v3618 = vpop.f32.mrf.mxu0
    %3619 = vdwg.mxu0
    %v3620 = vadd.f32 %v3534, %v3617
    %s3621 = scalar_lea.vmem [#allocation3], 432
    %v3622 = vld [vmem:[%s3621] sm:$0xff]
    %v3623 = vld [vmem:[%s3621 + $0x8] sm:$0xff]
    %v3624 = vld [vmem:[%s3621 + $0x10] sm:$0xff]
    %v3625 = vld [vmem:[%s3621 + $0x18] sm:$0xff]
    %v3626 = vld [vmem:[%s3621 + $0x20] sm:$0xff]
    %v3627 = vld [vmem:[%s3621 + $0x28] sm:$0xff]
    %v3628 = vld [vmem:[%s3621 + $0x30] sm:$0xff]
    %v3629 = vld [vmem:[%s3621 + $0x38] sm:$0xff]
    %v3630 = vld [vmem:[%s3621 + $0x40] sm:$0xff]
    %v3631 = vrot.slane %v3091, 6
    %v3632 = vrot.slane %v3093, 5
    %v3633 = vsel %vm3116, %v3632, %v3631
    %v3634 = vsel %vm3118, %v3633, 0
    %3636 = vmatprep.subr.mxu0 0.0
    %3637 = vmatpush1.msra.mxu0 0.0
    %3638 = vmatprep.subr.mxu0 0.0
    %3639 = vmatpush1.msra.mxu0 0.0
    %3640 = vmatprep.subr.mxu0 0.0
    %3641 = vmatpush1.msra.mxu0 0.0
    %3642 = vmatprep.subr.mxu0 0.0
    %3643 = vmatpush1.msra.mxu0 0.0
    %3644 = vmatprep.subr.mxu0 0.0
    %3645 = vmatpush1.msra.mxu0 0.0
    %3646 = vmatprep.subr.mxu0 0.0
    %3647 = vmatpush1.msra.mxu0 0.0
    %3648 = vmatprep.subr.mxu0 0.0
    %3649 = vmatpush1.msra.mxu0 0.0
    %3650 = vmatprep.subr.mxu0 0.0
    %3651 = vmatpush1.msra.mxu0 %v3630
    %3652 = vmatprep.subr.mxu0 0.0
    %3653 = vmatpush1.msra.mxu0 %v3629
    %3654 = vmatprep.subr.mxu0 0.0
    %3655 = vmatpush1.msra.mxu0 %v3628
    %3656 = vmatprep.subr.mxu0 0.0
    %3657 = vmatpush1.msra.mxu0 %v3627
    %3658 = vmatprep.subr.mxu0 0.0
    %3659 = vmatpush1.msra.mxu0 %v3626
    %3660 = vmatprep.subr.mxu0 0.0
    %3661 = vmatpush1.msra.mxu0 %v3625
    %3662 = vmatprep.subr.mxu0 0.0
    %3663 = vmatpush1.msra.mxu0 %v3624
    %3664 = vmatprep.subr.mxu0 0.0
    %3665 = vmatpush1.msra.mxu0 %v3623
    %3666 = vmatprep.subr.mxu0 0.0
    %3667 = vmatpush1.msra.mxu0 %v3622
    %3668 = vmatprep.subr.mxu0 0.0
    %3669 = vmatpush2.msra.mxu0 0.0
    %3670 = vmatprep.subr.mxu0 0.0
    %3671 = vmatpush2.msra.mxu0 0.0
    %3672 = vmatprep.subr.mxu0 0.0
    %3673 = vmatpush2.msra.mxu0 0.0
    %3674 = vmatprep.subr.mxu0 0.0
    %3675 = vmatpush2.msra.mxu0 0.0
    %3676 = vmatprep.subr.mxu0 0.0
    %3677 = vmatpush2.msra.mxu0 0.0
    %3678 = vmatprep.subr.mxu0 0.0
    %3679 = vmatpush2.msra.mxu0 0.0
    %3680 = vmatprep.subr.mxu0 0.0
    %3681 = vmatpush2.msra.mxu0 0.0
    %3682 = vmatprep.subr.mxu0 0.0
    %3683 = vmatpush2.msra.mxu0 0.0
    %3684 = vmatprep.subr.mxu0 0.0
    %3685 = vmatpush2.msra.mxu0 0.0
    %3686 = vmatprep.subr.mxu0 0.0
    %3687 = vmatpush2.msra.mxu0 0.0
    %3688 = vmatprep.subr.mxu0 0.0
    %3689 = vmatpush2.msra.mxu0 0.0
    %3690 = vmatprep.subr.mxu0 0.0
    %3691 = vmatpush2.msra.mxu0 0.0
    %3692 = vmatprep.subr.mxu0 0.0
    %3693 = vmatpush2.msra.mxu0 0.0
    %3694 = vmatprep.subr.mxu0 0.0
    %3695 = vmatpush2.msra.mxu0 0.0
    %3696 = vmatprep.subr.mxu0 0.0
    %3697 = vmatpush2.msra.mxu0 0.0
    %3698 = vmatprep.subr.mxu0 0.0
    %3699 = vmatpush2.msra.mxu0 0.0
    %3700 = vmatprep.mubr.f32.mxu0 0.0
    %3701 = vmatmul.mubr.f32.gmra.mxu0 %v3634
    %v3702 = vpop.f32.mrf.mxu0
    %v3703 = vadd.f32 0.0, %v3702
    %v3704 = vpop.f32.mrf.mxu0
    %3705 = vdwg.mxu0
    %v3706 = vadd.f32 %v3620, %v3703
    %s3707 = scalar_lea.vmem [#allocation3], 504
    %v3708 = vld [vmem:[%s3707] sm:$0xff]
    %v3709 = vld [vmem:[%s3707 + $0x8] sm:$0xff]
    %v3710 = vld [vmem:[%s3707 + $0x10] sm:$0xff]
    %v3711 = vld [vmem:[%s3707 + $0x18] sm:$0xff]
    %v3712 = vld [vmem:[%s3707 + $0x20] sm:$0xff]
    %v3713 = vld [vmem:[%s3707 + $0x28] sm:$0xff]
    %v3714 = vld [vmem:[%s3707 + $0x30] sm:$0xff]
    %v3715 = vld [vmem:[%s3707 + $0x38] sm:$0xff]
    %v3716 = vld [vmem:[%s3707 + $0x40] sm:$0xff]
    %v3717 = vrot.slane %v3091, 7
    %v3718 = vrot.slane %v3093, 6
    %v3719 = vsel %vm3116, %v3718, %v3717
    %v3720 = vsel %vm3118, %v3719, 0
    %3722 = vmatprep.subr.mxu0 0.0
    %3723 = vmatpush1.msra.mxu0 0.0
    %3724 = vmatprep.subr.mxu0 0.0
    %3725 = vmatpush1.msra.mxu0 0.0
    %3726 = vmatprep.subr.mxu0 0.0
    %3727 = vmatpush1.msra.mxu0 0.0
    %3728 = vmatprep.subr.mxu0 0.0
    %3729 = vmatpush1.msra.mxu0 0.0
    %3730 = vmatprep.subr.mxu0 0.0
    %3731 = vmatpush1.msra.mxu0 0.0
    %3732 = vmatprep.subr.mxu0 0.0
    %3733 = vmatpush1.msra.mxu0 0.0
    %3734 = vmatprep.subr.mxu0 0.0
    %3735 = vmatpush1.msra.mxu0 0.0
    %3736 = vmatprep.subr.mxu0 0.0
    %3737 = vmatpush1.msra.mxu0 %v3716
    %3738 = vmatprep.subr.mxu0 0.0
    %3739 = vmatpush1.msra.mxu0 %v3715
    %3740 = vmatprep.subr.mxu0 0.0
    %3741 = vmatpush1.msra.mxu0 %v3714
    %3742 = vmatprep.subr.mxu0 0.0
    %3743 = vmatpush1.msra.mxu0 %v3713
    %3744 = vmatprep.subr.mxu0 0.0
    %3745 = vmatpush1.msra.mxu0 %v3712
    %3746 = vmatprep.subr.mxu0 0.0
    %3747 = vmatpush1.msra.mxu0 %v3711
    %3748 = vmatprep.subr.mxu0 0.0
    %3749 = vmatpush1.msra.mxu0 %v3710
    %3750 = vmatprep.subr.mxu0 0.0
    %3751 = vmatpush1.msra.mxu0 %v3709
    %3752 = vmatprep.subr.mxu0 0.0
    %3753 = vmatpush1.msra.mxu0 %v3708
    %3754 = vmatprep.subr.mxu0 0.0
    %3755 = vmatpush2.msra.mxu0 0.0
    %3756 = vmatprep.subr.mxu0 0.0
    %3757 = vmatpush2.msra.mxu0 0.0
    %3758 = vmatprep.subr.mxu0 0.0
    %3759 = vmatpush2.msra.mxu0 0.0
    %3760 = vmatprep.subr.mxu0 0.0
    %3761 = vmatpush2.msra.mxu0 0.0
    %3762 = vmatprep.subr.mxu0 0.0
    %3763 = vmatpush2.msra.mxu0 0.0
    %3764 = vmatprep.subr.mxu0 0.0
    %3765 = vmatpush2.msra.mxu0 0.0
    %3766 = vmatprep.subr.mxu0 0.0
    %3767 = vmatpush2.msra.mxu0 0.0
    %3768 = vmatprep.subr.mxu0 0.0
    %3769 = vmatpush2.msra.mxu0 0.0
    %3770 = vmatprep.subr.mxu0 0.0
    %3771 = vmatpush2.msra.mxu0 0.0
    %3772 = vmatprep.subr.mxu0 0.0
    %3773 = vmatpush2.msra.mxu0 0.0
    %3774 = vmatprep.subr.mxu0 0.0
    %3775 = vmatpush2.msra.mxu0 0.0
    %3776 = vmatprep.subr.mxu0 0.0
    %3777 = vmatpush2.msra.mxu0 0.0
    %3778 = vmatprep.subr.mxu0 0.0
    %3779 = vmatpush2.msra.mxu0 0.0
    %3780 = vmatprep.subr.mxu0 0.0
    %3781 = vmatpush2.msra.mxu0 0.0
    %3782 = vmatprep.subr.mxu0 0.0
    %3783 = vmatpush2.msra.mxu0 0.0
    %3784 = vmatprep.subr.mxu0 0.0
    %3785 = vmatpush2.msra.mxu0 0.0
    %3786 = vmatprep.mubr.f32.mxu0 0.0
    %3787 = vmatmul.mubr.f32.gmra.mxu0 %v3720
    %v3788 = vpop.f32.mrf.mxu0
    %v3789 = vadd.f32 0.0, %v3788
    %v3790 = vpop.f32.mrf.mxu0
    %3791 = vdwg.mxu0
    %v3792 = vadd.f32 %v3706, %v3789
    %s3793 = scalar_lea.vmem [#allocation3], 576
    %v3794 = vld [vmem:[%s3793] sm:$0xff]
    %v3795 = vld [vmem:[%s3793 + $0x8] sm:$0xff]
    %v3796 = vld [vmem:[%s3793 + $0x10] sm:$0xff]
    %v3797 = vld [vmem:[%s3793 + $0x18] sm:$0xff]
    %v3798 = vld [vmem:[%s3793 + $0x20] sm:$0xff]
    %v3799 = vld [vmem:[%s3793 + $0x28] sm:$0xff]
    %v3800 = vld [vmem:[%s3793 + $0x30] sm:$0xff]
    %v3801 = vld [vmem:[%s3793 + $0x38] sm:$0xff]
    %v3802 = vld [vmem:[%s3793 + $0x40] sm:$0xff]
    %v3805 = vrot.slane %v3094, 7
    %v3806 = vsel %vm3116, %v3805, %v3092
    %v3807 = vsel %vm3118, %v3806, 0
    %3809 = vmatprep.subr.mxu0 0.0
    %3810 = vmatpush1.msra.mxu0 0.0
    %3811 = vmatprep.subr.mxu0 0.0
    %3812 = vmatpush1.msra.mxu0 0.0
    %3813 = vmatprep.subr.mxu0 0.0
    %3814 = vmatpush1.msra.mxu0 0.0
    %3815 = vmatprep.subr.mxu0 0.0
    %3816 = vmatpush1.msra.mxu0 0.0
    %3817 = vmatprep.subr.mxu0 0.0
    %3818 = vmatpush1.msra.mxu0 0.0
    %3819 = vmatprep.subr.mxu0 0.0
    %3820 = vmatpush1.msra.mxu0 0.0
    %3821 = vmatprep.subr.mxu0 0.0
    %3822 = vmatpush1.msra.mxu0 0.0
    %3823 = vmatprep.subr.mxu0 0.0
    %3824 = vmatpush1.msra.mxu0 %v3802
    %3825 = vmatprep.subr.mxu0 0.0
    %3826 = vmatpush1.msra.mxu0 %v3801
    %3827 = vmatprep.subr.mxu0 0.0
    %3828 = vmatpush1.msra.mxu0 %v3800
    %3829 = vmatprep.subr.mxu0 0.0
    %3830 = vmatpush1.msra.mxu0 %v3799
    %3831 = vmatprep.subr.mxu0 0.0
    %3832 = vmatpush1.msra.mxu0 %v3798
    %3833 = vmatprep.subr.mxu0 0.0
    %3834 = vmatpush1.msra.mxu0 %v3797
    %3835 = vmatprep.subr.mxu0 0.0
    %3836 = vmatpush1.msra.mxu0 %v3796
    %3837 = vmatprep.subr.mxu0 0.0
    %3838 = vmatpush1.msra.mxu0 %v3795
    %3839 = vmatprep.subr.mxu0 0.0
    %3840 = vmatpush1.msra.mxu0 %v3794
    %3841 = vmatprep.subr.mxu0 0.0
    %3842 = vmatpush2.msra.mxu0 0.0
    %3843 = vmatprep.subr.mxu0 0.0
    %3844 = vmatpush2.msra.mxu0 0.0
    %3845 = vmatprep.subr.mxu0 0.0
    %3846 = vmatpush2.msra.mxu0 0.0
    %3847 = vmatprep.subr.mxu0 0.0
    %3848 = vmatpush2.msra.mxu0 0.0
    %3849 = vmatprep.subr.mxu0 0.0
    %3850 = vmatpush2.msra.mxu0 0.0
    %3851 = vmatprep.subr.mxu0 0.0
    %3852 = vmatpush2.msra.mxu0 0.0
    %3853 = vmatprep.subr.mxu0 0.0
    %3854 = vmatpush2.msra.mxu0 0.0
    %3855 = vmatprep.subr.mxu0 0.0
    %3856 = vmatpush2.msra.mxu0 0.0
    %3857 = vmatprep.subr.mxu0 0.0
    %3858 = vmatpush2.msra.mxu0 0.0
    %3859 = vmatprep.subr.mxu0 0.0
    %3860 = vmatpush2.msra.mxu0 0.0
    %3861 = vmatprep.subr.mxu0 0.0
    %3862 = vmatpush2.msra.mxu0 0.0
    %3863 = vmatprep.subr.mxu0 0.0
    %3864 = vmatpush2.msra.mxu0 0.0
    %3865 = vmatprep.subr.mxu0 0.0
    %3866 = vmatpush2.msra.mxu0 0.0
    %3867 = vmatprep.subr.mxu0 0.0
    %3868 = vmatpush2.msra.mxu0 0.0
    %3869 = vmatprep.subr.mxu0 0.0
    %3870 = vmatpush2.msra.mxu0 0.0
    %3871 = vmatprep.subr.mxu0 0.0
    %3872 = vmatpush2.msra.mxu0 0.0
    %3873 = vmatprep.mubr.f32.mxu0 0.0
    %3874 = vmatmul.mubr.f32.gmra.mxu0 %v3807
    %v3875 = vpop.f32.mrf.mxu0
    %v3876 = vadd.f32 0.0, %v3875
    %v3877 = vpop.f32.mrf.mxu0
    %3878 = vdwg.mxu0
    %v3879 = vadd.f32 %v3792, %v3876
    %s3880 = scalar_lea.vmem [#allocation3], 648
    %v3881 = vld [vmem:[%s3880] sm:$0xff]
    %v3882 = vld [vmem:[%s3880 + $0x8] sm:$0xff]
    %v3883 = vld [vmem:[%s3880 + $0x10] sm:$0xff]
    %v3884 = vld [vmem:[%s3880 + $0x18] sm:$0xff]
    %v3885 = vld [vmem:[%s3880 + $0x20] sm:$0xff]
    %v3886 = vld [vmem:[%s3880 + $0x28] sm:$0xff]
    %v3887 = vld [vmem:[%s3880 + $0x30] sm:$0xff]
    %v3888 = vld [vmem:[%s3880 + $0x38] sm:$0xff]
    %v3889 = vld [vmem:[%s3880 + $0x40] sm:$0xff]
    %v3890 = vrot.slane %v3092, 1
    %v3891 = vsel %vm3116, %v3094, %v3890
    %v3892 = vsel %vm3118, %v3891, 0
    %3894 = vmatprep.subr.mxu0 0.0
    %3895 = vmatpush1.msra.mxu0 0.0
    %3896 = vmatprep.subr.mxu0 0.0
    %3897 = vmatpush1.msra.mxu0 0.0
    %3898 = vmatprep.subr.mxu0 0.0
    %3899 = vmatpush1.msra.mxu0 0.0
    %3900 = vmatprep.subr.mxu0 0.0
    %3901 = vmatpush1.msra.mxu0 0.0
    %3902 = vmatprep.subr.mxu0 0.0
    %3903 = vmatpush1.msra.mxu0 0.0
    %3904 = vmatprep.subr.mxu0 0.0
    %3905 = vmatpush1.msra.mxu0 0.0
    %3906 = vmatprep.subr.mxu0 0.0
    %3907 = vmatpush1.msra.mxu0 0.0
    %3908 = vmatprep.subr.mxu0 0.0
    %3909 = vmatpush1.msra.mxu0 %v3889
    %3910 = vmatprep.subr.mxu0 0.0
    %3911 = vmatpush1.msra.mxu0 %v3888
    %3912 = vmatprep.subr.mxu0 0.0
    %3913 = vmatpush1.msra.mxu0 %v3887
    %3914 = vmatprep.subr.mxu0 0.0
    %3915 = vmatpush1.msra.mxu0 %v3886
    %3916 = vmatprep.subr.mxu0 0.0
    %3917 = vmatpush1.msra.mxu0 %v3885
    %3918 = vmatprep.subr.mxu0 0.0
    %3919 = vmatpush1.msra.mxu0 %v3884
    %3920 = vmatprep.subr.mxu0 0.0
    %3921 = vmatpush1.msra.mxu0 %v3883
    %3922 = vmatprep.subr.mxu0 0.0
    %3923 = vmatpush1.msra.mxu0 %v3882
    %3924 = vmatprep.subr.mxu0 0.0
    %3925 = vmatpush1.msra.mxu0 %v3881
    %3926 = vmatprep.subr.mxu0 0.0
    %3927 = vmatpush2.msra.mxu0 0.0
    %3928 = vmatprep.subr.mxu0 0.0
    %3929 = vmatpush2.msra.mxu0 0.0
    %3930 = vmatprep.subr.mxu0 0.0
    %3931 = vmatpush2.msra.mxu0 0.0
    %3932 = vmatprep.subr.mxu0 0.0
    %3933 = vmatpush2.msra.mxu0 0.0
    %3934 = vmatprep.subr.mxu0 0.0
    %3935 = vmatpush2.msra.mxu0 0.0
    %3936 = vmatprep.subr.mxu0 0.0
    %3937 = vmatpush2.msra.mxu0 0.0
    %3938 = vmatprep.subr.mxu0 0.0
    %3939 = vmatpush2.msra.mxu0 0.0
    %3940 = vmatprep.subr.mxu0 0.0
    %3941 = vmatpush2.msra.mxu0 0.0
    %3942 = vmatprep.subr.mxu0 0.0
    %3943 = vmatpush2.msra.mxu0 0.0
    %3944 = vmatprep.subr.mxu0 0.0
    %3945 = vmatpush2.msra.mxu0 0.0
    %3946 = vmatprep.subr.mxu0 0.0
    %3947 = vmatpush2.msra.mxu0 0.0
    %3948 = vmatprep.subr.mxu0 0.0
    %3949 = vmatpush2.msra.mxu0 0.0
    %3950 = vmatprep.subr.mxu0 0.0
    %3951 = vmatpush2.msra.mxu0 0.0
    %3952 = vmatprep.subr.mxu0 0.0
    %3953 = vmatpush2.msra.mxu0 0.0
    %3954 = vmatprep.subr.mxu0 0.0
    %3955 = vmatpush2.msra.mxu0 0.0
    %3956 = vmatprep.subr.mxu0 0.0
    %3957 = vmatpush2.msra.mxu0 0.0
    %3958 = vmatprep.mubr.f32.mxu0 0.0
    %3959 = vmatmul.mubr.f32.gmra.mxu0 %v3892
    %v3960 = vpop.f32.mrf.mxu0
    %v3961 = vadd.f32 0.0, %v3960
    %v3962 = vpop.f32.mrf.mxu0
    %3963 = vdwg.mxu0
    %v3964 = vadd.f32 %v3879, %v3961
    %s3965 = scalar_lea.vmem [#allocation3], 720
    %v3966 = vld [vmem:[%s3965] sm:$0xff]
    %v3967 = vld [vmem:[%s3965 + $0x8] sm:$0xff]
    %v3968 = vld [vmem:[%s3965 + $0x10] sm:$0xff]
    %v3969 = vld [vmem:[%s3965 + $0x18] sm:$0xff]
    %v3970 = vld [vmem:[%s3965 + $0x20] sm:$0xff]
    %v3971 = vld [vmem:[%s3965 + $0x28] sm:$0xff]
    %v3972 = vld [vmem:[%s3965 + $0x30] sm:$0xff]
    %v3973 = vld [vmem:[%s3965 + $0x38] sm:$0xff]
    %v3974 = vld [vmem:[%s3965 + $0x40] sm:$0xff]
    %v3975 = vrot.slane %v3092, 2
    %v3976 = vrot.slane %v3094, 1
    %v3977 = vsel %vm3116, %v3976, %v3975
    %v3978 = vsel %vm3118, %v3977, 0
    %3980 = vmatprep.subr.mxu0 0.0
    %3981 = vmatpush1.msra.mxu0 0.0
    %3982 = vmatprep.subr.mxu0 0.0
    %3983 = vmatpush1.msra.mxu0 0.0
    %3984 = vmatprep.subr.mxu0 0.0
    %3985 = vmatpush1.msra.mxu0 0.0
    %3986 = vmatprep.subr.mxu0 0.0
    %3987 = vmatpush1.msra.mxu0 0.0
    %3988 = vmatprep.subr.mxu0 0.0
    %3989 = vmatpush1.msra.mxu0 0.0
    %3990 = vmatprep.subr.mxu0 0.0
    %3991 = vmatpush1.msra.mxu0 0.0
    %3992 = vmatprep.subr.mxu0 0.0
    %3993 = vmatpush1.msra.mxu0 0.0
    %3994 = vmatprep.subr.mxu0 0.0
    %3995 = vmatpush1.msra.mxu0 %v3974
    %3996 = vmatprep.subr.mxu0 0.0
    %3997 = vmatpush1.msra.mxu0 %v3973
    %3998 = vmatprep.subr.mxu0 0.0
    %3999 = vmatpush1.msra.mxu0 %v3972
    %4000 = vmatprep.subr.mxu0 0.0
    %4001 = vmatpush1.msra.mxu0 %v3971
    %4002 = vmatprep.subr.mxu0 0.0
    %4003 = vmatpush1.msra.mxu0 %v3970
    %4004 = vmatprep.subr.mxu0 0.0
    %4005 = vmatpush1.msra.mxu0 %v3969
    %4006 = vmatprep.subr.mxu0 0.0
    %4007 = vmatpush1.msra.mxu0 %v3968
    %4008 = vmatprep.subr.mxu0 0.0
    %4009 = vmatpush1.msra.mxu0 %v3967
    %4010 = vmatprep.subr.mxu0 0.0
    %4011 = vmatpush1.msra.mxu0 %v3966
    %4012 = vmatprep.subr.mxu0 0.0
    %4013 = vmatpush2.msra.mxu0 0.0
    %4014 = vmatprep.subr.mxu0 0.0
    %4015 = vmatpush2.msra.mxu0 0.0
    %4016 = vmatprep.subr.mxu0 0.0
    %4017 = vmatpush2.msra.mxu0 0.0
    %4018 = vmatprep.subr.mxu0 0.0
    %4019 = vmatpush2.msra.mxu0 0.0
    %4020 = vmatprep.subr.mxu0 0.0
    %4021 = vmatpush2.msra.mxu0 0.0
    %4022 = vmatprep.subr.mxu0 0.0
    %4023 = vmatpush2.msra.mxu0 0.0
    %4024 = vmatprep.subr.mxu0 0.0
    %4025 = vmatpush2.msra.mxu0 0.0
    %4026 = vmatprep.subr.mxu0 0.0
    %4027 = vmatpush2.msra.mxu0 0.0
    %4028 = vmatprep.subr.mxu0 0.0
    %4029 = vmatpush2.msra.mxu0 0.0
    %4030 = vmatprep.subr.mxu0 0.0
    %4031 = vmatpush2.msra.mxu0 0.0
    %4032 = vmatprep.subr.mxu0 0.0
    %4033 = vmatpush2.msra.mxu0 0.0
    %4034 = vmatprep.subr.mxu0 0.0
    %4035 = vmatpush2.msra.mxu0 0.0
    %4036 = vmatprep.subr.mxu0 0.0
    %4037 = vmatpush2.msra.mxu0 0.0
    %4038 = vmatprep.subr.mxu0 0.0
    %4039 = vmatpush2.msra.mxu0 0.0
    %4040 = vmatprep.subr.mxu0 0.0
    %4041 = vmatpush2.msra.mxu0 0.0
    %4042 = vmatprep.subr.mxu0 0.0
    %4043 = vmatpush2.msra.mxu0 0.0
    %4044 = vmatprep.mubr.f32.mxu0 0.0
    %4045 = vmatmul.mubr.f32.gmra.mxu0 %v3978
    %v4046 = vpop.f32.mrf.mxu0
    %v4047 = vadd.f32 0.0, %v4046
    %v4048 = vpop.f32.mrf.mxu0
    %4049 = vdwg.mxu0
    %v4050 = vadd.f32 %v3964, %v4047
    %s4051 = scalar_lea.vmem [#allocation3], 792
    %v4052 = vld [vmem:[%s4051] sm:$0xff]
    %v4053 = vld [vmem:[%s4051 + $0x8] sm:$0xff]
    %v4054 = vld [vmem:[%s4051 + $0x10] sm:$0xff]
    %v4055 = vld [vmem:[%s4051 + $0x18] sm:$0xff]
    %v4056 = vld [vmem:[%s4051 + $0x20] sm:$0xff]
    %v4057 = vld [vmem:[%s4051 + $0x28] sm:$0xff]
    %v4058 = vld [vmem:[%s4051 + $0x30] sm:$0xff]
    %v4059 = vld [vmem:[%s4051 + $0x38] sm:$0xff]
    %v4060 = vld [vmem:[%s4051 + $0x40] sm:$0xff]
    %v4061 = vrot.slane %v3092, 3
    %v4062 = vrot.slane %v3094, 2
    %v4063 = vsel %vm3116, %v4062, %v4061
    %v4064 = vsel %vm3118, %v4063, 0
    %4066 = vmatprep.subr.mxu0 0.0
    %4067 = vmatpush1.msra.mxu0 0.0
    %4068 = vmatprep.subr.mxu0 0.0
    %4069 = vmatpush1.msra.mxu0 0.0
    %4070 = vmatprep.subr.mxu0 0.0
    %4071 = vmatpush1.msra.mxu0 0.0
    %4072 = vmatprep.subr.mxu0 0.0
    %4073 = vmatpush1.msra.mxu0 0.0
    %4074 = vmatprep.subr.mxu0 0.0
    %4075 = vmatpush1.msra.mxu0 0.0
    %4076 = vmatprep.subr.mxu0 0.0
    %4077 = vmatpush1.msra.mxu0 0.0
    %4078 = vmatprep.subr.mxu0 0.0
    %4079 = vmatpush1.msra.mxu0 0.0
    %4080 = vmatprep.subr.mxu0 0.0
    %4081 = vmatpush1.msra.mxu0 %v4060
    %4082 = vmatprep.subr.mxu0 0.0
    %4083 = vmatpush1.msra.mxu0 %v4059
    %4084 = vmatprep.subr.mxu0 0.0
    %4085 = vmatpush1.msra.mxu0 %v4058
    %4086 = vmatprep.subr.mxu0 0.0
    %4087 = vmatpush1.msra.mxu0 %v4057
    %4088 = vmatprep.subr.mxu0 0.0
    %4089 = vmatpush1.msra.mxu0 %v4056
    %4090 = vmatprep.subr.mxu0 0.0
    %4091 = vmatpush1.msra.mxu0 %v4055
    %4092 = vmatprep.subr.mxu0 0.0
    %4093 = vmatpush1.msra.mxu0 %v4054
    %4094 = vmatprep.subr.mxu0 0.0
    %4095 = vmatpush1.msra.mxu0 %v4053
    %4096 = vmatprep.subr.mxu0 0.0
    %4097 = vmatpush1.msra.mxu0 %v4052
    %4098 = vmatprep.subr.mxu0 0.0
    %4099 = vmatpush2.msra.mxu0 0.0
    %4100 = vmatprep.subr.mxu0 0.0
    %4101 = vmatpush2.msra.mxu0 0.0
    %4102 = vmatprep.subr.mxu0 0.0
    %4103 = vmatpush2.msra.mxu0 0.0
    %4104 = vmatprep.subr.mxu0 0.0
    %4105 = vmatpush2.msra.mxu0 0.0
    %4106 = vmatprep.subr.mxu0 0.0
    %4107 = vmatpush2.msra.mxu0 0.0
    %4108 = vmatprep.subr.mxu0 0.0
    %4109 = vmatpush2.msra.mxu0 0.0
    %4110 = vmatprep.subr.mxu0 0.0
    %4111 = vmatpush2.msra.mxu0 0.0
    %4112 = vmatprep.subr.mxu0 0.0
    %4113 = vmatpush2.msra.mxu0 0.0
    %4114 = vmatprep.subr.mxu0 0.0
    %4115 = vmatpush2.msra.mxu0 0.0
    %4116 = vmatprep.subr.mxu0 0.0
    %4117 = vmatpush2.msra.mxu0 0.0
    %4118 = vmatprep.subr.mxu0 0.0
    %4119 = vmatpush2.msra.mxu0 0.0
    %4120 = vmatprep.subr.mxu0 0.0
    %4121 = vmatpush2.msra.mxu0 0.0
    %4122 = vmatprep.subr.mxu0 0.0
    %4123 = vmatpush2.msra.mxu0 0.0
    %4124 = vmatprep.subr.mxu0 0.0
    %4125 = vmatpush2.msra.mxu0 0.0
    %4126 = vmatprep.subr.mxu0 0.0
    %4127 = vmatpush2.msra.mxu0 0.0
    %4128 = vmatprep.subr.mxu0 0.0
    %4129 = vmatpush2.msra.mxu0 0.0
    %4130 = vmatprep.mubr.f32.mxu0 0.0
    %4131 = vmatmul.mubr.f32.gmra.mxu0 %v4064
    %v4132 = vpop.f32.mrf.mxu0
    %v4133 = vadd.f32 0.0, %v4132
    %v4134 = vpop.f32.mrf.mxu0
    %4135 = vdwg.mxu0
    %v4136 = vadd.f32 %v4050, %v4133
    %s4137 = scalar_lea.vmem [#allocation3], 864
    %v4138 = vld [vmem:[%s4137] sm:$0xff]
    %v4139 = vld [vmem:[%s4137 + $0x8] sm:$0xff]
    %v4140 = vld [vmem:[%s4137 + $0x10] sm:$0xff]
    %v4141 = vld [vmem:[%s4137 + $0x18] sm:$0xff]
    %v4142 = vld [vmem:[%s4137 + $0x20] sm:$0xff]
    %v4143 = vld [vmem:[%s4137 + $0x28] sm:$0xff]
    %v4144 = vld [vmem:[%s4137 + $0x30] sm:$0xff]
    %v4145 = vld [vmem:[%s4137 + $0x38] sm:$0xff]
    %v4146 = vld [vmem:[%s4137 + $0x40] sm:$0xff]
    %v4147 = vrot.slane %v3092, 4
    %v4148 = vrot.slane %v3094, 3
    %v4149 = vsel %vm3116, %v4148, %v4147
    %v4150 = vsel %vm3118, %v4149, 0
    %4152 = vmatprep.subr.mxu0 0.0
    %4153 = vmatpush1.msra.mxu0 0.0
    %4154 = vmatprep.subr.mxu0 0.0
    %4155 = vmatpush1.msra.mxu0 0.0
    %4156 = vmatprep.subr.mxu0 0.0
    %4157 = vmatpush1.msra.mxu0 0.0
    %4158 = vmatprep.subr.mxu0 0.0
    %4159 = vmatpush1.msra.mxu0 0.0
    %4160 = vmatprep.subr.mxu0 0.0
    %4161 = vmatpush1.msra.mxu0 0.0
    %4162 = vmatprep.subr.mxu0 0.0
    %4163 = vmatpush1.msra.mxu0 0.0
    %4164 = vmatprep.subr.mxu0 0.0
    %4165 = vmatpush1.msra.mxu0 0.0
    %4166 = vmatprep.subr.mxu0 0.0
    %4167 = vmatpush1.msra.mxu0 %v4146
    %4168 = vmatprep.subr.mxu0 0.0
    %4169 = vmatpush1.msra.mxu0 %v4145
    %4170 = vmatprep.subr.mxu0 0.0
    %4171 = vmatpush1.msra.mxu0 %v4144
    %4172 = vmatprep.subr.mxu0 0.0
    %4173 = vmatpush1.msra.mxu0 %v4143
    %4174 = vmatprep.subr.mxu0 0.0
    %4175 = vmatpush1.msra.mxu0 %v4142
    %4176 = vmatprep.subr.mxu0 0.0
    %4177 = vmatpush1.msra.mxu0 %v4141
    %4178 = vmatprep.subr.mxu0 0.0
    %4179 = vmatpush1.msra.mxu0 %v4140
    %4180 = vmatprep.subr.mxu0 0.0
    %4181 = vmatpush1.msra.mxu0 %v4139
    %4182 = vmatprep.subr.mxu0 0.0
    %4183 = vmatpush1.msra.mxu0 %v4138
    %4184 = vmatprep.subr.mxu0 0.0
    %4185 = vmatpush2.msra.mxu0 0.0
    %4186 = vmatprep.subr.mxu0 0.0
    %4187 = vmatpush2.msra.mxu0 0.0
    %4188 = vmatprep.subr.mxu0 0.0
    %4189 = vmatpush2.msra.mxu0 0.0
    %4190 = vmatprep.subr.mxu0 0.0
    %4191 = vmatpush2.msra.mxu0 0.0
    %4192 = vmatprep.subr.mxu0 0.0
    %4193 = vmatpush2.msra.mxu0 0.0
    %4194 = vmatprep.subr.mxu0 0.0
    %4195 = vmatpush2.msra.mxu0 0.0
    %4196 = vmatprep.subr.mxu0 0.0
    %4197 = vmatpush2.msra.mxu0 0.0
    %4198 = vmatprep.subr.mxu0 0.0
    %4199 = vmatpush2.msra.mxu0 0.0
    %4200 = vmatprep.subr.mxu0 0.0
    %4201 = vmatpush2.msra.mxu0 0.0
    %4202 = vmatprep.subr.mxu0 0.0
    %4203 = vmatpush2.msra.mxu0 0.0
    %4204 = vmatprep.subr.mxu0 0.0
    %4205 = vmatpush2.msra.mxu0 0.0
    %4206 = vmatprep.subr.mxu0 0.0
    %4207 = vmatpush2.msra.mxu0 0.0
    %4208 = vmatprep.subr.mxu0 0.0
    %4209 = vmatpush2.msra.mxu0 0.0
    %4210 = vmatprep.subr.mxu0 0.0
    %4211 = vmatpush2.msra.mxu0 0.0
    %4212 = vmatprep.subr.mxu0 0.0
    %4213 = vmatpush2.msra.mxu0 0.0
    %4214 = vmatprep.subr.mxu0 0.0
    %4215 = vmatpush2.msra.mxu0 0.0
    %4216 = vmatprep.mubr.f32.mxu0 0.0
    %4217 = vmatmul.mubr.f32.gmra.mxu0 %v4150
    %v4218 = vpop.f32.mrf.mxu0
    %v4219 = vadd.f32 0.0, %v4218
    %v4220 = vpop.f32.mrf.mxu0
    %4221 = vdwg.mxu0
    %v4222 = vadd.f32 %v4136, %v4219
    %s4223 = scalar_lea.vmem [#allocation3], 936
    %v4224 = vld [vmem:[%s4223] sm:$0xff]
    %v4225 = vld [vmem:[%s4223 + $0x8] sm:$0xff]
    %v4226 = vld [vmem:[%s4223 + $0x10] sm:$0xff]
    %v4227 = vld [vmem:[%s4223 + $0x18] sm:$0xff]
    %v4228 = vld [vmem:[%s4223 + $0x20] sm:$0xff]
    %v4229 = vld [vmem:[%s4223 + $0x28] sm:$0xff]
    %v4230 = vld [vmem:[%s4223 + $0x30] sm:$0xff]
    %v4231 = vld [vmem:[%s4223 + $0x38] sm:$0xff]
    %v4232 = vld [vmem:[%s4223 + $0x40] sm:$0xff]
    %v4233 = vrot.slane %v3092, 5
    %v4234 = vrot.slane %v3094, 4
    %v4235 = vsel %vm3116, %v4234, %v4233
    %v4236 = vsel %vm3118, %v4235, 0
    %4238 = vmatprep.subr.mxu0 0.0
    %4239 = vmatpush1.msra.mxu0 0.0
    %4240 = vmatprep.subr.mxu0 0.0
    %4241 = vmatpush1.msra.mxu0 0.0
    %4242 = vmatprep.subr.mxu0 0.0
    %4243 = vmatpush1.msra.mxu0 0.0
    %4244 = vmatprep.subr.mxu0 0.0
    %4245 = vmatpush1.msra.mxu0 0.0
    %4246 = vmatprep.subr.mxu0 0.0
    %4247 = vmatpush1.msra.mxu0 0.0
    %4248 = vmatprep.subr.mxu0 0.0
    %4249 = vmatpush1.msra.mxu0 0.0
    %4250 = vmatprep.subr.mxu0 0.0
    %4251 = vmatpush1.msra.mxu0 0.0
    %4252 = vmatprep.subr.mxu0 0.0
    %4253 = vmatpush1.msra.mxu0 %v4232
    %4254 = vmatprep.subr.mxu0 0.0
    %4255 = vmatpush1.msra.mxu0 %v4231
    %4256 = vmatprep.subr.mxu0 0.0
    %4257 = vmatpush1.msra.mxu0 %v4230
    %4258 = vmatprep.subr.mxu0 0.0
    %4259 = vmatpush1.msra.mxu0 %v4229
    %4260 = vmatprep.subr.mxu0 0.0
    %4261 = vmatpush1.msra.mxu0 %v4228
    %4262 = vmatprep.subr.mxu0 0.0
    %4263 = vmatpush1.msra.mxu0 %v4227
    %4264 = vmatprep.subr.mxu0 0.0
    %4265 = vmatpush1.msra.mxu0 %v4226
    %4266 = vmatprep.subr.mxu0 0.0
    %4267 = vmatpush1.msra.mxu0 %v4225
    %4268 = vmatprep.subr.mxu0 0.0
    %4269 = vmatpush1.msra.mxu0 %v4224
    %4270 = vmatprep.subr.mxu0 0.0
    %4271 = vmatpush2.msra.mxu0 0.0
    %4272 = vmatprep.subr.mxu0 0.0
    %4273 = vmatpush2.msra.mxu0 0.0
    %4274 = vmatprep.subr.mxu0 0.0
    %4275 = vmatpush2.msra.mxu0 0.0
    %4276 = vmatprep.subr.mxu0 0.0
    %4277 = vmatpush2.msra.mxu0 0.0
    %4278 = vmatprep.subr.mxu0 0.0
    %4279 = vmatpush2.msra.mxu0 0.0
    %4280 = vmatprep.subr.mxu0 0.0
    %4281 = vmatpush2.msra.mxu0 0.0
    %4282 = vmatprep.subr.mxu0 0.0
    %4283 = vmatpush2.msra.mxu0 0.0
    %4284 = vmatprep.subr.mxu0 0.0
    %4285 = vmatpush2.msra.mxu0 0.0
    %4286 = vmatprep.subr.mxu0 0.0
    %4287 = vmatpush2.msra.mxu0 0.0
    %4288 = vmatprep.subr.mxu0 0.0
    %4289 = vmatpush2.msra.mxu0 0.0
    %4290 = vmatprep.subr.mxu0 0.0
    %4291 = vmatpush2.msra.mxu0 0.0
    %4292 = vmatprep.subr.mxu0 0.0
    %4293 = vmatpush2.msra.mxu0 0.0
    %4294 = vmatprep.subr.mxu0 0.0
    %4295 = vmatpush2.msra.mxu0 0.0
    %4296 = vmatprep.subr.mxu0 0.0
    %4297 = vmatpush2.msra.mxu0 0.0
    %4298 = vmatprep.subr.mxu0 0.0
    %4299 = vmatpush2.msra.mxu0 0.0
    %4300 = vmatprep.subr.mxu0 0.0
    %4301 = vmatpush2.msra.mxu0 0.0
    %4302 = vmatprep.mubr.f32.mxu0 0.0
    %4303 = vmatmul.mubr.f32.gmra.mxu0 %v4236
    %v4304 = vpop.f32.mrf.mxu0
    %v4305 = vadd.f32 0.0, %v4304
    %v4306 = vpop.f32.mrf.mxu0
    %4307 = vdwg.mxu0
    %v4308 = vadd.f32 %v4222, %v4305
    %s4309 = scalar_lea.vmem [#allocation3], 1008
    %v4310 = vld [vmem:[%s4309] sm:$0xff]
    %v4311 = vld [vmem:[%s4309 + $0x8] sm:$0xff]
    %v4312 = vld [vmem:[%s4309 + $0x10] sm:$0xff]
    %v4313 = vld [vmem:[%s4309 + $0x18] sm:$0xff]
    %v4314 = vld [vmem:[%s4309 + $0x20] sm:$0xff]
    %v4315 = vld [vmem:[%s4309 + $0x28] sm:$0xff]
    %v4316 = vld [vmem:[%s4309 + $0x30] sm:$0xff]
    %v4317 = vld [vmem:[%s4309 + $0x38] sm:$0xff]
    %v4318 = vld [vmem:[%s4309 + $0x40] sm:$0xff]
    %v4319 = vrot.slane %v3092, 6
    %v4320 = vrot.slane %v3094, 5
    %v4321 = vsel %vm3116, %v4320, %v4319
    %v4322 = vsel %vm3118, %v4321, 0
    %4324 = vmatprep.subr.mxu0 0.0
    %4325 = vmatpush1.msra.mxu0 0.0
    %4326 = vmatprep.subr.mxu0 0.0
    %4327 = vmatpush1.msra.mxu0 0.0
    %4328 = vmatprep.subr.mxu0 0.0
    %4329 = vmatpush1.msra.mxu0 0.0
    %4330 = vmatprep.subr.mxu0 0.0
    %4331 = vmatpush1.msra.mxu0 0.0
    %4332 = vmatprep.subr.mxu0 0.0
    %4333 = vmatpush1.msra.mxu0 0.0
    %4334 = vmatprep.subr.mxu0 0.0
    %4335 = vmatpush1.msra.mxu0 0.0
    %4336 = vmatprep.subr.mxu0 0.0
    %4337 = vmatpush1.msra.mxu0 0.0
    %4338 = vmatprep.subr.mxu0 0.0
    %4339 = vmatpush1.msra.mxu0 %v4318
    %4340 = vmatprep.subr.mxu0 0.0
    %4341 = vmatpush1.msra.mxu0 %v4317
    %4342 = vmatprep.subr.mxu0 0.0
    %4343 = vmatpush1.msra.mxu0 %v4316
    %4344 = vmatprep.subr.mxu0 0.0
    %4345 = vmatpush1.msra.mxu0 %v4315
    %4346 = vmatprep.subr.mxu0 0.0
    %4347 = vmatpush1.msra.mxu0 %v4314
    %4348 = vmatprep.subr.mxu0 0.0
    %4349 = vmatpush1.msra.mxu0 %v4313
    %4350 = vmatprep.subr.mxu0 0.0
    %4351 = vmatpush1.msra.mxu0 %v4312
    %4352 = vmatprep.subr.mxu0 0.0
    %4353 = vmatpush1.msra.mxu0 %v4311
    %4354 = vmatprep.subr.mxu0 0.0
    %4355 = vmatpush1.msra.mxu0 %v4310
    %4356 = vmatprep.subr.mxu0 0.0
    %4357 = vmatpush2.msra.mxu0 0.0
    %4358 = vmatprep.subr.mxu0 0.0
    %4359 = vmatpush2.msra.mxu0 0.0
    %4360 = vmatprep.subr.mxu0 0.0
    %4361 = vmatpush2.msra.mxu0 0.0
    %4362 = vmatprep.subr.mxu0 0.0
    %4363 = vmatpush2.msra.mxu0 0.0
    %4364 = vmatprep.subr.mxu0 0.0
    %4365 = vmatpush2.msra.mxu0 0.0
    %4366 = vmatprep.subr.mxu0 0.0
    %4367 = vmatpush2.msra.mxu0 0.0
    %4368 = vmatprep.subr.mxu0 0.0
    %4369 = vmatpush2.msra.mxu0 0.0
    %4370 = vmatprep.subr.mxu0 0.0
    %4371 = vmatpush2.msra.mxu0 0.0
    %4372 = vmatprep.subr.mxu0 0.0
    %4373 = vmatpush2.msra.mxu0 0.0
    %4374 = vmatprep.subr.mxu0 0.0
    %4375 = vmatpush2.msra.mxu0 0.0
    %4376 = vmatprep.subr.mxu0 0.0
    %4377 = vmatpush2.msra.mxu0 0.0
    %4378 = vmatprep.subr.mxu0 0.0
    %4379 = vmatpush2.msra.mxu0 0.0
    %4380 = vmatprep.subr.mxu0 0.0
    %4381 = vmatpush2.msra.mxu0 0.0
    %4382 = vmatprep.subr.mxu0 0.0
    %4383 = vmatpush2.msra.mxu0 0.0
    %4384 = vmatprep.subr.mxu0 0.0
    %4385 = vmatpush2.msra.mxu0 0.0
    %4386 = vmatprep.subr.mxu0 0.0
    %4387 = vmatpush2.msra.mxu0 0.0
    %4388 = vmatprep.mubr.f32.mxu0 0.0
    %4389 = vmatmul.mubr.f32.gmra.mxu0 %v4322
    %v4390 = vpop.f32.mrf.mxu0
    %v4391 = vadd.f32 0.0, %v4390
    %v4392 = vpop.f32.mrf.mxu0
    %4393 = vdwg.mxu0
    %v4394 = vadd.f32 %v4308, %v4391
    %s4395 = scalar_lea.vmem [#allocation3], 1080
    %v4396 = vld [vmem:[%s4395] sm:$0xff]
    %v4397 = vld [vmem:[%s4395 + $0x8] sm:$0xff]
    %v4398 = vld [vmem:[%s4395 + $0x10] sm:$0xff]
    %v4399 = vld [vmem:[%s4395 + $0x18] sm:$0xff]
    %v4400 = vld [vmem:[%s4395 + $0x20] sm:$0xff]
    %v4401 = vld [vmem:[%s4395 + $0x28] sm:$0xff]
    %v4402 = vld [vmem:[%s4395 + $0x30] sm:$0xff]
    %v4403 = vld [vmem:[%s4395 + $0x38] sm:$0xff]
    %v4404 = vld [vmem:[%s4395 + $0x40] sm:$0xff]
    %v4405 = vrot.slane %v3092, 7
    %v4406 = vrot.slane %v3094, 6
    %v4407 = vsel %vm3116, %v4406, %v4405
    %v4408 = vsel %vm3118, %v4407, 0
    %4410 = vmatprep.subr.mxu0 0.0
    %4411 = vmatpush1.msra.mxu0 0.0
    %4412 = vmatprep.subr.mxu0 0.0
    %4413 = vmatpush1.msra.mxu0 0.0
    %4414 = vmatprep.subr.mxu0 0.0
    %4415 = vmatpush1.msra.mxu0 0.0
    %4416 = vmatprep.subr.mxu0 0.0
    %4417 = vmatpush1.msra.mxu0 0.0
    %4418 = vmatprep.subr.mxu0 0.0
    %4419 = vmatpush1.msra.mxu0 0.0
    %4420 = vmatprep.subr.mxu0 0.0
    %4421 = vmatpush1.msra.mxu0 0.0
    %4422 = vmatprep.subr.mxu0 0.0
    %4423 = vmatpush1.msra.mxu0 0.0
    %4424 = vmatprep.subr.mxu0 0.0
    %4425 = vmatpush1.msra.mxu0 %v4404
    %4426 = vmatprep.subr.mxu0 0.0
    %4427 = vmatpush1.msra.mxu0 %v4403
    %4428 = vmatprep.subr.mxu0 0.0
    %4429 = vmatpush1.msra.mxu0 %v4402
    %4430 = vmatprep.subr.mxu0 0.0
    %4431 = vmatpush1.msra.mxu0 %v4401
    %4432 = vmatprep.subr.mxu0 0.0
    %4433 = vmatpush1.msra.mxu0 %v4400
    %4434 = vmatprep.subr.mxu0 0.0
    %4435 = vmatpush1.msra.mxu0 %v4399
    %4436 = vmatprep.subr.mxu0 0.0
    %4437 = vmatpush1.msra.mxu0 %v4398
    %4438 = vmatprep.subr.mxu0 0.0
    %4439 = vmatpush1.msra.mxu0 %v4397
    %4440 = vmatprep.subr.mxu0 0.0
    %4441 = vmatpush1.msra.mxu0 %v4396
    %4442 = vmatprep.subr.mxu0 0.0
    %4443 = vmatpush2.msra.mxu0 0.0
    %4444 = vmatprep.subr.mxu0 0.0
    %4445 = vmatpush2.msra.mxu0 0.0
    %4446 = vmatprep.subr.mxu0 0.0
    %4447 = vmatpush2.msra.mxu0 0.0
    %4448 = vmatprep.subr.mxu0 0.0
    %4449 = vmatpush2.msra.mxu0 0.0
    %4450 = vmatprep.subr.mxu0 0.0
    %4451 = vmatpush2.msra.mxu0 0.0
    %4452 = vmatprep.subr.mxu0 0.0
    %4453 = vmatpush2.msra.mxu0 0.0
    %4454 = vmatprep.subr.mxu0 0.0
    %4455 = vmatpush2.msra.mxu0 0.0
    %4456 = vmatprep.subr.mxu0 0.0
    %4457 = vmatpush2.msra.mxu0 0.0
    %4458 = vmatprep.subr.mxu0 0.0
    %4459 = vmatpush2.msra.mxu0 0.0
    %4460 = vmatprep.subr.mxu0 0.0
    %4461 = vmatpush2.msra.mxu0 0.0
    %4462 = vmatprep.subr.mxu0 0.0
    %4463 = vmatpush2.msra.mxu0 0.0
    %4464 = vmatprep.subr.mxu0 0.0
    %4465 = vmatpush2.msra.mxu0 0.0
    %4466 = vmatprep.subr.mxu0 0.0
    %4467 = vmatpush2.msra.mxu0 0.0
    %4468 = vmatprep.subr.mxu0 0.0
    %4469 = vmatpush2.msra.mxu0 0.0
    %4470 = vmatprep.subr.mxu0 0.0
    %4471 = vmatpush2.msra.mxu0 0.0
    %4472 = vmatprep.subr.mxu0 0.0
    %4473 = vmatpush2.msra.mxu0 0.0
    %4474 = vmatprep.mubr.f32.mxu0 0.0
    %4475 = vmatmul.mubr.f32.gmra.mxu0 %v4408
    %v4476 = vpop.f32.mrf.mxu0
    %v4477 = vadd.f32 0.0, %v4476
    %v4478 = vpop.f32.mrf.mxu0
    %4479 = vdwg.mxu0
    %v4480 = vadd.f32 %v4394, %v4477
    %v4481 = vld [vmem:[%s1 + $0x18] sm:$0xff]
    %v4482 = vld [vmem:[%s1 + $0x20] sm:$0xff]
    %v4483 = vld [vmem:[%s1 + $0x28] sm:$0xff]
    %v4484 = vld [vmem:[%s1 + $0x30] sm:$0xff]
    %v4485 = vld [vmem:[%s1 + $0x38] sm:$0xff]
    %v4486 = vld [vmem:[%s1 + $0x40] sm:$0xff]
    %v4487 = vld [vmem:[%s1 + $0x48] sm:$0xff]
    %v4488 = vld [vmem:[%s1 + $0x50] sm:$0xff]
    %v4489 = vld [vmem:[%s1 + $0x58] sm:$0xff]
    %v4490 = vld [vmem:[%s1 + $0x60] sm:$0xff]
    %v4491 = vld [vmem:[%s1 + $0x68] sm:$0x1]
    %4493 = vrot.lane.b32.xlu0 %v3103, 32
    %v4494 = vpop.permute.xlu0 %4493
    %vm4496 = vcmask 662528
    %v4498 = vsel %vm4496, %v4480, 0
    %vm4500 = vcmask 1040384
    %v4502 = vsel %vm4500, %v4491, 0
    %4504 = vmatprep.subr.mxu0 0.0
    %4505 = vmatpush1.msra.mxu0 0.0
    %4506 = vmatprep.subr.mxu0 0.0
    %4507 = vmatpush1.msra.mxu0 0.0
    %4508 = vmatprep.subr.mxu0 0.0
    %4509 = vmatpush1.msra.mxu0 0.0
    %4510 = vmatprep.subr.mxu0 0.0
    %4511 = vmatpush1.msra.mxu0 0.0
    %4512 = vmatprep.subr.mxu0 0.0
    %4513 = vmatpush1.msra.mxu0 0.0
    %4514 = vmatprep.subr.mxu0 0.0
    %4515 = vmatpush1.msra.mxu0 %v4502
    %4516 = vmatprep.subr.mxu0 0.0
    %4517 = vmatpush1.msra.mxu0 %v4490
    %4518 = vmatprep.subr.mxu0 0.0
    %4519 = vmatpush1.msra.mxu0 %v4489
    %4520 = vmatprep.subr.mxu0 0.0
    %4521 = vmatpush1.msra.mxu0 %v4488
    %4522 = vmatprep.subr.mxu0 0.0
    %4523 = vmatpush1.msra.mxu0 %v4487
    %4524 = vmatprep.subr.mxu0 0.0
    %4525 = vmatpush1.msra.mxu0 %v4486
    %4526 = vmatprep.subr.mxu0 0.0
    %4527 = vmatpush1.msra.mxu0 %v4485
    %4528 = vmatprep.subr.mxu0 0.0
    %4529 = vmatpush1.msra.mxu0 %v4484
    %4530 = vmatprep.subr.mxu0 0.0
    %4531 = vmatpush1.msra.mxu0 %v4483
    %4532 = vmatprep.subr.mxu0 0.0
    %4533 = vmatpush1.msra.mxu0 %v4482
    %4534 = vmatprep.subr.mxu0 0.0
    %4535 = vmatpush1.msra.mxu0 %v4481
    %4536 = vmatprep.subr.mxu0 0.0
    %4537 = vmatpush2.msra.mxu0 0.0
    %4538 = vmatprep.subr.mxu0 0.0
    %4539 = vmatpush2.msra.mxu0 0.0
    %4540 = vmatprep.subr.mxu0 0.0
    %4541 = vmatpush2.msra.mxu0 0.0
    %4542 = vmatprep.subr.mxu0 0.0
    %4543 = vmatpush2.msra.mxu0 0.0
    %4544 = vmatprep.subr.mxu0 0.0
    %4545 = vmatpush2.msra.mxu0 0.0
    %4546 = vmatprep.subr.mxu0 0.0
    %4547 = vmatpush2.msra.mxu0 0.0
    %4548 = vmatprep.subr.mxu0 0.0
    %4549 = vmatpush2.msra.mxu0 0.0
    %4550 = vmatprep.subr.mxu0 0.0
    %4551 = vmatpush2.msra.mxu0 0.0
    %4552 = vmatprep.subr.mxu0 0.0
    %4553 = vmatpush2.msra.mxu0 0.0
    %4554 = vmatprep.subr.mxu0 0.0
    %4555 = vmatpush2.msra.mxu0 0.0
    %4556 = vmatprep.subr.mxu0 0.0
    %4557 = vmatpush2.msra.mxu0 0.0
    %4558 = vmatprep.subr.mxu0 0.0
    %4559 = vmatpush2.msra.mxu0 0.0
    %4560 = vmatprep.subr.mxu0 0.0
    %4561 = vmatpush2.msra.mxu0 0.0
    %4562 = vmatprep.subr.mxu0 0.0
    %4563 = vmatpush2.msra.mxu0 0.0
    %4564 = vmatprep.subr.mxu0 0.0
    %4565 = vmatpush2.msra.mxu0 0.0
    %4566 = vmatprep.subr.mxu0 0.0
    %4567 = vmatpush2.msra.mxu0 0.0
    %4568 = vmatprep.mubr.f32.mxu0 0.0
    %4569 = vmatmul.mubr.f32.gmra.mxu0 %v4498
    %v4570 = vpop.f32.mrf.mxu0
    %v4571 = vadd.f32 %v4494, %v4570
    %v4572 = vpop.f32.mrf.mxu0
    %4573 = vdwg.mxu0
    %vm4574 = vcmask 33792
    %4575 = vst.msk [vmem:[#allocation5] sm:$0x3] %vm4574, %v4571
    // Predicated region
    $region44: #{net_forward.1} parent=1 // pred_check
      _
    $region45: #{net_forward.1} parent=1 // pred_check_branch
      %4577 = sbr.rel (0) target = $region47
    $region46: #{net_forward.1} parent=1 // pred_region
      %s4579 = ssub.s32 32, 32
      %4580 = vsyncadd [#allocation6], %s4579
      %s4582 = sshll.u32 [#allocation5], 4
      %s4583 = int_to_ptr.vmem [resolvable:$true] %s4582
      %4585 = dma.vmem_to_hbm [thread:$0]  %s4583, 32, %s3, [#allocation6]
    $region47: #{net_forward.1} parent=1 // pred_fallthru
      _
    // Predicated region
    $region48: #{net_forward.1} parent=1 // pred_check
      _
    $region49: #{net_forward.1} parent=1 // pred_check_branch
      %4587 = sbr.rel (0) target = $region51
    $region50: #{net_forward.1} parent=1 // pred_region
      %4588 = dma.done [#allocation6], 32
    $region51: #{net_forward.1} parent=1 // pred_fallthru
      _
    %4589 = vsyncpa [#allocation6], 1
  %4590 = vsyncmov [#allocation4]
  %s4591 = vpop.sfrf %4590
  %p4592 = scmp.eq.s32.totalorder %s4591, 0
  %p4593 = pneg %p4592
  %4595 = shalt.err (%p4593)

</llo_original>
